<compile_context>
chip_gen: v5e
topology: v5e:2x2
jax: 0.10.0
libtpu: 0.0.40
codegen_flags: <defaults>
</compile_context>

<pallas_src>
import jax
import jax.numpy as jnp
from jax.experimental import pallas as pl
from jax.experimental.pallas import tpu as pltpu


VMEM_LIMIT_BYTES = 48 * 1024 * 1024   # < v7x 64 MiB physical; > v5e/v6e scoped default


# ----------------------------- Pallas kernel --------------------------------

def _clr_heads_kernel(feat_ref, tok_ref, len_ref,
                      rw1_ref, rb1_ref, rw2_ref, rb2_ref,
                      bw1_ref, bb1_ref, bw2_ref, bb2_ref,
                      zis_ref, zls_ref):
    """Fused image + text projection heads for one batch tile.

    feat_ref : (TB, HW, C)  ResNet layer4 features, NHWC-flat (C lane-dense)
    tok_ref  : (TB, S, D)   BERT last_hidden_state
    len_ref  : (TB, 1)      per-example token counts (int32)
    rw*/bw*  : bf16 weights (in x out), l2 weights zero-padded to PAD lanes
    rb*/bb*  : f32 biases (1 x out)
    zis_ref  : (TB, PAD)    image projection (lane-dense; sliced in wrapper)
    zls_ref  : (TB, PAD)    text projection  (lane-dense; sliced in wrapper)
    """
    f32 = jnp.float32

    # ---- image branch: AdaptiveAvgPool2d((1,1)) + squeeze -> l1 -> ReLU -> l2
    feat = feat_ref[...]                                    # (TB, HW, C) f32
    hw = feat.shape[1]
    h = jnp.sum(feat, axis=1) * (1.0 / hw)                  # (TB, C) sublane reduce
    x = jnp.dot(h, rw1_ref[...].astype(f32),
                preferred_element_type=f32) + rb1_ref[...]
    x = jnp.maximum(x, 0.0)                                 # ReLU
    zis_ref[...] = jnp.dot(x, rw2_ref[...].astype(f32),
                           preferred_element_type=f32) + rb2_ref[...]

    # ---- text branch: masked mean pooling -> l1 -> ReLU -> l2
    tb, seq, dmodel = tok_ref.shape
    lens = len_ref[...]                                     # (TB, 1) int32
    lens3 = lens[:, :, None]                                # (TB, 1, 1)

    # Chunk the S reduction for long sequences so tok*mask never doubles the
    # live set; the demo (S=8) takes the single-shot path.
    s_chunk = seq
    for cand in (512, 256, 128):
        if seq > cand and seq % cand == 0:
            s_chunk = cand
            break
    n_chunks = seq // s_chunk

    def masked_chunk_sum(start, size):
        chunk = tok_ref[:, pl.ds(start, size), :]           # (TB, size, D) f32
        pos = jax.lax.broadcasted_iota(jnp.int32, (tb, size, 1), 1) + start
        m = (pos < lens3).astype(f32)                       # (TB, size, 1) prefix mask
        return jnp.sum(chunk * m, axis=1)                   # (TB, D)

    if n_chunks == 1:
        sum_emb = masked_chunk_sum(0, seq)
    else:
        sum_emb = jax.lax.fori_loop(
            0, n_chunks,
            lambda c, acc: acc + masked_chunk_sum(
                pl.multiple_of(c * s_chunk, s_chunk), s_chunk),
            jnp.zeros((tb, dmodel), f32))

    sum_mask = jnp.maximum(lens.astype(f32), 1e-9)          # clamp(min=1e-9)
    pooled = sum_emb * pl.reciprocal(sum_mask, approx=False)

    y = jnp.dot(pooled, bw1_ref[...].astype(f32),
                preferred_element_type=f32) + bb1_ref[...]
    y = jnp.maximum(y, 0.0)                                  # ReLU
    zls_ref[...] = jnp.dot(y, bw2_ref[...].astype(f32),
                           preferred_element_type=f32) + bb2_ref[...]


# ------------------------------ Host wrapper ---------------------------------

def _round_up(x, m):
    return ((x + m - 1) // m) * m


def _pick_batch_tile(batch, seq, dmodel, chans, hw, out_pad, vmem_budget):
    """Largest 8-multiple batch tile whose double-buffered tiles fit VMEM."""
    # Bytes pipelined per batch row (f32 tokens dominate at realistic S).
    row_bytes = 4 * (seq * dmodel + hw * chans + 2 * out_pad + 128)
    # bf16 weights + f32 biases stay VMEM-resident across all tiles.
    weight_bytes = (2 * (chans * chans + chans * out_pad
                         + dmodel * dmodel + dmodel * out_pad)
                    + 4 * (chans + dmodel + 2 * out_pad))
    avail = max(vmem_budget - weight_bytes - (4 << 20), 2 * row_bytes * 8)
    tb = max(8, min(256, (avail // (2 * row_bytes)) // 8 * 8))
    if tb >= 128:
        tb = (tb // 128) * 128        # MXU-friendly M tile (128 on v5e, 256 on v6e/v7x)
    return min(tb, _round_up(batch, 8))   # never tile beyond the (padded) batch


def model_clr_forward(xis_feat, token_emb, attention_mask, params):
    """Mirrors ModelCLR.forward: returns (zis, zls)."""
    B, C, H, W = xis_feat.shape
    _, S, D = token_emb.shape
    HW = H * W
    out_dim = params["res_w2"].shape[1]
    pad = _round_up(max(out_dim, 128), 128)          # lane-dense output width

    TB = _pick_batch_tile(B, S, D, C, HW, pad, VMEM_LIMIT_BYTES)
    B_pad = _round_up(B, TB)                         # multiple of TB (and of 8)
    grid = (B_pad // TB,)

    # NHWC-flat layout: C (512/2048) lane-dense, spatial HW on the sublane axis.
    feat = jnp.transpose(xis_feat.astype(jnp.float32).reshape(B, C, HW), (0, 2, 1))
    feat = jnp.pad(feat, ((0, B_pad - B), (0, 0), (0, 0)))
    tok = jnp.pad(token_emb.astype(jnp.float32), ((0, B_pad - B), (0, 0), (0, 0)))
    # Per-example token counts replace the (B, S, 1) broadcast mask.
    lens = attention_mask.astype(jnp.int32).sum(axis=1, keepdims=True)   # (B, 1)
    lens = jnp.pad(lens, ((0, B_pad - B), (0, 0)))

    bf16, f32 = jnp.bfloat16, jnp.float32
    rw1 = params["res_w1"].astype(bf16)
    rb1 = params["res_b1"].reshape(1, C).astype(f32)
    rw2 = jnp.pad(params["res_w2"], ((0, 0), (0, pad - out_dim))).astype(bf16)
    rb2 = jnp.pad(params["res_b2"], (0, pad - out_dim)).reshape(1, pad).astype(f32)
    bw1 = params["bert_w1"].astype(bf16)
    bb1 = params["bert_b1"].reshape(1, D).astype(f32)
    bw2 = jnp.pad(params["bert_w2"], ((0, 0), (0, pad - out_dim))).astype(bf16)
    bb2 = jnp.pad(params["bert_b2"], (0, pad - out_dim)).reshape(1, pad).astype(f32)

    def batch_spec(shape):
        n = len(shape)
        return pl.BlockSpec((TB,) + tuple(shape[1:]),
                            lambda i, _n=n: (i,) + (0,) * (_n - 1))

    def const_spec(shape):
        n = len(shape)
        return pl.BlockSpec(tuple(shape), lambda i, _n=n: (0,) * _n)

    zis_pad, zls_pad = pl.pallas_call(
        _clr_heads_kernel,
        out_shape=(
            jax.ShapeDtypeStruct((B_pad, pad), jnp.float32),
            jax.ShapeDtypeStruct((B_pad, pad), jnp.float32),
        ),
        grid=grid,
        in_specs=[
            batch_spec((B_pad, HW, C)),   # feat
            batch_spec((B_pad, S, D)),    # token embeddings
            batch_spec((B_pad, 1)),       # lengths
            const_spec((C, C)),           # res_l1 W
            const_spec((1, C)),           # res_l1 b
            const_spec((C, pad)),         # res_l2 W (padded)
            const_spec((1, pad)),         # res_l2 b (padded)
            const_spec((D, D)),           # bert_l1 W
            const_spec((1, D)),           # bert_l1 b
            const_spec((D, pad)),         # bert_l2 W (padded)
            const_spec((1, pad)),         # bert_l2 b (padded)
        ],
        out_specs=(
            batch_spec((B_pad, pad)),
            batch_spec((B_pad, pad)),
        ),
        compiler_params=pltpu.CompilerParams(
            dimension_semantics=("parallel",),          # shard tiles across TCs (v7x)
            vmem_limit_bytes=VMEM_LIMIT_BYTES),
    )(feat, tok, lens, rw1, rb1, rw2, rb2, bw1, bb1, bw2, bb2)

    return zis_pad[:B, :out_dim], zls_pad[:B, :out_dim]


# --------------------------- Deterministic params ----------------------------

def _linear_init(key, fan_in, fan_out):
    """nn.Linear default init: U(-1/sqrt(fan_in), 1/sqrt(fan_in)).

    Weight is created (out, in) like PyTorch, then transposed to (in, out)
    so the kernel computes x @ W^T + b exactly as nn.Linear does.
    """
    kw, kb = jax.random.split(key)
    bound = 1.0 / jnp.sqrt(fan_in)
    w = jax.random.uniform(kw, (fan_out, fan_in), jnp.float32, -bound, bound)
    b = jax.random.uniform(kb, (fan_out,), jnp.float32, -bound, bound)
    return jnp.transpose(w), b


def make_params(key, num_ftrs, bert_dim, out_dim):
    k1, k2, k3, k4 = jax.random.split(key, 4)
    res_w1, res_b1 = _linear_init(k1, num_ftrs, num_ftrs)
    res_w2, res_b2 = _linear_init(k2, num_ftrs, out_dim)
    bert_w1, bert_b1 = _linear_init(k3, bert_dim, bert_dim)
    bert_w2, bert_b2 = _linear_init(k4, bert_dim, out_dim)
    return dict(res_w1=res_w1, res_b1=res_b1, res_w2=res_w2, res_b2=res_b2,
                bert_w1=bert_w1, bert_b1=bert_b1, bert_w2=bert_w2,
                bert_b2=bert_b2)


# ---------------------------------- main --------------------------------------

if __name__ == "__main__":
    B = 2
    NUM_FTRS = 512          # resnet18 fc.in_features
    H = W = 4               # small spatial extent of the layer4 feature map
    BERT_DIM = 768          # fixed by the module (nn.Linear(768, 768))
    SEQ = 8
    OUT_DIM = 64

    key = jax.random.PRNGKey(0)
    k_feat, k_tok, k_params = jax.random.split(key, 3)

    # Image branch input: ResNet layer4 feature map, NCHW like PyTorch.
    xis_feat = jax.random.normal(k_feat, (B, NUM_FTRS, H, W), jnp.float32)
    # Text branch input: BERT last_hidden_state + padding-style attention mask.
    token_emb = jax.random.normal(k_tok, (B, SEQ, BERT_DIM), jnp.float32)
    lengths = jnp.array([SEQ, SEQ // 2], dtype=jnp.int32)
    attention_mask = (jnp.arange(SEQ)[None, :] < lengths[:, None]).astype(jnp.int32)

    params = make_params(k_params, NUM_FTRS, BERT_DIM, OUT_DIM)

    zis, zls = jax.jit(model_clr_forward)(xis_feat, token_emb, attention_mask,
                                          params)
    jax.block_until_ready((zis, zls))

    # Pure-JAX f32 reference (kernel stores weights as bf16 -> 1e-2 tolerance).
    h_ref = jnp.mean(xis_feat, axis=(2, 3))
    zis_ref = jnp.maximum(h_ref @ params["res_w1"] + params["res_b1"], 0.0) \
        @ params["res_w2"] + params["res_b2"]
    m = attention_mask.astype(jnp.float32)[:, :, None]
    pooled = jnp.sum(token_emb * m, 1) / jnp.maximum(jnp.sum(m, 1), 1e-9)
    zls_ref = jnp.maximum(pooled @ params["bert_w1"] + params["bert_b1"], 0.0) \
        @ params["bert_w2"] + params["bert_b2"]

    assert zis.shape == (B, OUT_DIM) and zls.shape == (B, OUT_DIM)
    assert jnp.allclose(zis, zis_ref, atol=1e-2, rtol=1e-2)
    assert jnp.allclose(zls, zls_ref, atol=1e-2, rtol=1e-2)
    print("KERNEL_OK")
</pallas_src>

<mosaic_0001>
module attributes {stable_mosaic.version = 11 : i64} {
  func.func @_clr_heads_kernel(%arg0: i32, %arg1: memref<8x16x512xf32, #tpu.memory_space<vmem>>, %arg2: memref<8x8x768xf32, #tpu.memory_space<vmem>>, %arg3: memref<8x1xi32, #tpu.memory_space<vmem>>, %arg4: memref<512x512xbf16, #tpu.memory_space<vmem>>, %arg5: memref<1x512xf32, #tpu.memory_space<vmem>>, %arg6: memref<512x128xbf16, #tpu.memory_space<vmem>>, %arg7: memref<1x128xf32, #tpu.memory_space<vmem>>, %arg8: memref<768x768xbf16, #tpu.memory_space<vmem>>, %arg9: memref<1x768xf32, #tpu.memory_space<vmem>>, %arg10: memref<768x128xbf16, #tpu.memory_space<vmem>>, %arg11: memref<1x128xf32, #tpu.memory_space<vmem>>, %arg12: memref<8x128xf32, #tpu.memory_space<vmem>>, %arg13: memref<8x128xf32, #tpu.memory_space<vmem>>) attributes {dimension_semantics = [#tpu.dimension_semantics<parallel>], iteration_bounds = array<i64: 1>, scalar_prefetch = 0 : i64, scratch_operands = 0 : i64, tpu.core_type = #tpu.core_type<tc>, window_params = [{transform_indices = @transform_0, window_bounds = array<i64: 8, 16, 512>}, {transform_indices = @transform_1, window_bounds = array<i64: 8, 8, 768>}, {transform_indices = @transform_2, window_bounds = array<i64: 8, 1>}, {pipeline_mode = #tpu.pipeline_mode<synchronous>, transform_indices = @transform_3, window_bounds = array<i64: 512, 512>}, {pipeline_mode = #tpu.pipeline_mode<synchronous>, transform_indices = @transform_4, window_bounds = array<i64: 1, 512>}, {pipeline_mode = #tpu.pipeline_mode<synchronous>, transform_indices = @transform_5, window_bounds = array<i64: 512, 128>}, {pipeline_mode = #tpu.pipeline_mode<synchronous>, transform_indices = @transform_6, window_bounds = array<i64: 1, 128>}, {pipeline_mode = #tpu.pipeline_mode<synchronous>, transform_indices = @transform_7, window_bounds = array<i64: 768, 768>}, {pipeline_mode = #tpu.pipeline_mode<synchronous>, transform_indices = @transform_8, window_bounds = array<i64: 1, 768>}, {pipeline_mode = #tpu.pipeline_mode<synchronous>, transform_indices = @transform_9, window_bounds = array<i64: 768, 128>}, {pipeline_mode = #tpu.pipeline_mode<synchronous>, transform_indices = @transform_10, window_bounds = array<i64: 1, 128>}, {transform_indices = @transform_11, window_bounds = array<i64: 8, 128>}, {transform_indices = @transform_12, window_bounds = array<i64: 8, 128>}]} {
    %c0 = arith.constant 0 : index
    %c0_0 = arith.constant 0 : index
    %c0_1 = arith.constant 0 : index
    %0 = vector.load %arg1[%c0, %c0_0, %c0_1] : memref<8x16x512xf32, #tpu.memory_space<vmem>>, vector<8x16x512xf32>
    %cst = arith.constant dense<0.000000e+00> : vector<8x512xf32>
    %1 = vector.multi_reduction <add>, %0, %cst [1] : vector<8x16x512xf32> to vector<8x512xf32>
    %cst_2 = arith.constant 6.250000e-02 : f32
    %2 = vector.broadcast %cst_2 : f32 to vector<8x512xf32>
    %3 = arith.mulf %1, %2 : vector<8x512xf32>
    %c0_3 = arith.constant 0 : index
    %c0_4 = arith.constant 0 : index
    %4 = vector.load %arg4[%c0_3, %c0_4] : memref<512x512xbf16, #tpu.memory_space<vmem>>, vector<512x512xbf16>
    %5 = arith.extf %4 : vector<512x512xbf16> to vector<512x512xf32>
    %cst_5 = arith.constant dense<0.000000e+00> : vector<8x512xf32>
    %6 = tpu.matmul %3, %5, %cst_5 {dimension_numbers = #tpu.dot_dimension_numbers<[1], [0], [0], [1], [0, 0, 1, 1], [], []>} : vector<8x512xf32>, vector<512x512xf32>, vector<8x512xf32> -> vector<8x512xf32>
    %c0_6 = arith.constant 0 : index
    %c0_7 = arith.constant 0 : index
    %7 = vector.load %arg5[%c0_6, %c0_7] : memref<1x512xf32, #tpu.memory_space<vmem>>, vector<1x512xf32>
    %8 = vector.broadcast %7 : vector<1x512xf32> to vector<8x512xf32>
    %9 = arith.addf %6, %8 : vector<8x512xf32>
    %cst_8 = arith.constant 0.000000e+00 : f32
    %10 = vector.broadcast %cst_8 : f32 to vector<8x512xf32>
    %11 = arith.maximumf %9, %10 : vector<8x512xf32>
    %c0_9 = arith.constant 0 : index
    %c0_10 = arith.constant 0 : index
    %12 = vector.load %arg6[%c0_9, %c0_10] : memref<512x128xbf16, #tpu.memory_space<vmem>>, vector<512x128xbf16>
    %13 = arith.extf %12 : vector<512x128xbf16> to vector<512x128xf32>
    %cst_11 = arith.constant dense<0.000000e+00> : vector<8x128xf32>
    %14 = tpu.matmul %11, %13, %cst_11 {dimension_numbers = #tpu.dot_dimension_numbers<[1], [0], [0], [1], [0, 0, 1, 1], [], []>} : vector<8x512xf32>, vector<512x128xf32>, vector<8x128xf32> -> vector<8x128xf32>
    %c0_12 = arith.constant 0 : index
    %c0_13 = arith.constant 0 : index
    %15 = vector.load %arg7[%c0_12, %c0_13] : memref<1x128xf32, #tpu.memory_space<vmem>>, vector<1x128xf32>
    %16 = vector.broadcast %15 : vector<1x128xf32> to vector<8x128xf32>
    %17 = arith.addf %14, %16 : vector<8x128xf32>
    %c0_14 = arith.constant 0 : index
    %c0_15 = arith.constant 0 : index
    %18 = vector.load %arg12[%c0_14, %c0_15] : memref<8x128xf32, #tpu.memory_space<vmem>>, vector<8x128xf32>
    tpu.vector_store %arg12[%c0_14, %c0_15], %17 {strides = array<i32>} : memref<8x128xf32, #tpu.memory_space<vmem>>, vector<8x128xf32>,
    %c0_16 = arith.constant 0 : index
    %c0_17 = arith.constant 0 : index
    %19 = vector.load %arg3[%c0_16, %c0_17] : memref<8x1xi32, #tpu.memory_space<vmem>>, vector<8x1xi32>
    %20 = vector.shape_cast %19 : vector<8x1xi32> to vector<8x1x1xi32>
    %c0_18 = arith.constant 0 : index
    %c0_19 = arith.constant 0 : index
    %c0_20 = arith.constant 0 : index
    %21 = vector.load %arg2[%c0_18, %c0_19, %c0_20] : memref<8x8x768xf32, #tpu.memory_space<vmem>>, vector<8x8x768xf32>
    %22 = tpu.iota {dimensions = array<i32: 1>} : vector<8x8x1xi32>
    %c0_i32 = arith.constant 0 : i32
    %23 = vector.broadcast %c0_i32 : i32 to vector<8x8x1xi32>
    %24 = arith.addi %22, %23 : vector<8x8x1xi32>
    %25 = vector.broadcast %20 : vector<8x1x1xi32> to vector<8x8x1xi32>
    %26 = arith.cmpi slt, %24, %25 : vector<8x8x1xi32>
    %27 = arith.extui %26 : vector<8x8x1xi1> to vector<8x8x1xi32>
    %28 = arith.sitofp %27 : vector<8x8x1xi32> to vector<8x8x1xf32>
    %29 = vector.broadcast %28 : vector<8x8x1xf32> to vector<8x8x768xf32>
    %30 = arith.mulf %21, %29 : vector<8x8x768xf32>
    %cst_21 = arith.constant dense<0.000000e+00> : vector<8x768xf32>
    %31 = vector.multi_reduction <add>, %30, %cst_21 [1] : vector<8x8x768xf32> to vector<8x768xf32>
    %32 = arith.sitofp %19 : vector<8x1xi32> to vector<8x1xf32>
    %cst_22 = arith.constant 9.99999971E-10 : f32
    %33 = vector.broadcast %cst_22 : f32 to vector<8x1xf32>
    %34 = arith.maximumf %32, %33 : vector<8x1xf32>
    %35 = tpu.reciprocal %34 : vector<8x1xf32> -> vector<8x1xf32>
    %36 = vector.broadcast %35 : vector<8x1xf32> to vector<8x768xf32>
    %37 = arith.mulf %31, %36 : vector<8x768xf32>
    %c0_23 = arith.constant 0 : index
    %c0_24 = arith.constant 0 : index
    %38 = vector.load %arg8[%c0_23, %c0_24] : memref<768x768xbf16, #tpu.memory_space<vmem>>, vector<768x768xbf16>
    %39 = arith.extf %38 : vector<768x768xbf16> to vector<768x768xf32>
    %cst_25 = arith.constant dense<0.000000e+00> : vector<8x768xf32>
    %40 = tpu.matmul %37, %39, %cst_25 {dimension_numbers = #tpu.dot_dimension_numbers<[1], [0], [0], [1], [0, 0, 1, 1], [], []>} : vector<8x768xf32>, vector<768x768xf32>, vector<8x768xf32> -> vector<8x768xf32>
    %c0_26 = arith.constant 0 : index
    %c0_27 = arith.constant 0 : index
    %41 = vector.load %arg9[%c0_26, %c0_27] : memref<1x768xf32, #tpu.memory_space<vmem>>, vector<1x768xf32>
    %42 = vector.broadcast %41 : vector<1x768xf32> to vector<8x768xf32>
    %43 = arith.addf %40, %42 : vector<8x768xf32>
    %cst_28 = arith.constant 0.000000e+00 : f32
    %44 = vector.broadcast %cst_28 : f32 to vector<8x768xf32>
    %45 = arith.maximumf %43, %44 : vector<8x768xf32>
    %c0_29 = arith.constant 0 : index
    %c0_30 = arith.constant 0 : index
    %46 = vector.load %arg10[%c0_29, %c0_30] : memref<768x128xbf16, #tpu.memory_space<vmem>>, vector<768x128xbf16>
    %47 = arith.extf %46 : vector<768x128xbf16> to vector<768x128xf32>
    %cst_31 = arith.constant dense<0.000000e+00> : vector<8x128xf32>
    %48 = tpu.matmul %45, %47, %cst_31 {dimension_numbers = #tpu.dot_dimension_numbers<[1], [0], [0], [1], [0, 0, 1, 1], [], []>} : vector<8x768xf32>, vector<768x128xf32>, vector<8x128xf32> -> vector<8x128xf32>
    %c0_32 = arith.constant 0 : index
    %c0_33 = arith.constant 0 : index
    %49 = vector.load %arg11[%c0_32, %c0_33] : memref<1x128xf32, #tpu.memory_space<vmem>>, vector<1x128xf32>
    %50 = vector.broadcast %49 : vector<1x128xf32> to vector<8x128xf32>
    %51 = arith.addf %48, %50 : vector<8x128xf32>
    %c0_34 = arith.constant 0 : index
    %c0_35 = arith.constant 0 : index
    %52 = vector.load %arg13[%c0_34, %c0_35] : memref<8x128xf32, #tpu.memory_space<vmem>>, vector<8x128xf32>
    tpu.vector_store %arg13[%c0_34, %c0_35], %51 {strides = array<i32>} : memref<8x128xf32, #tpu.memory_space<vmem>>, vector<8x128xf32>,
    return
  }
  func.func @transform_0(%arg0: i32) -> (i32, i32, i32) {
    %c0_i32 = arith.constant 0 : i32
    %c0_i32_0 = arith.constant 0 : i32
    %c0_i32_1 = arith.constant 0 : i32
    return %arg0, %c0_i32, %c0_i32_0 : i32, i32, i32
  }
  func.func @transform_1(%arg0: i32) -> (i32, i32, i32) {
    %c0_i32 = arith.constant 0 : i32
    %c0_i32_0 = arith.constant 0 : i32
    %c0_i32_1 = arith.constant 0 : i32
    return %arg0, %c0_i32, %c0_i32_0 : i32, i32, i32
  }
  func.func @transform_2(%arg0: i32) -> (i32, i32) {
    %c0_i32 = arith.constant 0 : i32
    %c0_i32_0 = arith.constant 0 : i32
    return %arg0, %c0_i32 : i32, i32
  }
  func.func @transform_3(%arg0: i32) -> (i32, i32) {
    %c0_i32 = arith.constant 0 : i32
    %c0_i32_0 = arith.constant 0 : i32
    %c0_i32_1 = arith.constant 0 : i32
    return %c0_i32, %c0_i32_0 : i32, i32
  }
  func.func @transform_4(%arg0: i32) -> (i32, i32) {
    %c0_i32 = arith.constant 0 : i32
    %c0_i32_0 = arith.constant 0 : i32
    %c0_i32_1 = arith.constant 0 : i32
    return %c0_i32, %c0_i32_0 : i32, i32
  }
  func.func @transform_5(%arg0: i32) -> (i32, i32) {
    %c0_i32 = arith.constant 0 : i32
    %c0_i32_0 = arith.constant 0 : i32
    %c0_i32_1 = arith.constant 0 : i32
    return %c0_i32, %c0_i32_0 : i32, i32
  }
  func.func @transform_6(%arg0: i32) -> (i32, i32) {
    %c0_i32 = arith.constant 0 : i32
    %c0_i32_0 = arith.constant 0 : i32
    %c0_i32_1 = arith.constant 0 : i32
    return %c0_i32, %c0_i32_0 : i32, i32
  }
  func.func @transform_7(%arg0: i32) -> (i32, i32) {
    %c0_i32 = arith.constant 0 : i32
    %c0_i32_0 = arith.constant 0 : i32
    %c0_i32_1 = arith.constant 0 : i32
    return %c0_i32, %c0_i32_0 : i32, i32
  }
  func.func @transform_8(%arg0: i32) -> (i32, i32) {
    %c0_i32 = arith.constant 0 : i32
    %c0_i32_0 = arith.constant 0 : i32
    %c0_i32_1 = arith.constant 0 : i32
    return %c0_i32, %c0_i32_0 : i32, i32
  }
  func.func @transform_9(%arg0: i32) -> (i32, i32) {
    %c0_i32 = arith.constant 0 : i32
    %c0_i32_0 = arith.constant 0 : i32
    %c0_i32_1 = arith.constant 0 : i32
    return %c0_i32, %c0_i32_0 : i32, i32
  }
  func.func @transform_10(%arg0: i32) -> (i32, i32) {
    %c0_i32 = arith.constant 0 : i32
    %c0_i32_0 = arith.constant 0 : i32
    %c0_i32_1 = arith.constant 0 : i32
    return %c0_i32, %c0_i32_0 : i32, i32
  }
  func.func @transform_11(%arg0: i32) -> (i32, i32) {
    %c0_i32 = arith.constant 0 : i32
    %c0_i32_0 = arith.constant 0 : i32
    return %arg0, %c0_i32 : i32, i32
  }
  func.func @transform_12(%arg0: i32) -> (i32, i32) {
    %c0_i32 = arith.constant 0 : i32
    %c0_i32_0 = arith.constant 0 : i32
    return %arg0, %c0_i32 : i32, i32
  }
}

</mosaic_0001>

<llo_original>
// kernel: model_clr_forward.1
$region0: #{model_clr_forward.1}
  #allocation0 [shape = 'u32[]', space=smem, size = 0x4, offset = 0x4, fixed_abs, tag = 'smem constant byte address 0x4 - core index']
  #allocation1 [shape = 'u32[72,128]{1,0:T(1,128)}', space=vmem, size = 0x9000, scoped, tag = 'internal scratch']
  %s0 = inlined_call_operand.vmem [shape: f32[8,16,512], index: 0, kind: input, shape index: {}]
  %s1 = inlined_call_operand.vmem [shape: f32[8,8,768], index: 1, kind: input, shape index: {}]
  %s2 = inlined_call_operand.vmem [shape: s32[8,1], index: 2, kind: input, shape index: {}]
  %s3 = inlined_call_operand.vmem [shape: bf16[512,512], index: 3, kind: input, shape index: {}]
  %s4 = inlined_call_operand.vmem [shape: f32[1,512], index: 4, kind: input, shape index: {}]
  %s5 = inlined_call_operand.vmem [shape: bf16[512,128], index: 5, kind: input, shape index: {}]
  %s6 = inlined_call_operand.vmem [shape: f32[1,128], index: 6, kind: input, shape index: {}]
  %s7 = inlined_call_operand.vmem [shape: bf16[768,768], index: 7, kind: input, shape index: {}]
  %s8 = inlined_call_operand.vmem [shape: f32[1,768], index: 8, kind: input, shape index: {}]
  %s9 = inlined_call_operand.vmem [shape: bf16[768,128], index: 9, kind: input, shape index: {}]
  %s10 = inlined_call_operand.vmem [shape: f32[1,128], index: 10, kind: input, shape index: {}]
  %s11 = inlined_call_operand.vmem [shape: f32[8,128], index: 11, kind: output, shape index: {0}]
  %s12 = inlined_call_operand.vmem [shape: f32[8,128], index: 12, kind: output, shape index: {1}]
  %13 = xla_tuple %s11, %s12
  %s14 = sld [smem:[#allocation0]]
  $region62: #{model_clr_forward.1} parent=0
    _
  %s16 = ssub.s32 1, %s14
  %s17 = scalar_select 0, %s16, %s14
  // Predicated region
  $region2: #{model_clr_forward.1} parent=0 // pred_check
    _
  $region3: #{model_clr_forward.1} parent=0 // pred_check_branch
    %19 = sbr.rel (0) target = $region5
  $region4: #{model_clr_forward.1} parent=0 // pred_region
    _
  $region5: #{model_clr_forward.1} parent=0 // pred_fallthru
    _
  // Predicated region
  $region6: #{model_clr_forward.1} parent=0 // pred_check
    _
  $region7: #{model_clr_forward.1} parent=0 // pred_check_branch
    %21 = sbr.rel (0) target = $region9
  $region8: #{model_clr_forward.1} parent=0 // pred_region
    _
  $region9: #{model_clr_forward.1} parent=0 // pred_fallthru
    _
  // Predicated region
  $region10: #{model_clr_forward.1} parent=0 // pred_check
    _
  $region11: #{model_clr_forward.1} parent=0 // pred_check_branch
    %23 = sbr.rel (0) target = $region13
  $region12: #{model_clr_forward.1} parent=0 // pred_region
    _
  $region13: #{model_clr_forward.1} parent=0 // pred_fallthru
    _
  // Predicated region
  $region14: #{model_clr_forward.1} parent=0 // pred_check
    _
  $region15: #{model_clr_forward.1} parent=0 // pred_check_branch
    %25 = sbr.rel (0) target = $region17
  $region16: #{model_clr_forward.1} parent=0 // pred_region
    _
  $region17: #{model_clr_forward.1} parent=0 // pred_fallthru
    _
  // Predicated region
  $region18: #{model_clr_forward.1} parent=0 // pred_check
    _
  $region19: #{model_clr_forward.1} parent=0 // pred_check_branch
    %27 = sbr.rel (0) target = $region21
  $region20: #{model_clr_forward.1} parent=0 // pred_region
    _
  $region21: #{model_clr_forward.1} parent=0 // pred_fallthru
    _
  // Predicated region
  $region22: #{model_clr_forward.1} parent=0 // pred_check
    _
  $region23: #{model_clr_forward.1} parent=0 // pred_check_branch
    %29 = sbr.rel (0) target = $region25
  $region24: #{model_clr_forward.1} parent=0 // pred_region
    _
  $region25: #{model_clr_forward.1} parent=0 // pred_fallthru
    _
  // Predicated region
  $region26: #{model_clr_forward.1} parent=0 // pred_check
    _
  $region27: #{model_clr_forward.1} parent=0 // pred_check_branch
    %31 = sbr.rel (0) target = $region29
  $region28: #{model_clr_forward.1} parent=0 // pred_region
    _
  $region29: #{model_clr_forward.1} parent=0 // pred_fallthru
    _
  // Predicated region
  $region30: #{model_clr_forward.1} parent=0 // pred_check
    _
  $region31: #{model_clr_forward.1} parent=0 // pred_check_branch
    %33 = sbr.rel (0) target = $region33
  $region32: #{model_clr_forward.1} parent=0 // pred_region
    _
  $region33: #{model_clr_forward.1} parent=0 // pred_fallthru
    _
  // Predicated region
  $region34: #{model_clr_forward.1} parent=0 // pred_check
    _
  $region35: #{model_clr_forward.1} parent=0 // pred_check_branch
    %35 = sbr.rel (0) target = $region37
  $region36: #{model_clr_forward.1} parent=0 // pred_region
    _
  $region37: #{model_clr_forward.1} parent=0 // pred_fallthru
    _
  // Predicated region
  $region38: #{model_clr_forward.1} parent=0 // pred_check
    _
  $region39: #{model_clr_forward.1} parent=0 // pred_check_branch
    %37 = sbr.rel (0) target = $region41
  $region40: #{model_clr_forward.1} parent=0 // pred_region
    _
  $region41: #{model_clr_forward.1} parent=0 // pred_fallthru
    _
  // Predicated region
  $region42: #{model_clr_forward.1} parent=0 // pred_check
    _
  $region43: #{model_clr_forward.1} parent=0 // pred_check_branch
    %39 = sbr.rel (0) target = $region45
  $region44: #{model_clr_forward.1} parent=0 // pred_region
    _
  $region45: #{model_clr_forward.1} parent=0 // pred_fallthru
    _
  %v40 = vld [vmem:[%s0] sm:$0xff]
  %v41 = vld [vmem:[%s0 + $0x8] sm:$0xff]
  %v42 = vld [vmem:[%s0 + $0x10] sm:$0xff]
  %v43 = vld [vmem:[%s0 + $0x18] sm:$0xff]
  %v44 = vld [vmem:[%s0 + $0x20] sm:$0xff]
  %v45 = vld [vmem:[%s0 + $0x28] sm:$0xff]
  %v46 = vld [vmem:[%s0 + $0x30] sm:$0xff]
  %v47 = vld [vmem:[%s0 + $0x38] sm:$0xff]
  %v48 = vld [vmem:[%s0 + $0x40] sm:$0xff]
  %v49 = vld [vmem:[%s0 + $0x48] sm:$0xff]
  %v50 = vld [vmem:[%s0 + $0x50] sm:$0xff]
  %v51 = vld [vmem:[%s0 + $0x58] sm:$0xff]
  %v52 = vld [vmem:[%s0 + $0x60] sm:$0xff]
  %v53 = vld [vmem:[%s0 + $0x68] sm:$0xff]
  %v54 = vld [vmem:[%s0 + $0x70] sm:$0xff]
  %v55 = vld [vmem:[%s0 + $0x78] sm:$0xff]
  %v56 = vld [vmem:[%s0 + $0x80] sm:$0xff]
  %v57 = vld [vmem:[%s0 + $0x88] sm:$0xff]
  %v58 = vld [vmem:[%s0 + $0x90] sm:$0xff]
  %v59 = vld [vmem:[%s0 + $0x98] sm:$0xff]
  %v60 = vld [vmem:[%s0 + $0xa0] sm:$0xff]
  %v61 = vld [vmem:[%s0 + $0xa8] sm:$0xff]
  %v62 = vld [vmem:[%s0 + $0xb0] sm:$0xff]
  %v63 = vld [vmem:[%s0 + $0xb8] sm:$0xff]
  %v64 = vld [vmem:[%s0 + $0xc0] sm:$0xff]
  %v65 = vld [vmem:[%s0 + $0xc8] sm:$0xff]
  %v66 = vld [vmem:[%s0 + $0xd0] sm:$0xff]
  %v67 = vld [vmem:[%s0 + $0xd8] sm:$0xff]
  %v68 = vld [vmem:[%s0 + $0xe0] sm:$0xff]
  %v69 = vld [vmem:[%s0 + $0xe8] sm:$0xff]
  %v70 = vld [vmem:[%s0 + $0xf0] sm:$0xff]
  %v71 = vld [vmem:[%s0 + $0xf8] sm:$0xff]
  %v72 = vld [vmem:[%s0 + $0x100] sm:$0xff]
  %v73 = vld [vmem:[%s0 + $0x108] sm:$0xff]
  %v74 = vld [vmem:[%s0 + $0x110] sm:$0xff]
  %v75 = vld [vmem:[%s0 + $0x118] sm:$0xff]
  %v76 = vld [vmem:[%s0 + $0x120] sm:$0xff]
  %v77 = vld [vmem:[%s0 + $0x128] sm:$0xff]
  %v78 = vld [vmem:[%s0 + $0x130] sm:$0xff]
  %v79 = vld [vmem:[%s0 + $0x138] sm:$0xff]
  %v80 = vld [vmem:[%s0 + $0x140] sm:$0xff]
  %v81 = vld [vmem:[%s0 + $0x148] sm:$0xff]
  %v82 = vld [vmem:[%s0 + $0x150] sm:$0xff]
  %v83 = vld [vmem:[%s0 + $0x158] sm:$0xff]
  %v84 = vld [vmem:[%s0 + $0x160] sm:$0xff]
  %v85 = vld [vmem:[%s0 + $0x168] sm:$0xff]
  %v86 = vld [vmem:[%s0 + $0x170] sm:$0xff]
  %v87 = vld [vmem:[%s0 + $0x178] sm:$0xff]
  %v88 = vld [vmem:[%s0 + $0x180] sm:$0xff]
  %v89 = vld [vmem:[%s0 + $0x188] sm:$0xff]
  %v90 = vld [vmem:[%s0 + $0x190] sm:$0xff]
  %v91 = vld [vmem:[%s0 + $0x198] sm:$0xff]
  %v92 = vld [vmem:[%s0 + $0x1a0] sm:$0xff]
  %v93 = vld [vmem:[%s0 + $0x1a8] sm:$0xff]
  %v94 = vld [vmem:[%s0 + $0x1b0] sm:$0xff]
  %v95 = vld [vmem:[%s0 + $0x1b8] sm:$0xff]
  %v96 = vld [vmem:[%s0 + $0x1c0] sm:$0xff]
  %v97 = vld [vmem:[%s0 + $0x1c8] sm:$0xff]
  %v98 = vld [vmem:[%s0 + $0x1d0] sm:$0xff]
  %v99 = vld [vmem:[%s0 + $0x1d8] sm:$0xff]
  %v100 = vld [vmem:[%s0 + $0x1e0] sm:$0xff]
  %v101 = vld [vmem:[%s0 + $0x1e8] sm:$0xff]
  %v102 = vld [vmem:[%s0 + $0x1f0] sm:$0xff]
  %v103 = vld [vmem:[%s0 + $0x1f8] sm:$0xff]
  %v104 = vadd.f32 %v40, %v44
  %v105 = vrot.slane %v104, 4
  %v106 = vadd.f32 %v104, %v105
  %v107 = vrot.slane %v106, 2
  %v108 = vadd.f32 %v106, %v107
  %v109 = vrot.slane %v108, 1
  %v110 = vadd.f32 %v108, %v109
  %v111 = vadd.f32 %v41, %v45
  %v112 = vrot.slane %v111, 4
  %v113 = vadd.f32 %v111, %v112
  %v114 = vrot.slane %v113, 2
  %v115 = vadd.f32 %v113, %v114
  %v116 = vrot.slane %v115, 1
  %v117 = vadd.f32 %v115, %v116
  %v118 = vadd.f32 %v42, %v46
  %v119 = vrot.slane %v118, 4
  %v120 = vadd.f32 %v118, %v119
  %v121 = vrot.slane %v120, 2
  %v122 = vadd.f32 %v120, %v121
  %v123 = vrot.slane %v122, 1
  %v124 = vadd.f32 %v122, %v123
  %v125 = vadd.f32 %v43, %v47
  %v126 = vrot.slane %v125, 4
  %v127 = vadd.f32 %v125, %v126
  %v128 = vrot.slane %v127, 2
  %v129 = vadd.f32 %v127, %v128
  %v130 = vrot.slane %v129, 1
  %v131 = vadd.f32 %v129, %v130
  %v132 = vadd.f32 %v48, %v52
  %v133 = vrot.slane %v132, 4
  %v134 = vadd.f32 %v132, %v133
  %v135 = vrot.slane %v134, 2
  %v136 = vadd.f32 %v134, %v135
  %v137 = vrot.slane %v136, 1
  %v138 = vadd.f32 %v136, %v137
  %v139 = vadd.f32 %v49, %v53
  %v140 = vrot.slane %v139, 4
  %v141 = vadd.f32 %v139, %v140
  %v142 = vrot.slane %v141, 2
  %v143 = vadd.f32 %v141, %v142
  %v144 = vrot.slane %v143, 1
  %v145 = vadd.f32 %v143, %v144
  %v146 = vadd.f32 %v50, %v54
  %v147 = vrot.slane %v146, 4
  %v148 = vadd.f32 %v146, %v147
  %v149 = vrot.slane %v148, 2
  %v150 = vadd.f32 %v148, %v149
  %v151 = vrot.slane %v150, 1
  %v152 = vadd.f32 %v150, %v151
  %v153 = vadd.f32 %v51, %v55
  %v154 = vrot.slane %v153, 4
  %v155 = vadd.f32 %v153, %v154
  %v156 = vrot.slane %v155, 2
  %v157 = vadd.f32 %v155, %v156
  %v158 = vrot.slane %v157, 1
  %v159 = vadd.f32 %v157, %v158
  %v160 = vadd.f32 %v56, %v60
  %v161 = vrot.slane %v160, 4
  %v162 = vadd.f32 %v160, %v161
  %v163 = vrot.slane %v162, 2
  %v164 = vadd.f32 %v162, %v163
  %v165 = vrot.slane %v164, 1
  %v166 = vadd.f32 %v164, %v165
  %v167 = vadd.f32 %v57, %v61
  %v168 = vrot.slane %v167, 4
  %v169 = vadd.f32 %v167, %v168
  %v170 = vrot.slane %v169, 2
  %v171 = vadd.f32 %v169, %v170
  %v172 = vrot.slane %v171, 1
  %v173 = vadd.f32 %v171, %v172
  %v174 = vadd.f32 %v58, %v62
  %v175 = vrot.slane %v174, 4
  %v176 = vadd.f32 %v174, %v175
  %v177 = vrot.slane %v176, 2
  %v178 = vadd.f32 %v176, %v177
  %v179 = vrot.slane %v178, 1
  %v180 = vadd.f32 %v178, %v179
  %v181 = vadd.f32 %v59, %v63
  %v182 = vrot.slane %v181, 4
  %v183 = vadd.f32 %v181, %v182
  %v184 = vrot.slane %v183, 2
  %v185 = vadd.f32 %v183, %v184
  %v186 = vrot.slane %v185, 1
  %v187 = vadd.f32 %v185, %v186
  %v188 = vadd.f32 %v64, %v68
  %v189 = vrot.slane %v188, 4
  %v190 = vadd.f32 %v188, %v189
  %v191 = vrot.slane %v190, 2
  %v192 = vadd.f32 %v190, %v191
  %v193 = vrot.slane %v192, 1
  %v194 = vadd.f32 %v192, %v193
  %v195 = vadd.f32 %v65, %v69
  %v196 = vrot.slane %v195, 4
  %v197 = vadd.f32 %v195, %v196
  %v198 = vrot.slane %v197, 2
  %v199 = vadd.f32 %v197, %v198
  %v200 = vrot.slane %v199, 1
  %v201 = vadd.f32 %v199, %v200
  %v202 = vadd.f32 %v66, %v70
  %v203 = vrot.slane %v202, 4
  %v204 = vadd.f32 %v202, %v203
  %v205 = vrot.slane %v204, 2
  %v206 = vadd.f32 %v204, %v205
  %v207 = vrot.slane %v206, 1
  %v208 = vadd.f32 %v206, %v207
  %v209 = vadd.f32 %v67, %v71
  %v210 = vrot.slane %v209, 4
  %v211 = vadd.f32 %v209, %v210
  %v212 = vrot.slane %v211, 2
  %v213 = vadd.f32 %v211, %v212
  %v214 = vrot.slane %v213, 1
  %v215 = vadd.f32 %v213, %v214
  %v216 = vadd.f32 %v72, %v76
  %v217 = vrot.slane %v216, 4
  %v218 = vadd.f32 %v216, %v217
  %v219 = vrot.slane %v218, 2
  %v220 = vadd.f32 %v218, %v219
  %v221 = vrot.slane %v220, 1
  %v222 = vadd.f32 %v220, %v221
  %v223 = vadd.f32 %v73, %v77
  %v224 = vrot.slane %v223, 4
  %v225 = vadd.f32 %v223, %v224
  %v226 = vrot.slane %v225, 2
  %v227 = vadd.f32 %v225, %v226
  %v228 = vrot.slane %v227, 1
  %v229 = vadd.f32 %v227, %v228
  %v230 = vadd.f32 %v74, %v78
  %v231 = vrot.slane %v230, 4
  %v232 = vadd.f32 %v230, %v231
  %v233 = vrot.slane %v232, 2
  %v234 = vadd.f32 %v232, %v233
  %v235 = vrot.slane %v234, 1
  %v236 = vadd.f32 %v234, %v235
  %v237 = vadd.f32 %v75, %v79
  %v238 = vrot.slane %v237, 4
  %v239 = vadd.f32 %v237, %v238
  %v240 = vrot.slane %v239, 2
  %v241 = vadd.f32 %v239, %v240
  %v242 = vrot.slane %v241, 1
  %v243 = vadd.f32 %v241, %v242
  %v244 = vadd.f32 %v80, %v84
  %v245 = vrot.slane %v244, 4
  %v246 = vadd.f32 %v244, %v245
  %v247 = vrot.slane %v246, 2
  %v248 = vadd.f32 %v246, %v247
  %v249 = vrot.slane %v248, 1
  %v250 = vadd.f32 %v248, %v249
  %v251 = vadd.f32 %v81, %v85
  %v252 = vrot.slane %v251, 4
  %v253 = vadd.f32 %v251, %v252
  %v254 = vrot.slane %v253, 2
  %v255 = vadd.f32 %v253, %v254
  %v256 = vrot.slane %v255, 1
  %v257 = vadd.f32 %v255, %v256
  %v258 = vadd.f32 %v82, %v86
  %v259 = vrot.slane %v258, 4
  %v260 = vadd.f32 %v258, %v259
  %v261 = vrot.slane %v260, 2
  %v262 = vadd.f32 %v260, %v261
  %v263 = vrot.slane %v262, 1
  %v264 = vadd.f32 %v262, %v263
  %v265 = vadd.f32 %v83, %v87
  %v266 = vrot.slane %v265, 4
  %v267 = vadd.f32 %v265, %v266
  %v268 = vrot.slane %v267, 2
  %v269 = vadd.f32 %v267, %v268
  %v270 = vrot.slane %v269, 1
  %v271 = vadd.f32 %v269, %v270
  %v272 = vadd.f32 %v88, %v92
  %v273 = vrot.slane %v272, 4
  %v274 = vadd.f32 %v272, %v273
  %v275 = vrot.slane %v274, 2
  %v276 = vadd.f32 %v274, %v275
  %v277 = vrot.slane %v276, 1
  %v278 = vadd.f32 %v276, %v277
  %v279 = vadd.f32 %v89, %v93
  %v280 = vrot.slane %v279, 4
  %v281 = vadd.f32 %v279, %v280
  %v282 = vrot.slane %v281, 2
  %v283 = vadd.f32 %v281, %v282
  %v284 = vrot.slane %v283, 1
  %v285 = vadd.f32 %v283, %v284
  %v286 = vadd.f32 %v90, %v94
  %v287 = vrot.slane %v286, 4
  %v288 = vadd.f32 %v286, %v287
  %v289 = vrot.slane %v288, 2
  %v290 = vadd.f32 %v288, %v289
  %v291 = vrot.slane %v290, 1
  %v292 = vadd.f32 %v290, %v291
  %v293 = vadd.f32 %v91, %v95
  %v294 = vrot.slane %v293, 4
  %v295 = vadd.f32 %v293, %v294
  %v296 = vrot.slane %v295, 2
  %v297 = vadd.f32 %v295, %v296
  %v298 = vrot.slane %v297, 1
  %v299 = vadd.f32 %v297, %v298
  %v300 = vadd.f32 %v96, %v100
  %v301 = vrot.slane %v300, 4
  %v302 = vadd.f32 %v300, %v301
  %v303 = vrot.slane %v302, 2
  %v304 = vadd.f32 %v302, %v303
  %v305 = vrot.slane %v304, 1
  %v306 = vadd.f32 %v304, %v305
  %v307 = vadd.f32 %v97, %v101
  %v308 = vrot.slane %v307, 4
  %v309 = vadd.f32 %v307, %v308
  %v310 = vrot.slane %v309, 2
  %v311 = vadd.f32 %v309, %v310
  %v312 = vrot.slane %v311, 1
  %v313 = vadd.f32 %v311, %v312
  %v314 = vadd.f32 %v98, %v102
  %v315 = vrot.slane %v314, 4
  %v316 = vadd.f32 %v314, %v315
  %v317 = vrot.slane %v316, 2
  %v318 = vadd.f32 %v316, %v317
  %v319 = vrot.slane %v318, 1
  %v320 = vadd.f32 %v318, %v319
  %v321 = vadd.f32 %v99, %v103
  %v322 = vrot.slane %v321, 4
  %v323 = vadd.f32 %v321, %v322
  %v324 = vrot.slane %v323, 2
  %v325 = vadd.f32 %v323, %v324
  %v326 = vrot.slane %v325, 1
  %v327 = vadd.f32 %v325, %v326
  %v328 = vmul.f32 %v110, 0.0625
  %v329 = vmul.f32 %v117, 0.0625
  %v330 = vmul.f32 %v124, 0.0625
  %v331 = vmul.f32 %v131, 0.0625
  %v332 = vmul.f32 %v138, 0.0625
  %v333 = vmul.f32 %v145, 0.0625
  %v334 = vmul.f32 %v152, 0.0625
  %v335 = vmul.f32 %v159, 0.0625
  %v336 = vmul.f32 %v166, 0.0625
  %v337 = vmul.f32 %v173, 0.0625
  %v338 = vmul.f32 %v180, 0.0625
  %v339 = vmul.f32 %v187, 0.0625
  %v340 = vmul.f32 %v194, 0.0625
  %v341 = vmul.f32 %v201, 0.0625
  %v342 = vmul.f32 %v208, 0.0625
  %v343 = vmul.f32 %v215, 0.0625
  %v344 = vmul.f32 %v222, 0.0625
  %v345 = vmul.f32 %v229, 0.0625
  %v346 = vmul.f32 %v236, 0.0625
  %v347 = vmul.f32 %v243, 0.0625
  %v348 = vmul.f32 %v250, 0.0625
  %v349 = vmul.f32 %v257, 0.0625
  %v350 = vmul.f32 %v264, 0.0625
  %v351 = vmul.f32 %v271, 0.0625
  %v352 = vmul.f32 %v278, 0.0625
  %v353 = vmul.f32 %v285, 0.0625
  %v354 = vmul.f32 %v292, 0.0625
  %v355 = vmul.f32 %v299, 0.0625
  %v356 = vmul.f32 %v306, 0.0625
  %v357 = vmul.f32 %v313, 0.0625
  %v358 = vmul.f32 %v320, 0.0625
  %v359 = vmul.f32 %v327, 0.0625
  %v360 = vld [vmem:[%s3] sm:$0xff]
  %v361 = vld [vmem:[%s3 + $0x8] sm:$0xff]
  %v362 = vld [vmem:[%s3 + $0x10] sm:$0xff]
  %v363 = vld [vmem:[%s3 + $0x18] sm:$0xff]
  %v364 = vld [vmem:[%s3 + $0x20] sm:$0xff]
  %v365 = vld [vmem:[%s3 + $0x28] sm:$0xff]
  %v366 = vld [vmem:[%s3 + $0x30] sm:$0xff]
  %v367 = vld [vmem:[%s3 + $0x38] sm:$0xff]
  %v368 = vld [vmem:[%s3 + $0x40] sm:$0xff]
  %v369 = vld [vmem:[%s3 + $0x48] sm:$0xff]
  %v370 = vld [vmem:[%s3 + $0x50] sm:$0xff]
  %v371 = vld [vmem:[%s3 + $0x58] sm:$0xff]
  %v372 = vld [vmem:[%s3 + $0x60] sm:$0xff]
  %v373 = vld [vmem:[%s3 + $0x68] sm:$0xff]
  %v374 = vld [vmem:[%s3 + $0x70] sm:$0xff]
  %v375 = vld [vmem:[%s3 + $0x78] sm:$0xff]
  %v376 = vld [vmem:[%s3 + $0x80] sm:$0xff]
  %v377 = vld [vmem:[%s3 + $0x88] sm:$0xff]
  %v378 = vld [vmem:[%s3 + $0x90] sm:$0xff]
  %v379 = vld [vmem:[%s3 + $0x98] sm:$0xff]
  %v380 = vld [vmem:[%s3 + $0xa0] sm:$0xff]
  %v381 = vld [vmem:[%s3 + $0xa8] sm:$0xff]
  %v382 = vld [vmem:[%s3 + $0xb0] sm:$0xff]
  %v383 = vld [vmem:[%s3 + $0xb8] sm:$0xff]
  %v384 = vld [vmem:[%s3 + $0xc0] sm:$0xff]
  %v385 = vld [vmem:[%s3 + $0xc8] sm:$0xff]
  %v386 = vld [vmem:[%s3 + $0xd0] sm:$0xff]
  %v387 = vld [vmem:[%s3 + $0xd8] sm:$0xff]
  %v388 = vld [vmem:[%s3 + $0xe0] sm:$0xff]
  %v389 = vld [vmem:[%s3 + $0xe8] sm:$0xff]
  %v390 = vld [vmem:[%s3 + $0xf0] sm:$0xff]
  %v391 = vld [vmem:[%s3 + $0xf8] sm:$0xff]
  %v392 = vld [vmem:[%s3 + $0x100] sm:$0xff]
  %v393 = vld [vmem:[%s3 + $0x108] sm:$0xff]
  %v394 = vld [vmem:[%s3 + $0x110] sm:$0xff]
  %v395 = vld [vmem:[%s3 + $0x118] sm:$0xff]
  %v396 = vld [vmem:[%s3 + $0x120] sm:$0xff]
  %v397 = vld [vmem:[%s3 + $0x128] sm:$0xff]
  %v398 = vld [vmem:[%s3 + $0x130] sm:$0xff]
  %v399 = vld [vmem:[%s3 + $0x138] sm:$0xff]
  %v400 = vld [vmem:[%s3 + $0x140] sm:$0xff]
  %v401 = vld [vmem:[%s3 + $0x148] sm:$0xff]
  %v402 = vld [vmem:[%s3 + $0x150] sm:$0xff]
  %v403 = vld [vmem:[%s3 + $0x158] sm:$0xff]
  %v404 = vld [vmem:[%s3 + $0x160] sm:$0xff]
  %v405 = vld [vmem:[%s3 + $0x168] sm:$0xff]
  %v406 = vld [vmem:[%s3 + $0x170] sm:$0xff]
  %v407 = vld [vmem:[%s3 + $0x178] sm:$0xff]
  %v408 = vld [vmem:[%s3 + $0x180] sm:$0xff]
  %v409 = vld [vmem:[%s3 + $0x188] sm:$0xff]
  %v410 = vld [vmem:[%s3 + $0x190] sm:$0xff]
  %v411 = vld [vmem:[%s3 + $0x198] sm:$0xff]
  %v412 = vld [vmem:[%s3 + $0x1a0] sm:$0xff]
  %v413 = vld [vmem:[%s3 + $0x1a8] sm:$0xff]
  %v414 = vld [vmem:[%s3 + $0x1b0] sm:$0xff]
  %v415 = vld [vmem:[%s3 + $0x1b8] sm:$0xff]
  %v416 = vld [vmem:[%s3 + $0x1c0] sm:$0xff]
  %v417 = vld [vmem:[%s3 + $0x1c8] sm:$0xff]
  %v418 = vld [vmem:[%s3 + $0x1d0] sm:$0xff]
  %v419 = vld [vmem:[%s3 + $0x1d8] sm:$0xff]
  %v420 = vld [vmem:[%s3 + $0x1e0] sm:$0xff]
  %v421 = vld [vmem:[%s3 + $0x1e8] sm:$0xff]
  %v422 = vld [vmem:[%s3 + $0x1f0] sm:$0xff]
  %v423 = vld [vmem:[%s3 + $0x1f8] sm:$0xff]
  %v424 = vld [vmem:[%s3 + $0x200] sm:$0xff]
  %v425 = vld [vmem:[%s3 + $0x208] sm:$0xff]
  %v426 = vld [vmem:[%s3 + $0x210] sm:$0xff]
  %v427 = vld [vmem:[%s3 + $0x218] sm:$0xff]
  %v428 = vld [vmem:[%s3 + $0x220] sm:$0xff]
  %v429 = vld [vmem:[%s3 + $0x228] sm:$0xff]
  %v430 = vld [vmem:[%s3 + $0x230] sm:$0xff]
  %v431 = vld [vmem:[%s3 + $0x238] sm:$0xff]
  %v432 = vld [vmem:[%s3 + $0x240] sm:$0xff]
  %v433 = vld [vmem:[%s3 + $0x248] sm:$0xff]
  %v434 = vld [vmem:[%s3 + $0x250] sm:$0xff]
  %v435 = vld [vmem:[%s3 + $0x258] sm:$0xff]
  %v436 = vld [vmem:[%s3 + $0x260] sm:$0xff]
  %v437 = vld [vmem:[%s3 + $0x268] sm:$0xff]
  %v438 = vld [vmem:[%s3 + $0x270] sm:$0xff]
  %v439 = vld [vmem:[%s3 + $0x278] sm:$0xff]
  %v440 = vld [vmem:[%s3 + $0x280] sm:$0xff]
  %v441 = vld [vmem:[%s3 + $0x288] sm:$0xff]
  %v442 = vld [vmem:[%s3 + $0x290] sm:$0xff]
  %v443 = vld [vmem:[%s3 + $0x298] sm:$0xff]
  %v444 = vld [vmem:[%s3 + $0x2a0] sm:$0xff]
  %v445 = vld [vmem:[%s3 + $0x2a8] sm:$0xff]
  %v446 = vld [vmem:[%s3 + $0x2b0] sm:$0xff]
  %v447 = vld [vmem:[%s3 + $0x2b8] sm:$0xff]
  %v448 = vld [vmem:[%s3 + $0x2c0] sm:$0xff]
  %v449 = vld [vmem:[%s3 + $0x2c8] sm:$0xff]
  %v450 = vld [vmem:[%s3 + $0x2d0] sm:$0xff]
  %v451 = vld [vmem:[%s3 + $0x2d8] sm:$0xff]
  %v452 = vld [vmem:[%s3 + $0x2e0] sm:$0xff]
  %v453 = vld [vmem:[%s3 + $0x2e8] sm:$0xff]
  %v454 = vld [vmem:[%s3 + $0x2f0] sm:$0xff]
  %v455 = vld [vmem:[%s3 + $0x2f8] sm:$0xff]
  %v456 = vld [vmem:[%s3 + $0x300] sm:$0xff]
  %v457 = vld [vmem:[%s3 + $0x308] sm:$0xff]
  %v458 = vld [vmem:[%s3 + $0x310] sm:$0xff]
  %v459 = vld [vmem:[%s3 + $0x318] sm:$0xff]
  %v460 = vld [vmem:[%s3 + $0x320] sm:$0xff]
  %v461 = vld [vmem:[%s3 + $0x328] sm:$0xff]
  %v462 = vld [vmem:[%s3 + $0x330] sm:$0xff]
  %v463 = vld [vmem:[%s3 + $0x338] sm:$0xff]
  %v464 = vld [vmem:[%s3 + $0x340] sm:$0xff]
  %v465 = vld [vmem:[%s3 + $0x348] sm:$0xff]
  %v466 = vld [vmem:[%s3 + $0x350] sm:$0xff]
  %v467 = vld [vmem:[%s3 + $0x358] sm:$0xff]
  %v468 = vld [vmem:[%s3 + $0x360] sm:$0xff]
  %v469 = vld [vmem:[%s3 + $0x368] sm:$0xff]
  %v470 = vld [vmem:[%s3 + $0x370] sm:$0xff]
  %v471 = vld [vmem:[%s3 + $0x378] sm:$0xff]
  %v472 = vld [vmem:[%s3 + $0x380] sm:$0xff]
  %v473 = vld [vmem:[%s3 + $0x388] sm:$0xff]
  %v474 = vld [vmem:[%s3 + $0x390] sm:$0xff]
  %v475 = vld [vmem:[%s3 + $0x398] sm:$0xff]
  %v476 = vld [vmem:[%s3 + $0x3a0] sm:$0xff]
  %v477 = vld [vmem:[%s3 + $0x3a8] sm:$0xff]
  %v478 = vld [vmem:[%s3 + $0x3b0] sm:$0xff]
  %v479 = vld [vmem:[%s3 + $0x3b8] sm:$0xff]
  %v480 = vld [vmem:[%s3 + $0x3c0] sm:$0xff]
  %v481 = vld [vmem:[%s3 + $0x3c8] sm:$0xff]
  %v482 = vld [vmem:[%s3 + $0x3d0] sm:$0xff]
  %v483 = vld [vmem:[%s3 + $0x3d8] sm:$0xff]
  %v484 = vld [vmem:[%s3 + $0x3e0] sm:$0xff]
  %v485 = vld [vmem:[%s3 + $0x3e8] sm:$0xff]
  %v486 = vld [vmem:[%s3 + $0x3f0] sm:$0xff]
  %v487 = vld [vmem:[%s3 + $0x3f8] sm:$0xff]
  %v488 = vunpack.c.l.bf16 %v360
  %v489 = vunpack.c.h.bf16 %v360
  %v490 = vunpack.c.l.bf16 %v361
  %v491 = vunpack.c.h.bf16 %v361
  %v492 = vunpack.c.l.bf16 %v362
  %v493 = vunpack.c.h.bf16 %v362
  %v494 = vunpack.c.l.bf16 %v363
  %v495 = vunpack.c.h.bf16 %v363
  %v496 = vunpack.c.l.bf16 %v364
  %v497 = vunpack.c.h.bf16 %v364
  %v498 = vunpack.c.l.bf16 %v365
  %v499 = vunpack.c.h.bf16 %v365
  %v500 = vunpack.c.l.bf16 %v366
  %v501 = vunpack.c.h.bf16 %v366
  %v502 = vunpack.c.l.bf16 %v367
  %v503 = vunpack.c.h.bf16 %v367
  %v504 = vunpack.c.l.bf16 %v368
  %v505 = vunpack.c.h.bf16 %v368
  %v506 = vunpack.c.l.bf16 %v369
  %v507 = vunpack.c.h.bf16 %v369
  %v508 = vunpack.c.l.bf16 %v370
  %v509 = vunpack.c.h.bf16 %v370
  %v510 = vunpack.c.l.bf16 %v371
  %v511 = vunpack.c.h.bf16 %v371
  %v512 = vunpack.c.l.bf16 %v372
  %v513 = vunpack.c.h.bf16 %v372
  %v514 = vunpack.c.l.bf16 %v373
  %v515 = vunpack.c.h.bf16 %v373
  %v516 = vunpack.c.l.bf16 %v374
  %v517 = vunpack.c.h.bf16 %v374
  %v518 = vunpack.c.l.bf16 %v375
  %v519 = vunpack.c.h.bf16 %v375
  %v520 = vunpack.c.l.bf16 %v376
  %v521 = vunpack.c.h.bf16 %v376
  %v522 = vunpack.c.l.bf16 %v377
  %v523 = vunpack.c.h.bf16 %v377
  %v524 = vunpack.c.l.bf16 %v378
  %v525 = vunpack.c.h.bf16 %v378
  %v526 = vunpack.c.l.bf16 %v379
  %v527 = vunpack.c.h.bf16 %v379
  %v528 = vunpack.c.l.bf16 %v380
  %v529 = vunpack.c.h.bf16 %v380
  %v530 = vunpack.c.l.bf16 %v381
  %v531 = vunpack.c.h.bf16 %v381
  %v532 = vunpack.c.l.bf16 %v382
  %v533 = vunpack.c.h.bf16 %v382
  %v534 = vunpack.c.l.bf16 %v383
  %v535 = vunpack.c.h.bf16 %v383
  %v536 = vunpack.c.l.bf16 %v384
  %v537 = vunpack.c.h.bf16 %v384
  %v538 = vunpack.c.l.bf16 %v385
  %v539 = vunpack.c.h.bf16 %v385
  %v540 = vunpack.c.l.bf16 %v386
  %v541 = vunpack.c.h.bf16 %v386
  %v542 = vunpack.c.l.bf16 %v387
  %v543 = vunpack.c.h.bf16 %v387
  %v544 = vunpack.c.l.bf16 %v388
  %v545 = vunpack.c.h.bf16 %v388
  %v546 = vunpack.c.l.bf16 %v389
  %v547 = vunpack.c.h.bf16 %v389
  %v548 = vunpack.c.l.bf16 %v390
  %v549 = vunpack.c.h.bf16 %v390
  %v550 = vunpack.c.l.bf16 %v391
  %v551 = vunpack.c.h.bf16 %v391
  %v552 = vunpack.c.l.bf16 %v392
  %v553 = vunpack.c.h.bf16 %v392
  %v554 = vunpack.c.l.bf16 %v393
  %v555 = vunpack.c.h.bf16 %v393
  %v556 = vunpack.c.l.bf16 %v394
  %v557 = vunpack.c.h.bf16 %v394
  %v558 = vunpack.c.l.bf16 %v395
  %v559 = vunpack.c.h.bf16 %v395
  %v560 = vunpack.c.l.bf16 %v396
  %v561 = vunpack.c.h.bf16 %v396
  %v562 = vunpack.c.l.bf16 %v397
  %v563 = vunpack.c.h.bf16 %v397
  %v564 = vunpack.c.l.bf16 %v398
  %v565 = vunpack.c.h.bf16 %v398
  %v566 = vunpack.c.l.bf16 %v399
  %v567 = vunpack.c.h.bf16 %v399
  %v568 = vunpack.c.l.bf16 %v400
  %v569 = vunpack.c.h.bf16 %v400
  %v570 = vunpack.c.l.bf16 %v401
  %v571 = vunpack.c.h.bf16 %v401
  %v572 = vunpack.c.l.bf16 %v402
  %v573 = vunpack.c.h.bf16 %v402
  %v574 = vunpack.c.l.bf16 %v403
  %v575 = vunpack.c.h.bf16 %v403
  %v576 = vunpack.c.l.bf16 %v404
  %v577 = vunpack.c.h.bf16 %v404
  %v578 = vunpack.c.l.bf16 %v405
  %v579 = vunpack.c.h.bf16 %v405
  %v580 = vunpack.c.l.bf16 %v406
  %v581 = vunpack.c.h.bf16 %v406
  %v582 = vunpack.c.l.bf16 %v407
  %v583 = vunpack.c.h.bf16 %v407
  %v584 = vunpack.c.l.bf16 %v408
  %v585 = vunpack.c.h.bf16 %v408
  %v586 = vunpack.c.l.bf16 %v409
  %v587 = vunpack.c.h.bf16 %v409
  %v588 = vunpack.c.l.bf16 %v410
  %v589 = vunpack.c.h.bf16 %v410
  %v590 = vunpack.c.l.bf16 %v411
  %v591 = vunpack.c.h.bf16 %v411
  %v592 = vunpack.c.l.bf16 %v412
  %v593 = vunpack.c.h.bf16 %v412
  %v594 = vunpack.c.l.bf16 %v413
  %v595 = vunpack.c.h.bf16 %v413
  %v596 = vunpack.c.l.bf16 %v414
  %v597 = vunpack.c.h.bf16 %v414
  %v598 = vunpack.c.l.bf16 %v415
  %v599 = vunpack.c.h.bf16 %v415
  %v600 = vunpack.c.l.bf16 %v416
  %v601 = vunpack.c.h.bf16 %v416
  %v602 = vunpack.c.l.bf16 %v417
  %v603 = vunpack.c.h.bf16 %v417
  %v604 = vunpack.c.l.bf16 %v418
  %v605 = vunpack.c.h.bf16 %v418
  %v606 = vunpack.c.l.bf16 %v419
  %v607 = vunpack.c.h.bf16 %v419
  %v608 = vunpack.c.l.bf16 %v420
  %v609 = vunpack.c.h.bf16 %v420
  %v610 = vunpack.c.l.bf16 %v421
  %v611 = vunpack.c.h.bf16 %v421
  %v612 = vunpack.c.l.bf16 %v422
  %v613 = vunpack.c.h.bf16 %v422
  %v614 = vunpack.c.l.bf16 %v423
  %v615 = vunpack.c.h.bf16 %v423
  %v616 = vunpack.c.l.bf16 %v424
  %v617 = vunpack.c.h.bf16 %v424
  %v618 = vunpack.c.l.bf16 %v425
  %v619 = vunpack.c.h.bf16 %v425
  %v620 = vunpack.c.l.bf16 %v426
  %v621 = vunpack.c.h.bf16 %v426
  %v622 = vunpack.c.l.bf16 %v427
  %v623 = vunpack.c.h.bf16 %v427
  %v624 = vunpack.c.l.bf16 %v428
  %v625 = vunpack.c.h.bf16 %v428
  %v626 = vunpack.c.l.bf16 %v429
  %v627 = vunpack.c.h.bf16 %v429
  %v628 = vunpack.c.l.bf16 %v430
  %v629 = vunpack.c.h.bf16 %v430
  %v630 = vunpack.c.l.bf16 %v431
  %v631 = vunpack.c.h.bf16 %v431
  %v632 = vunpack.c.l.bf16 %v432
  %v633 = vunpack.c.h.bf16 %v432
  %v634 = vunpack.c.l.bf16 %v433
  %v635 = vunpack.c.h.bf16 %v433
  %v636 = vunpack.c.l.bf16 %v434
  %v637 = vunpack.c.h.bf16 %v434
  %v638 = vunpack.c.l.bf16 %v435
  %v639 = vunpack.c.h.bf16 %v435
  %v640 = vunpack.c.l.bf16 %v436
  %v641 = vunpack.c.h.bf16 %v436
  %v642 = vunpack.c.l.bf16 %v437
  %v643 = vunpack.c.h.bf16 %v437
  %v644 = vunpack.c.l.bf16 %v438
  %v645 = vunpack.c.h.bf16 %v438
  %v646 = vunpack.c.l.bf16 %v439
  %v647 = vunpack.c.h.bf16 %v439
  %v648 = vunpack.c.l.bf16 %v440
  %v649 = vunpack.c.h.bf16 %v440
  %v650 = vunpack.c.l.bf16 %v441
  %v651 = vunpack.c.h.bf16 %v441
  %v652 = vunpack.c.l.bf16 %v442
  %v653 = vunpack.c.h.bf16 %v442
  %v654 = vunpack.c.l.bf16 %v443
  %v655 = vunpack.c.h.bf16 %v443
  %v656 = vunpack.c.l.bf16 %v444
  %v657 = vunpack.c.h.bf16 %v444
  %v658 = vunpack.c.l.bf16 %v445
  %v659 = vunpack.c.h.bf16 %v445
  %v660 = vunpack.c.l.bf16 %v446
  %v661 = vunpack.c.h.bf16 %v446
  %v662 = vunpack.c.l.bf16 %v447
  %v663 = vunpack.c.h.bf16 %v447
  %v664 = vunpack.c.l.bf16 %v448
  %v665 = vunpack.c.h.bf16 %v448
  %v666 = vunpack.c.l.bf16 %v449
  %v667 = vunpack.c.h.bf16 %v449
  %v668 = vunpack.c.l.bf16 %v450
  %v669 = vunpack.c.h.bf16 %v450
  %v670 = vunpack.c.l.bf16 %v451
  %v671 = vunpack.c.h.bf16 %v451
  %v672 = vunpack.c.l.bf16 %v452
  %v673 = vunpack.c.h.bf16 %v452
  %v674 = vunpack.c.l.bf16 %v453
  %v675 = vunpack.c.h.bf16 %v453
  %v676 = vunpack.c.l.bf16 %v454
  %v677 = vunpack.c.h.bf16 %v454
  %v678 = vunpack.c.l.bf16 %v455
  %v679 = vunpack.c.h.bf16 %v455
  %v680 = vunpack.c.l.bf16 %v456
  %v681 = vunpack.c.h.bf16 %v456
  %v682 = vunpack.c.l.bf16 %v457
  %v683 = vunpack.c.h.bf16 %v457
  %v684 = vunpack.c.l.bf16 %v458
  %v685 = vunpack.c.h.bf16 %v458
  %v686 = vunpack.c.l.bf16 %v459
  %v687 = vunpack.c.h.bf16 %v459
  %v688 = vunpack.c.l.bf16 %v460
  %v689 = vunpack.c.h.bf16 %v460
  %v690 = vunpack.c.l.bf16 %v461
  %v691 = vunpack.c.h.bf16 %v461
  %v692 = vunpack.c.l.bf16 %v462
  %v693 = vunpack.c.h.bf16 %v462
  %v694 = vunpack.c.l.bf16 %v463
  %v695 = vunpack.c.h.bf16 %v463
  %v696 = vunpack.c.l.bf16 %v464
  %v697 = vunpack.c.h.bf16 %v464
  %v698 = vunpack.c.l.bf16 %v465
  %v699 = vunpack.c.h.bf16 %v465
  %v700 = vunpack.c.l.bf16 %v466
  %v701 = vunpack.c.h.bf16 %v466
  %v702 = vunpack.c.l.bf16 %v467
  %v703 = vunpack.c.h.bf16 %v467
  %v704 = vunpack.c.l.bf16 %v468
  %v705 = vunpack.c.h.bf16 %v468
  %v706 = vunpack.c.l.bf16 %v469
  %v707 = vunpack.c.h.bf16 %v469
  %v708 = vunpack.c.l.bf16 %v470
  %v709 = vunpack.c.h.bf16 %v470
  %v710 = vunpack.c.l.bf16 %v471
  %v711 = vunpack.c.h.bf16 %v471
  %v712 = vunpack.c.l.bf16 %v472
  %v713 = vunpack.c.h.bf16 %v472
  %v714 = vunpack.c.l.bf16 %v473
  %v715 = vunpack.c.h.bf16 %v473
  %v716 = vunpack.c.l.bf16 %v474
  %v717 = vunpack.c.h.bf16 %v474
  %v718 = vunpack.c.l.bf16 %v475
  %v719 = vunpack.c.h.bf16 %v475
  %v720 = vunpack.c.l.bf16 %v476
  %v721 = vunpack.c.h.bf16 %v476
  %v722 = vunpack.c.l.bf16 %v477
  %v723 = vunpack.c.h.bf16 %v477
  %v724 = vunpack.c.l.bf16 %v478
  %v725 = vunpack.c.h.bf16 %v478
  %v726 = vunpack.c.l.bf16 %v479
  %v727 = vunpack.c.h.bf16 %v479
  %v728 = vunpack.c.l.bf16 %v480
  %v729 = vunpack.c.h.bf16 %v480
  %v730 = vunpack.c.l.bf16 %v481
  %v731 = vunpack.c.h.bf16 %v481
  %v732 = vunpack.c.l.bf16 %v482
  %v733 = vunpack.c.h.bf16 %v482
  %v734 = vunpack.c.l.bf16 %v483
  %v735 = vunpack.c.h.bf16 %v483
  %v736 = vunpack.c.l.bf16 %v484
  %v737 = vunpack.c.h.bf16 %v484
  %v738 = vunpack.c.l.bf16 %v485
  %v739 = vunpack.c.h.bf16 %v485
  %v740 = vunpack.c.l.bf16 %v486
  %v741 = vunpack.c.h.bf16 %v486
  %v742 = vunpack.c.l.bf16 %v487
  %v743 = vunpack.c.h.bf16 %v487
  %v744 = vld [vmem:[%s4] sm:$0xf]
  %v746 = vperm.slane %v744, 0
  %v747 = vperm.slane %v744, 1
  %v748 = vperm.slane %v744, 2
  %v749 = vperm.slane %v744, 3
  %vm786 = vcmask 1041409
  %v787 = vsel %vm786, %v332, %v328
  %vm788 = vcmask 1042434
  %v789 = vsel %vm788, %v336, %v787
  %vm790 = vcmask 1043459
  %v791 = vsel %vm790, %v340, %v789
  %vm792 = vcmask 1044484
  %v793 = vsel %vm792, %v344, %v791
  %vm794 = vcmask 1045509
  %v795 = vsel %vm794, %v348, %v793
  %vm796 = vcmask 1046534
  %v797 = vsel %vm796, %v352, %v795
  %vm798 = vcmask 1047559
  %v799 = vsel %vm798, %v356, %v797
  %v800 = vsel %vm786, %v333, %v329
  %v801 = vsel %vm788, %v337, %v800
  %v802 = vsel %vm790, %v341, %v801
  %v803 = vsel %vm792, %v345, %v802
  %v804 = vsel %vm794, %v349, %v803
  %v805 = vsel %vm796, %v353, %v804
  %v806 = vsel %vm798, %v357, %v805
  %v807 = vsel %vm786, %v334, %v330
  %v808 = vsel %vm788, %v338, %v807
  %v809 = vsel %vm790, %v342, %v808
  %v810 = vsel %vm792, %v346, %v809
  %v811 = vsel %vm794, %v350, %v810
  %v812 = vsel %vm796, %v354, %v811
  %v813 = vsel %vm798, %v358, %v812
  %v814 = vsel %vm786, %v335, %v331
  %v815 = vsel %vm788, %v339, %v814
  %v816 = vsel %vm790, %v343, %v815
  %v817 = vsel %vm792, %v347, %v816
  %v818 = vsel %vm794, %v351, %v817
  %v819 = vsel %vm796, %v355, %v818
  %v820 = vsel %vm798, %v359, %v819
  %825 = vmatpush.msra.mxu0 %v548
  %826 = vmatpush.msra.mxu0 %v544
  %827 = vmatpush.msra.mxu0 %v540
  %828 = vmatpush.msra.mxu0 %v536
  %829 = vmatpush.msra.mxu0 %v532
  %830 = vmatpush.msra.mxu0 %v528
  %831 = vmatpush.msra.mxu0 %v524
  %832 = vmatpush.msra.mxu0 %v520
  %833 = vmatpush.msra.mxu0 %v516
  %834 = vmatpush.msra.mxu0 %v512
  %835 = vmatpush.msra.mxu0 %v508
  %836 = vmatpush.msra.mxu0 %v504
  %837 = vmatpush.msra.mxu0 %v500
  %838 = vmatpush.msra.mxu0 %v496
  %839 = vmatpush.msra.mxu0 %v492
  %840 = vmatpush.msra.mxu0 %v488
  %841 = vmatmul.f32.gmra.mxu0 %v799
  %v842 = vpop.f32.mrf.mxu0
  %v843 = vadd.f32 %v746, %v842
  %844 = vdwg.mxu0
  %845 = vmatpush.msra.mxu0 %v612
  %846 = vmatpush.msra.mxu0 %v608
  %847 = vmatpush.msra.mxu0 %v604
  %848 = vmatpush.msra.mxu0 %v600
  %849 = vmatpush.msra.mxu0 %v596
  %850 = vmatpush.msra.mxu0 %v592
  %851 = vmatpush.msra.mxu0 %v588
  %852 = vmatpush.msra.mxu0 %v584
  %853 = vmatpush.msra.mxu0 %v580
  %854 = vmatpush.msra.mxu0 %v576
  %855 = vmatpush.msra.mxu0 %v572
  %856 = vmatpush.msra.mxu0 %v568
  %857 = vmatpush.msra.mxu0 %v564
  %858 = vmatpush.msra.mxu0 %v560
  %859 = vmatpush.msra.mxu0 %v556
  %860 = vmatpush.msra.mxu0 %v552
  %861 = vmatmul.f32.gmra.mxu0 %v806
  %v862 = vpop.f32.mrf.mxu0
  %v863 = vadd.f32 %v843, %v862
  %864 = vdwg.mxu0
  %865 = vmatpush.msra.mxu0 %v676
  %866 = vmatpush.msra.mxu0 %v672
  %867 = vmatpush.msra.mxu0 %v668
  %868 = vmatpush.msra.mxu0 %v664
  %869 = vmatpush.msra.mxu0 %v660
  %870 = vmatpush.msra.mxu0 %v656
  %871 = vmatpush.msra.mxu0 %v652
  %872 = vmatpush.msra.mxu0 %v648
  %873 = vmatpush.msra.mxu0 %v644
  %874 = vmatpush.msra.mxu0 %v640
  %875 = vmatpush.msra.mxu0 %v636
  %876 = vmatpush.msra.mxu0 %v632
  %877 = vmatpush.msra.mxu0 %v628
  %878 = vmatpush.msra.mxu0 %v624
  %879 = vmatpush.msra.mxu0 %v620
  %880 = vmatpush.msra.mxu0 %v616
  %881 = vmatmul.f32.gmra.mxu0 %v813
  %v882 = vpop.f32.mrf.mxu0
  %v883 = vadd.f32 %v863, %v882
  %884 = vdwg.mxu0
  %885 = vmatpush.msra.mxu0 %v740
  %886 = vmatpush.msra.mxu0 %v736
  %887 = vmatpush.msra.mxu0 %v732
  %888 = vmatpush.msra.mxu0 %v728
  %889 = vmatpush.msra.mxu0 %v724
  %890 = vmatpush.msra.mxu0 %v720
  %891 = vmatpush.msra.mxu0 %v716
  %892 = vmatpush.msra.mxu0 %v712
  %893 = vmatpush.msra.mxu0 %v708
  %894 = vmatpush.msra.mxu0 %v704
  %895 = vmatpush.msra.mxu0 %v700
  %896 = vmatpush.msra.mxu0 %v696
  %897 = vmatpush.msra.mxu0 %v692
  %898 = vmatpush.msra.mxu0 %v688
  %899 = vmatpush.msra.mxu0 %v684
  %900 = vmatpush.msra.mxu0 %v680
  %901 = vmatmul.f32.gmra.mxu0 %v820
  %v902 = vpop.f32.mrf.mxu0
  %v903 = vadd.f32 %v883, %v902
  %904 = vdwg.mxu0
  %905 = vmatpush.msra.mxu0 %v549
  %906 = vmatpush.msra.mxu0 %v545
  %907 = vmatpush.msra.mxu0 %v541
  %908 = vmatpush.msra.mxu0 %v537
  %909 = vmatpush.msra.mxu0 %v533
  %910 = vmatpush.msra.mxu0 %v529
  %911 = vmatpush.msra.mxu0 %v525
  %912 = vmatpush.msra.mxu0 %v521
  %913 = vmatpush.msra.mxu0 %v517
  %914 = vmatpush.msra.mxu0 %v513
  %915 = vmatpush.msra.mxu0 %v509
  %916 = vmatpush.msra.mxu0 %v505
  %917 = vmatpush.msra.mxu0 %v501
  %918 = vmatpush.msra.mxu0 %v497
  %919 = vmatpush.msra.mxu0 %v493
  %920 = vmatpush.msra.mxu0 %v489
  %921 = vmatmul.f32.gmra.mxu0 %v799
  %v922 = vpop.f32.mrf.mxu0
  %v923 = vadd.f32 %v747, %v922
  %924 = vdwg.mxu0
  %925 = vmatpush.msra.mxu0 %v613
  %926 = vmatpush.msra.mxu0 %v609
  %927 = vmatpush.msra.mxu0 %v605
  %928 = vmatpush.msra.mxu0 %v601
  %929 = vmatpush.msra.mxu0 %v597
  %930 = vmatpush.msra.mxu0 %v593
  %931 = vmatpush.msra.mxu0 %v589
  %932 = vmatpush.msra.mxu0 %v585
  %933 = vmatpush.msra.mxu0 %v581
  %934 = vmatpush.msra.mxu0 %v577
  %935 = vmatpush.msra.mxu0 %v573
  %936 = vmatpush.msra.mxu0 %v569
  %937 = vmatpush.msra.mxu0 %v565
  %938 = vmatpush.msra.mxu0 %v561
  %939 = vmatpush.msra.mxu0 %v557
  %940 = vmatpush.msra.mxu0 %v553
  %941 = vmatmul.f32.gmra.mxu0 %v806
  %v942 = vpop.f32.mrf.mxu0
  %v943 = vadd.f32 %v923, %v942
  %944 = vdwg.mxu0
  %945 = vmatpush.msra.mxu0 %v677
  %946 = vmatpush.msra.mxu0 %v673
  %947 = vmatpush.msra.mxu0 %v669
  %948 = vmatpush.msra.mxu0 %v665
  %949 = vmatpush.msra.mxu0 %v661
  %950 = vmatpush.msra.mxu0 %v657
  %951 = vmatpush.msra.mxu0 %v653
  %952 = vmatpush.msra.mxu0 %v649
  %953 = vmatpush.msra.mxu0 %v645
  %954 = vmatpush.msra.mxu0 %v641
  %955 = vmatpush.msra.mxu0 %v637
  %956 = vmatpush.msra.mxu0 %v633
  %957 = vmatpush.msra.mxu0 %v629
  %958 = vmatpush.msra.mxu0 %v625
  %959 = vmatpush.msra.mxu0 %v621
  %960 = vmatpush.msra.mxu0 %v617
  %961 = vmatmul.f32.gmra.mxu0 %v813
  %v962 = vpop.f32.mrf.mxu0
  %v963 = vadd.f32 %v943, %v962
  %964 = vdwg.mxu0
  %965 = vmatpush.msra.mxu0 %v741
  %966 = vmatpush.msra.mxu0 %v737
  %967 = vmatpush.msra.mxu0 %v733
  %968 = vmatpush.msra.mxu0 %v729
  %969 = vmatpush.msra.mxu0 %v725
  %970 = vmatpush.msra.mxu0 %v721
  %971 = vmatpush.msra.mxu0 %v717
  %972 = vmatpush.msra.mxu0 %v713
  %973 = vmatpush.msra.mxu0 %v709
  %974 = vmatpush.msra.mxu0 %v705
  %975 = vmatpush.msra.mxu0 %v701
  %976 = vmatpush.msra.mxu0 %v697
  %977 = vmatpush.msra.mxu0 %v693
  %978 = vmatpush.msra.mxu0 %v689
  %979 = vmatpush.msra.mxu0 %v685
  %980 = vmatpush.msra.mxu0 %v681
  %981 = vmatmul.f32.gmra.mxu0 %v820
  %v982 = vpop.f32.mrf.mxu0
  %v983 = vadd.f32 %v963, %v982
  %984 = vdwg.mxu0
  %985 = vmatpush.msra.mxu0 %v550
  %986 = vmatpush.msra.mxu0 %v546
  %987 = vmatpush.msra.mxu0 %v542
  %988 = vmatpush.msra.mxu0 %v538
  %989 = vmatpush.msra.mxu0 %v534
  %990 = vmatpush.msra.mxu0 %v530
  %991 = vmatpush.msra.mxu0 %v526
  %992 = vmatpush.msra.mxu0 %v522
  %993 = vmatpush.msra.mxu0 %v518
  %994 = vmatpush.msra.mxu0 %v514
  %995 = vmatpush.msra.mxu0 %v510
  %996 = vmatpush.msra.mxu0 %v506
  %997 = vmatpush.msra.mxu0 %v502
  %998 = vmatpush.msra.mxu0 %v498
  %999 = vmatpush.msra.mxu0 %v494
  %1000 = vmatpush.msra.mxu0 %v490
  %1001 = vmatmul.f32.gmra.mxu0 %v799
  %v1002 = vpop.f32.mrf.mxu0
  %v1003 = vadd.f32 %v748, %v1002
  %1004 = vdwg.mxu0
  %1005 = vmatpush.msra.mxu0 %v614
  %1006 = vmatpush.msra.mxu0 %v610
  %1007 = vmatpush.msra.mxu0 %v606
  %1008 = vmatpush.msra.mxu0 %v602
  %1009 = vmatpush.msra.mxu0 %v598
  %1010 = vmatpush.msra.mxu0 %v594
  %1011 = vmatpush.msra.mxu0 %v590
  %1012 = vmatpush.msra.mxu0 %v586
  %1013 = vmatpush.msra.mxu0 %v582
  %1014 = vmatpush.msra.mxu0 %v578
  %1015 = vmatpush.msra.mxu0 %v574
  %1016 = vmatpush.msra.mxu0 %v570
  %1017 = vmatpush.msra.mxu0 %v566
  %1018 = vmatpush.msra.mxu0 %v562
  %1019 = vmatpush.msra.mxu0 %v558
  %1020 = vmatpush.msra.mxu0 %v554
  %1021 = vmatmul.f32.gmra.mxu0 %v806
  %v1022 = vpop.f32.mrf.mxu0
  %v1023 = vadd.f32 %v1003, %v1022
  %1024 = vdwg.mxu0
  %1025 = vmatpush.msra.mxu0 %v678
  %1026 = vmatpush.msra.mxu0 %v674
  %1027 = vmatpush.msra.mxu0 %v670
  %1028 = vmatpush.msra.mxu0 %v666
  %1029 = vmatpush.msra.mxu0 %v662
  %1030 = vmatpush.msra.mxu0 %v658
  %1031 = vmatpush.msra.mxu0 %v654
  %1032 = vmatpush.msra.mxu0 %v650
  %1033 = vmatpush.msra.mxu0 %v646
  %1034 = vmatpush.msra.mxu0 %v642
  %1035 = vmatpush.msra.mxu0 %v638
  %1036 = vmatpush.msra.mxu0 %v634
  %1037 = vmatpush.msra.mxu0 %v630
  %1038 = vmatpush.msra.mxu0 %v626
  %1039 = vmatpush.msra.mxu0 %v622
  %1040 = vmatpush.msra.mxu0 %v618
  %1041 = vmatmul.f32.gmra.mxu0 %v813
  %v1042 = vpop.f32.mrf.mxu0
  %v1043 = vadd.f32 %v1023, %v1042
  %1044 = vdwg.mxu0
  %1045 = vmatpush.msra.mxu0 %v742
  %1046 = vmatpush.msra.mxu0 %v738
  %1047 = vmatpush.msra.mxu0 %v734
  %1048 = vmatpush.msra.mxu0 %v730
  %1049 = vmatpush.msra.mxu0 %v726
  %1050 = vmatpush.msra.mxu0 %v722
  %1051 = vmatpush.msra.mxu0 %v718
  %1052 = vmatpush.msra.mxu0 %v714
  %1053 = vmatpush.msra.mxu0 %v710
  %1054 = vmatpush.msra.mxu0 %v706
  %1055 = vmatpush.msra.mxu0 %v702
  %1056 = vmatpush.msra.mxu0 %v698
  %1057 = vmatpush.msra.mxu0 %v694
  %1058 = vmatpush.msra.mxu0 %v690
  %1059 = vmatpush.msra.mxu0 %v686
  %1060 = vmatpush.msra.mxu0 %v682
  %1061 = vmatmul.f32.gmra.mxu0 %v820
  %v1062 = vpop.f32.mrf.mxu0
  %v1063 = vadd.f32 %v1043, %v1062
  %1064 = vdwg.mxu0
  %1065 = vmatpush.msra.mxu0 %v551
  %1066 = vmatpush.msra.mxu0 %v547
  %1067 = vmatpush.msra.mxu0 %v543
  %1068 = vmatpush.msra.mxu0 %v539
  %1069 = vmatpush.msra.mxu0 %v535
  %1070 = vmatpush.msra.mxu0 %v531
  %1071 = vmatpush.msra.mxu0 %v527
  %1072 = vmatpush.msra.mxu0 %v523
  %1073 = vmatpush.msra.mxu0 %v519
  %1074 = vmatpush.msra.mxu0 %v515
  %1075 = vmatpush.msra.mxu0 %v511
  %1076 = vmatpush.msra.mxu0 %v507
  %1077 = vmatpush.msra.mxu0 %v503
  %1078 = vmatpush.msra.mxu0 %v499
  %1079 = vmatpush.msra.mxu0 %v495
  %1080 = vmatpush.msra.mxu0 %v491
  %1081 = vmatmul.f32.gmra.mxu0 %v799
  %v1082 = vpop.f32.mrf.mxu0
  %v1083 = vadd.f32 %v749, %v1082
  %1084 = vdwg.mxu0
  %1085 = vmatpush.msra.mxu0 %v615
  %1086 = vmatpush.msra.mxu0 %v611
  %1087 = vmatpush.msra.mxu0 %v607
  %1088 = vmatpush.msra.mxu0 %v603
  %1089 = vmatpush.msra.mxu0 %v599
  %1090 = vmatpush.msra.mxu0 %v595
  %1091 = vmatpush.msra.mxu0 %v591
  %1092 = vmatpush.msra.mxu0 %v587
  %1093 = vmatpush.msra.mxu0 %v583
  %1094 = vmatpush.msra.mxu0 %v579
  %1095 = vmatpush.msra.mxu0 %v575
  %1096 = vmatpush.msra.mxu0 %v571
  %1097 = vmatpush.msra.mxu0 %v567
  %1098 = vmatpush.msra.mxu0 %v563
  %1099 = vmatpush.msra.mxu0 %v559
  %1100 = vmatpush.msra.mxu0 %v555
  %1101 = vmatmul.f32.gmra.mxu0 %v806
  %v1102 = vpop.f32.mrf.mxu0
  %v1103 = vadd.f32 %v1083, %v1102
  %1104 = vdwg.mxu0
  %1105 = vmatpush.msra.mxu0 %v679
  %1106 = vmatpush.msra.mxu0 %v675
  %1107 = vmatpush.msra.mxu0 %v671
  %1108 = vmatpush.msra.mxu0 %v667
  %1109 = vmatpush.msra.mxu0 %v663
  %1110 = vmatpush.msra.mxu0 %v659
  %1111 = vmatpush.msra.mxu0 %v655
  %1112 = vmatpush.msra.mxu0 %v651
  %1113 = vmatpush.msra.mxu0 %v647
  %1114 = vmatpush.msra.mxu0 %v643
  %1115 = vmatpush.msra.mxu0 %v639
  %1116 = vmatpush.msra.mxu0 %v635
  %1117 = vmatpush.msra.mxu0 %v631
  %1118 = vmatpush.msra.mxu0 %v627
  %1119 = vmatpush.msra.mxu0 %v623
  %1120 = vmatpush.msra.mxu0 %v619
  %1121 = vmatmul.f32.gmra.mxu0 %v813
  %v1122 = vpop.f32.mrf.mxu0
  %v1123 = vadd.f32 %v1103, %v1122
  %1124 = vdwg.mxu0
  %1125 = vmatpush.msra.mxu0 %v743
  %1126 = vmatpush.msra.mxu0 %v739
  %1127 = vmatpush.msra.mxu0 %v735
  %1128 = vmatpush.msra.mxu0 %v731
  %1129 = vmatpush.msra.mxu0 %v727
  %1130 = vmatpush.msra.mxu0 %v723
  %1131 = vmatpush.msra.mxu0 %v719
  %1132 = vmatpush.msra.mxu0 %v715
  %1133 = vmatpush.msra.mxu0 %v711
  %1134 = vmatpush.msra.mxu0 %v707
  %1135 = vmatpush.msra.mxu0 %v703
  %1136 = vmatpush.msra.mxu0 %v699
  %1137 = vmatpush.msra.mxu0 %v695
  %1138 = vmatpush.msra.mxu0 %v691
  %1139 = vmatpush.msra.mxu0 %v687
  %1140 = vmatpush.msra.mxu0 %v683
  %1141 = vmatmul.f32.gmra.mxu0 %v820
  %v1142 = vpop.f32.mrf.mxu0
  %v1143 = vadd.f32 %v1123, %v1142
  %1144 = vdwg.mxu0
  %v1145 = vmax.f32 %v903, 0.0
  %v1146 = vmax.f32 %v983, 0.0
  %v1147 = vmax.f32 %v1063, 0.0
  %v1148 = vmax.f32 %v1143, 0.0
  %v1149 = vld [vmem:[%s5] sm:$0xf]
  %v1150 = vld [vmem:[%s5 + $0x4] sm:$0xf]
  %v1151 = vld [vmem:[%s5 + $0x8] sm:$0xf]
  %v1152 = vld [vmem:[%s5 + $0xc] sm:$0xf]
  %v1153 = vld [vmem:[%s5 + $0x10] sm:$0xf]
  %v1154 = vld [vmem:[%s5 + $0x14] sm:$0xf]
  %v1155 = vld [vmem:[%s5 + $0x18] sm:$0xf]
  %v1156 = vld [vmem:[%s5 + $0x1c] sm:$0xf]
  %v1157 = vld [vmem:[%s5 + $0x20] sm:$0xf]
  %v1158 = vld [vmem:[%s5 + $0x24] sm:$0xf]
  %v1159 = vld [vmem:[%s5 + $0x28] sm:$0xf]
  %v1160 = vld [vmem:[%s5 + $0x2c] sm:$0xf]
  %v1161 = vld [vmem:[%s5 + $0x30] sm:$0xf]
  %v1162 = vld [vmem:[%s5 + $0x34] sm:$0xf]
  %v1163 = vld [vmem:[%s5 + $0x38] sm:$0xf]
  %v1164 = vld [vmem:[%s5 + $0x3c] sm:$0xf]
  %v1165 = vld [vmem:[%s5 + $0x40] sm:$0xf]
  %v1166 = vld [vmem:[%s5 + $0x44] sm:$0xf]
  %v1167 = vld [vmem:[%s5 + $0x48] sm:$0xf]
  %v1168 = vld [vmem:[%s5 + $0x4c] sm:$0xf]
  %v1169 = vld [vmem:[%s5 + $0x50] sm:$0xf]
  %v1170 = vld [vmem:[%s5 + $0x54] sm:$0xf]
  %v1171 = vld [vmem:[%s5 + $0x58] sm:$0xf]
  %v1172 = vld [vmem:[%s5 + $0x5c] sm:$0xf]
  %v1173 = vld [vmem:[%s5 + $0x60] sm:$0xf]
  %v1174 = vld [vmem:[%s5 + $0x64] sm:$0xf]
  %v1175 = vld [vmem:[%s5 + $0x68] sm:$0xf]
  %v1176 = vld [vmem:[%s5 + $0x6c] sm:$0xf]
  %v1177 = vld [vmem:[%s5 + $0x70] sm:$0xf]
  %v1178 = vld [vmem:[%s5 + $0x74] sm:$0xf]
  %v1179 = vld [vmem:[%s5 + $0x78] sm:$0xf]
  %v1180 = vld [vmem:[%s5 + $0x7c] sm:$0xf]
  %v1181 = vld [vmem:[%s5 + $0x80] sm:$0xf]
  %v1182 = vld [vmem:[%s5 + $0x84] sm:$0xf]
  %v1183 = vld [vmem:[%s5 + $0x88] sm:$0xf]
  %v1184 = vld [vmem:[%s5 + $0x8c] sm:$0xf]
  %v1185 = vld [vmem:[%s5 + $0x90] sm:$0xf]
  %v1186 = vld [vmem:[%s5 + $0x94] sm:$0xf]
  %v1187 = vld [vmem:[%s5 + $0x98] sm:$0xf]
  %v1188 = vld [vmem:[%s5 + $0x9c] sm:$0xf]
  %v1189 = vld [vmem:[%s5 + $0xa0] sm:$0xf]
  %v1190 = vld [vmem:[%s5 + $0xa4] sm:$0xf]
  %v1191 = vld [vmem:[%s5 + $0xa8] sm:$0xf]
  %v1192 = vld [vmem:[%s5 + $0xac] sm:$0xf]
  %v1193 = vld [vmem:[%s5 + $0xb0] sm:$0xf]
  %v1194 = vld [vmem:[%s5 + $0xb4] sm:$0xf]
  %v1195 = vld [vmem:[%s5 + $0xb8] sm:$0xf]
  %v1196 = vld [vmem:[%s5 + $0xbc] sm:$0xf]
  %v1197 = vld [vmem:[%s5 + $0xc0] sm:$0xf]
  %v1198 = vld [vmem:[%s5 + $0xc4] sm:$0xf]
  %v1199 = vld [vmem:[%s5 + $0xc8] sm:$0xf]
  %v1200 = vld [vmem:[%s5 + $0xcc] sm:$0xf]
  %v1201 = vld [vmem:[%s5 + $0xd0] sm:$0xf]
  %v1202 = vld [vmem:[%s5 + $0xd4] sm:$0xf]
  %v1203 = vld [vmem:[%s5 + $0xd8] sm:$0xf]
  %v1204 = vld [vmem:[%s5 + $0xdc] sm:$0xf]
  %v1205 = vld [vmem:[%s5 + $0xe0] sm:$0xf]
  %v1206 = vld [vmem:[%s5 + $0xe4] sm:$0xf]
  %v1207 = vld [vmem:[%s5 + $0xe8] sm:$0xf]
  %v1208 = vld [vmem:[%s5 + $0xec] sm:$0xf]
  %v1209 = vld [vmem:[%s5 + $0xf0] sm:$0xf]
  %v1210 = vld [vmem:[%s5 + $0xf4] sm:$0xf]
  %v1211 = vld [vmem:[%s5 + $0xf8] sm:$0xf]
  %v1212 = vld [vmem:[%s5 + $0xfc] sm:$0xf]
  %v1213 = vunpack.c.l.bf16 %v1149
  %v1214 = vunpack.c.l.bf16 %v1150
  %v1215 = vunpack.c.l.bf16 %v1151
  %v1216 = vunpack.c.l.bf16 %v1152
  %v1217 = vunpack.c.l.bf16 %v1153
  %v1218 = vunpack.c.l.bf16 %v1154
  %v1219 = vunpack.c.l.bf16 %v1155
  %v1220 = vunpack.c.l.bf16 %v1156
  %v1221 = vunpack.c.l.bf16 %v1157
  %v1222 = vunpack.c.l.bf16 %v1158
  %v1223 = vunpack.c.l.bf16 %v1159
  %v1224 = vunpack.c.l.bf16 %v1160
  %v1225 = vunpack.c.l.bf16 %v1161
  %v1226 = vunpack.c.l.bf16 %v1162
  %v1227 = vunpack.c.l.bf16 %v1163
  %v1228 = vunpack.c.l.bf16 %v1164
  %v1229 = vunpack.c.l.bf16 %v1165
  %v1230 = vunpack.c.l.bf16 %v1166
  %v1231 = vunpack.c.l.bf16 %v1167
  %v1232 = vunpack.c.l.bf16 %v1168
  %v1233 = vunpack.c.l.bf16 %v1169
  %v1234 = vunpack.c.l.bf16 %v1170
  %v1235 = vunpack.c.l.bf16 %v1171
  %v1236 = vunpack.c.l.bf16 %v1172
  %v1237 = vunpack.c.l.bf16 %v1173
  %v1238 = vunpack.c.l.bf16 %v1174
  %v1239 = vunpack.c.l.bf16 %v1175
  %v1240 = vunpack.c.l.bf16 %v1176
  %v1241 = vunpack.c.l.bf16 %v1177
  %v1242 = vunpack.c.l.bf16 %v1178
  %v1243 = vunpack.c.l.bf16 %v1179
  %v1244 = vunpack.c.l.bf16 %v1180
  %v1245 = vunpack.c.l.bf16 %v1181
  %v1246 = vunpack.c.l.bf16 %v1182
  %v1247 = vunpack.c.l.bf16 %v1183
  %v1248 = vunpack.c.l.bf16 %v1184
  %v1249 = vunpack.c.l.bf16 %v1185
  %v1250 = vunpack.c.l.bf16 %v1186
  %v1251 = vunpack.c.l.bf16 %v1187
  %v1252 = vunpack.c.l.bf16 %v1188
  %v1253 = vunpack.c.l.bf16 %v1189
  %v1254 = vunpack.c.l.bf16 %v1190
  %v1255 = vunpack.c.l.bf16 %v1191
  %v1256 = vunpack.c.l.bf16 %v1192
  %v1257 = vunpack.c.l.bf16 %v1193
  %v1258 = vunpack.c.l.bf16 %v1194
  %v1259 = vunpack.c.l.bf16 %v1195
  %v1260 = vunpack.c.l.bf16 %v1196
  %v1261 = vunpack.c.l.bf16 %v1197
  %v1262 = vunpack.c.l.bf16 %v1198
  %v1263 = vunpack.c.l.bf16 %v1199
  %v1264 = vunpack.c.l.bf16 %v1200
  %v1265 = vunpack.c.l.bf16 %v1201
  %v1266 = vunpack.c.l.bf16 %v1202
  %v1267 = vunpack.c.l.bf16 %v1203
  %v1268 = vunpack.c.l.bf16 %v1204
  %v1269 = vunpack.c.l.bf16 %v1205
  %v1270 = vunpack.c.l.bf16 %v1206
  %v1271 = vunpack.c.l.bf16 %v1207
  %v1272 = vunpack.c.l.bf16 %v1208
  %v1273 = vunpack.c.l.bf16 %v1209
  %v1274 = vunpack.c.l.bf16 %v1210
  %v1275 = vunpack.c.l.bf16 %v1211
  %v1276 = vunpack.c.l.bf16 %v1212
  %v1277 = vld [vmem:[%s6] sm:$0x1]
  %v1279 = vperm.slane %v1277, 0
  %1281 = vmatpush.msra.mxu0 %v1228
  %1282 = vmatpush.msra.mxu0 %v1227
  %1283 = vmatpush.msra.mxu0 %v1226
  %1284 = vmatpush.msra.mxu0 %v1225
  %1285 = vmatpush.msra.mxu0 %v1224
  %1286 = vmatpush.msra.mxu0 %v1223
  %1287 = vmatpush.msra.mxu0 %v1222
  %1288 = vmatpush.msra.mxu0 %v1221
  %1289 = vmatpush.msra.mxu0 %v1220
  %1290 = vmatpush.msra.mxu0 %v1219
  %1291 = vmatpush.msra.mxu0 %v1218
  %1292 = vmatpush.msra.mxu0 %v1217
  %1293 = vmatpush.msra.mxu0 %v1216
  %1294 = vmatpush.msra.mxu0 %v1215
  %1295 = vmatpush.msra.mxu0 %v1214
  %1296 = vmatpush.msra.mxu0 %v1213
  %1297 = vmatmul.f32.gmra.mxu0 %v1145
  %v1298 = vpop.f32.mrf.mxu0
  %v1299 = vadd.f32 %v1279, %v1298
  %1300 = vdwg.mxu0
  %1301 = vmatpush.msra.mxu0 %v1244
  %1302 = vmatpush.msra.mxu0 %v1243
  %1303 = vmatpush.msra.mxu0 %v1242
  %1304 = vmatpush.msra.mxu0 %v1241
  %1305 = vmatpush.msra.mxu0 %v1240
  %1306 = vmatpush.msra.mxu0 %v1239
  %1307 = vmatpush.msra.mxu0 %v1238
  %1308 = vmatpush.msra.mxu0 %v1237
  %1309 = vmatpush.msra.mxu0 %v1236
  %1310 = vmatpush.msra.mxu0 %v1235
  %1311 = vmatpush.msra.mxu0 %v1234
  %1312 = vmatpush.msra.mxu0 %v1233
  %1313 = vmatpush.msra.mxu0 %v1232
  %1314 = vmatpush.msra.mxu0 %v1231
  %1315 = vmatpush.msra.mxu0 %v1230
  %1316 = vmatpush.msra.mxu0 %v1229
  %1317 = vmatmul.f32.gmra.mxu0 %v1146
  %v1318 = vpop.f32.mrf.mxu0
  %v1319 = vadd.f32 %v1299, %v1318
  %1320 = vdwg.mxu0
  %1321 = vmatpush.msra.mxu0 %v1260
  %1322 = vmatpush.msra.mxu0 %v1259
  %1323 = vmatpush.msra.mxu0 %v1258
  %1324 = vmatpush.msra.mxu0 %v1257
  %1325 = vmatpush.msra.mxu0 %v1256
  %1326 = vmatpush.msra.mxu0 %v1255
  %1327 = vmatpush.msra.mxu0 %v1254
  %1328 = vmatpush.msra.mxu0 %v1253
  %1329 = vmatpush.msra.mxu0 %v1252
  %1330 = vmatpush.msra.mxu0 %v1251
  %1331 = vmatpush.msra.mxu0 %v1250
  %1332 = vmatpush.msra.mxu0 %v1249
  %1333 = vmatpush.msra.mxu0 %v1248
  %1334 = vmatpush.msra.mxu0 %v1247
  %1335 = vmatpush.msra.mxu0 %v1246
  %1336 = vmatpush.msra.mxu0 %v1245
  %1337 = vmatmul.f32.gmra.mxu0 %v1147
  %v1338 = vpop.f32.mrf.mxu0
  %v1339 = vadd.f32 %v1319, %v1338
  %1340 = vdwg.mxu0
  %1341 = vmatpush.msra.mxu0 %v1276
  %1342 = vmatpush.msra.mxu0 %v1275
  %1343 = vmatpush.msra.mxu0 %v1274
  %1344 = vmatpush.msra.mxu0 %v1273
  %1345 = vmatpush.msra.mxu0 %v1272
  %1346 = vmatpush.msra.mxu0 %v1271
  %1347 = vmatpush.msra.mxu0 %v1270
  %1348 = vmatpush.msra.mxu0 %v1269
  %1349 = vmatpush.msra.mxu0 %v1268
  %1350 = vmatpush.msra.mxu0 %v1267
  %1351 = vmatpush.msra.mxu0 %v1266
  %1352 = vmatpush.msra.mxu0 %v1265
  %1353 = vmatpush.msra.mxu0 %v1264
  %1354 = vmatpush.msra.mxu0 %v1263
  %1355 = vmatpush.msra.mxu0 %v1262
  %1356 = vmatpush.msra.mxu0 %v1261
  %1357 = vmatmul.f32.gmra.mxu0 %v1148
  %v1358 = vpop.f32.mrf.mxu0
  %v1359 = vadd.f32 %v1339, %v1358
  %1360 = vdwg.mxu0
  %1361 = vst [vmem:[%s11] sm:$0xff] %v1359
  %v1362 = vld [vmem:[%s2] sm:$0xff]
  %v1363 = vrot.slane %v1362, 1
  %v1364 = vrot.slane %v1362, 2
  %v1365 = vrot.slane %v1362, 3
  %v1366 = vrot.slane %v1362, 4
  %v1367 = vrot.slane %v1362, 5
  %v1368 = vrot.slane %v1362, 6
  %v1369 = vrot.slane %v1362, 7
  %v1370 = vld [vmem:[%s1] sm:$0xff]
  %v1371 = vld [vmem:[%s1 + $0x8] sm:$0xff]
  %v1372 = vld [vmem:[%s1 + $0x10] sm:$0xff]
  %v1373 = vld [vmem:[%s1 + $0x18] sm:$0xff]
  %v1374 = vld [vmem:[%s1 + $0x20] sm:$0xff]
  %v1375 = vld [vmem:[%s1 + $0x28] sm:$0xff]
  %v1376 = vld [vmem:[%s1 + $0x30] sm:$0xff]
  %v1377 = vld [vmem:[%s1 + $0x38] sm:$0xff]
  %v1378 = vld [vmem:[%s1 + $0x40] sm:$0xff]
  %v1379 = vld [vmem:[%s1 + $0x48] sm:$0xff]
  %v1380 = vld [vmem:[%s1 + $0x50] sm:$0xff]
  %v1381 = vld [vmem:[%s1 + $0x58] sm:$0xff]
  %v1382 = vld [vmem:[%s1 + $0x60] sm:$0xff]
  %v1383 = vld [vmem:[%s1 + $0x68] sm:$0xff]
  %v1384 = vld [vmem:[%s1 + $0x70] sm:$0xff]
  %v1385 = vld [vmem:[%s1 + $0x78] sm:$0xff]
  %v1386 = vld [vmem:[%s1 + $0x80] sm:$0xff]
  %v1387 = vld [vmem:[%s1 + $0x88] sm:$0xff]
  %v1388 = vld [vmem:[%s1 + $0x90] sm:$0xff]
  %v1389 = vld [vmem:[%s1 + $0x98] sm:$0xff]
  %v1390 = vld [vmem:[%s1 + $0xa0] sm:$0xff]
  %v1391 = vld [vmem:[%s1 + $0xa8] sm:$0xff]
  %v1392 = vld [vmem:[%s1 + $0xb0] sm:$0xff]
  %v1393 = vld [vmem:[%s1 + $0xb8] sm:$0xff]
  %v1394 = vld [vmem:[%s1 + $0xc0] sm:$0xff]
  %v1395 = vld [vmem:[%s1 + $0xc8] sm:$0xff]
  %v1396 = vld [vmem:[%s1 + $0xd0] sm:$0xff]
  %v1397 = vld [vmem:[%s1 + $0xd8] sm:$0xff]
  %v1398 = vld [vmem:[%s1 + $0xe0] sm:$0xff]
  %v1399 = vld [vmem:[%s1 + $0xe8] sm:$0xff]
  %v1400 = vld [vmem:[%s1 + $0xf0] sm:$0xff]
  %v1401 = vld [vmem:[%s1 + $0xf8] sm:$0xff]
  %v1402 = vld [vmem:[%s1 + $0x100] sm:$0xff]
  %v1403 = vld [vmem:[%s1 + $0x108] sm:$0xff]
  %v1404 = vld [vmem:[%s1 + $0x110] sm:$0xff]
  %v1405 = vld [vmem:[%s1 + $0x118] sm:$0xff]
  %v1406 = vld [vmem:[%s1 + $0x120] sm:$0xff]
  %v1407 = vld [vmem:[%s1 + $0x128] sm:$0xff]
  %v1408 = vld [vmem:[%s1 + $0x130] sm:$0xff]
  %v1409 = vld [vmem:[%s1 + $0x138] sm:$0xff]
  %v1410 = vld [vmem:[%s1 + $0x140] sm:$0xff]
  %v1411 = vld [vmem:[%s1 + $0x148] sm:$0xff]
  %v1412 = vld [vmem:[%s1 + $0x150] sm:$0xff]
  %v1413 = vld [vmem:[%s1 + $0x158] sm:$0xff]
  %v1414 = vld [vmem:[%s1 + $0x160] sm:$0xff]
  %v1415 = vld [vmem:[%s1 + $0x168] sm:$0xff]
  %v1416 = vld [vmem:[%s1 + $0x170] sm:$0xff]
  %v1417 = vld [vmem:[%s1 + $0x178] sm:$0xff]
  %v1418 = vlaneseq
  %v1419 = vshrl.u32 %v1418, 7
  %v1420 = vperm.slane %v1362, 0
  %v1421 = vperm.slane %v1363, 0
  %v1422 = vperm.slane %v1364, 0
  %v1423 = vperm.slane %v1365, 0
  %v1424 = vperm.slane %v1366, 0
  %v1425 = vperm.slane %v1367, 0
  %v1426 = vperm.slane %v1368, 0
  %v1427 = vperm.slane %v1369, 0
  %vm1428 = vcmp.lt.s32.totalorder %v1419, %v1420
  %vm1429 = vcmp.lt.s32.totalorder %v1419, %v1421
  %vm1430 = vcmp.lt.s32.totalorder %v1419, %v1422
  %vm1431 = vcmp.lt.s32.totalorder %v1419, %v1423
  %vm1432 = vcmp.lt.s32.totalorder %v1419, %v1424
  %vm1433 = vcmp.lt.s32.totalorder %v1419, %v1425
  %vm1434 = vcmp.lt.s32.totalorder %v1419, %v1426
  %vm1435 = vcmp.lt.s32.totalorder %v1419, %v1427
  %v1436 = vsel %vm1428, 1, 0
  %v1437 = vsel %vm1429, 1, 0
  %v1438 = vsel %vm1430, 1, 0
  %v1439 = vsel %vm1431, 1, 0
  %v1440 = vsel %vm1432, 1, 0
  %v1441 = vsel %vm1433, 1, 0
  %v1442 = vsel %vm1434, 1, 0
  %v1443 = vsel %vm1435, 1, 0
  %v1444 = vcvt.s32.f32 %v1436
  %v1445 = vcvt.s32.f32 %v1437
  %v1446 = vcvt.s32.f32 %v1438
  %v1447 = vcvt.s32.f32 %v1439
  %v1448 = vcvt.s32.f32 %v1440
  %v1449 = vcvt.s32.f32 %v1441
  %v1450 = vcvt.s32.f32 %v1442
  %v1451 = vcvt.s32.f32 %v1443
  %1453 = vset.pattern.permute.xlu0 0
  %1454 = vperm.xlu0 %1453, %v1444
  %v1455 = vpop.permute.xlu0 %1454
  %1458 = vset.pattern.permute.xlu0 0
  %1459 = vperm.xlu0 %1458, %v1445
  %v1460 = vpop.permute.xlu0 %1459
  %1463 = vset.pattern.permute.xlu0 0
  %1464 = vperm.xlu0 %1463, %v1446
  %v1465 = vpop.permute.xlu0 %1464
  %1468 = vset.pattern.permute.xlu0 0
  %1469 = vperm.xlu0 %1468, %v1447
  %v1470 = vpop.permute.xlu0 %1469
  %1473 = vset.pattern.permute.xlu0 0
  %1474 = vperm.xlu0 %1473, %v1448
  %v1475 = vpop.permute.xlu0 %1474
  %1478 = vset.pattern.permute.xlu0 0
  %1479 = vperm.xlu0 %1478, %v1449
  %v1480 = vpop.permute.xlu0 %1479
  %1483 = vset.pattern.permute.xlu0 0
  %1484 = vperm.xlu0 %1483, %v1450
  %v1485 = vpop.permute.xlu0 %1484
  %1488 = vset.pattern.permute.xlu0 0
  %1489 = vperm.xlu0 %1488, %v1451
  %v1490 = vpop.permute.xlu0 %1489
  %v1492 = vmul.f32 %v1370, %v1455
  %v1493 = vmul.f32 %v1371, %v1455
  %v1494 = vmul.f32 %v1372, %v1455
  %v1495 = vmul.f32 %v1373, %v1455
  %v1496 = vmul.f32 %v1374, %v1455
  %v1497 = vmul.f32 %v1375, %v1455
  %v1498 = vmul.f32 %v1376, %v1460
  %v1499 = vmul.f32 %v1377, %v1460
  %v1500 = vmul.f32 %v1378, %v1460
  %v1501 = vmul.f32 %v1379, %v1460
  %v1502 = vmul.f32 %v1380, %v1460
  %v1503 = vmul.f32 %v1381, %v1460
  %v1504 = vmul.f32 %v1382, %v1465
  %v1505 = vmul.f32 %v1383, %v1465
  %v1506 = vmul.f32 %v1384, %v1465
  %v1507 = vmul.f32 %v1385, %v1465
  %v1508 = vmul.f32 %v1386, %v1465
  %v1509 = vmul.f32 %v1387, %v1465
  %v1510 = vmul.f32 %v1388, %v1470
  %v1511 = vmul.f32 %v1389, %v1470
  %v1512 = vmul.f32 %v1390, %v1470
  %v1513 = vmul.f32 %v1391, %v1470
  %v1514 = vmul.f32 %v1392, %v1470
  %v1515 = vmul.f32 %v1393, %v1470
  %v1516 = vmul.f32 %v1394, %v1475
  %v1517 = vmul.f32 %v1395, %v1475
  %v1518 = vmul.f32 %v1396, %v1475
  %v1519 = vmul.f32 %v1397, %v1475
  %v1520 = vmul.f32 %v1398, %v1475
  %v1521 = vmul.f32 %v1399, %v1475
  %v1522 = vmul.f32 %v1400, %v1480
  %v1523 = vmul.f32 %v1401, %v1480
  %v1524 = vmul.f32 %v1402, %v1480
  %v1525 = vmul.f32 %v1403, %v1480
  %v1526 = vmul.f32 %v1404, %v1480
  %v1527 = vmul.f32 %v1405, %v1480
  %v1528 = vmul.f32 %v1406, %v1485
  %v1529 = vmul.f32 %v1407, %v1485
  %v1530 = vmul.f32 %v1408, %v1485
  %v1531 = vmul.f32 %v1409, %v1485
  %v1532 = vmul.f32 %v1410, %v1485
  %v1533 = vmul.f32 %v1411, %v1485
  %v1534 = vmul.f32 %v1412, %v1490
  %v1535 = vmul.f32 %v1413, %v1490
  %v1536 = vmul.f32 %v1414, %v1490
  %v1537 = vmul.f32 %v1415, %v1490
  %v1538 = vmul.f32 %v1416, %v1490
  %v1539 = vmul.f32 %v1417, %v1490
  %v1540 = vrot.slane %v1492, 4
  %v1541 = vadd.f32 %v1492, %v1540
  %v1542 = vrot.slane %v1541, 2
  %v1543 = vadd.f32 %v1541, %v1542
  %v1544 = vrot.slane %v1543, 1
  %v1545 = vadd.f32 %v1543, %v1544
  %v1546 = vrot.slane %v1493, 4
  %v1547 = vadd.f32 %v1493, %v1546
  %v1548 = vrot.slane %v1547, 2
  %v1549 = vadd.f32 %v1547, %v1548
  %v1550 = vrot.slane %v1549, 1
  %v1551 = vadd.f32 %v1549, %v1550
  %v1552 = vrot.slane %v1494, 4
  %v1553 = vadd.f32 %v1494, %v1552
  %v1554 = vrot.slane %v1553, 2
  %v1555 = vadd.f32 %v1553, %v1554
  %v1556 = vrot.slane %v1555, 1
  %v1557 = vadd.f32 %v1555, %v1556
  %v1558 = vrot.slane %v1495, 4
  %v1559 = vadd.f32 %v1495, %v1558
  %v1560 = vrot.slane %v1559, 2
  %v1561 = vadd.f32 %v1559, %v1560
  %v1562 = vrot.slane %v1561, 1
  %v1563 = vadd.f32 %v1561, %v1562
  %v1564 = vrot.slane %v1496, 4
  %v1565 = vadd.f32 %v1496, %v1564
  %v1566 = vrot.slane %v1565, 2
  %v1567 = vadd.f32 %v1565, %v1566
  %v1568 = vrot.slane %v1567, 1
  %v1569 = vadd.f32 %v1567, %v1568
  %v1570 = vrot.slane %v1497, 4
  %v1571 = vadd.f32 %v1497, %v1570
  %v1572 = vrot.slane %v1571, 2
  %v1573 = vadd.f32 %v1571, %v1572
  %v1574 = vrot.slane %v1573, 1
  %v1575 = vadd.f32 %v1573, %v1574
  %v1576 = vrot.slane %v1498, 4
  %v1577 = vadd.f32 %v1498, %v1576
  %v1578 = vrot.slane %v1577, 2
  %v1579 = vadd.f32 %v1577, %v1578
  %v1580 = vrot.slane %v1579, 1
  %v1581 = vadd.f32 %v1579, %v1580
  %v1582 = vrot.slane %v1499, 4
  %v1583 = vadd.f32 %v1499, %v1582
  %v1584 = vrot.slane %v1583, 2
  %v1585 = vadd.f32 %v1583, %v1584
  %v1586 = vrot.slane %v1585, 1
  %v1587 = vadd.f32 %v1585, %v1586
  %v1588 = vrot.slane %v1500, 4
  %v1589 = vadd.f32 %v1500, %v1588
  %v1590 = vrot.slane %v1589, 2
  %v1591 = vadd.f32 %v1589, %v1590
  %v1592 = vrot.slane %v1591, 1
  %v1593 = vadd.f32 %v1591, %v1592
  %v1594 = vrot.slane %v1501, 4
  %v1595 = vadd.f32 %v1501, %v1594
  %v1596 = vrot.slane %v1595, 2
  %v1597 = vadd.f32 %v1595, %v1596
  %v1598 = vrot.slane %v1597, 1
  %v1599 = vadd.f32 %v1597, %v1598
  %v1600 = vrot.slane %v1502, 4
  %v1601 = vadd.f32 %v1502, %v1600
  %v1602 = vrot.slane %v1601, 2
  %v1603 = vadd.f32 %v1601, %v1602
  %v1604 = vrot.slane %v1603, 1
  %v1605 = vadd.f32 %v1603, %v1604
  %v1606 = vrot.slane %v1503, 4
  %v1607 = vadd.f32 %v1503, %v1606
  %v1608 = vrot.slane %v1607, 2
  %v1609 = vadd.f32 %v1607, %v1608
  %v1610 = vrot.slane %v1609, 1
  %v1611 = vadd.f32 %v1609, %v1610
  %v1612 = vrot.slane %v1504, 4
  %v1613 = vadd.f32 %v1504, %v1612
  %v1614 = vrot.slane %v1613, 2
  %v1615 = vadd.f32 %v1613, %v1614
  %v1616 = vrot.slane %v1615, 1
  %v1617 = vadd.f32 %v1615, %v1616
  %v1618 = vrot.slane %v1505, 4
  %v1619 = vadd.f32 %v1505, %v1618
  %v1620 = vrot.slane %v1619, 2
  %v1621 = vadd.f32 %v1619, %v1620
  %v1622 = vrot.slane %v1621, 1
  %v1623 = vadd.f32 %v1621, %v1622
  %v1624 = vrot.slane %v1506, 4
  %v1625 = vadd.f32 %v1506, %v1624
  %v1626 = vrot.slane %v1625, 2
  %v1627 = vadd.f32 %v1625, %v1626
  %v1628 = vrot.slane %v1627, 1
  %v1629 = vadd.f32 %v1627, %v1628
  %v1630 = vrot.slane %v1507, 4
  %v1631 = vadd.f32 %v1507, %v1630
  %v1632 = vrot.slane %v1631, 2
  %v1633 = vadd.f32 %v1631, %v1632
  %v1634 = vrot.slane %v1633, 1
  %v1635 = vadd.f32 %v1633, %v1634
  %v1636 = vrot.slane %v1508, 4
  %v1637 = vadd.f32 %v1508, %v1636
  %v1638 = vrot.slane %v1637, 2
  %v1639 = vadd.f32 %v1637, %v1638
  %v1640 = vrot.slane %v1639, 1
  %v1641 = vadd.f32 %v1639, %v1640
  %v1642 = vrot.slane %v1509, 4
  %v1643 = vadd.f32 %v1509, %v1642
  %v1644 = vrot.slane %v1643, 2
  %v1645 = vadd.f32 %v1643, %v1644
  %v1646 = vrot.slane %v1645, 1
  %v1647 = vadd.f32 %v1645, %v1646
  %v1648 = vrot.slane %v1510, 4
  %v1649 = vadd.f32 %v1510, %v1648
  %v1650 = vrot.slane %v1649, 2
  %v1651 = vadd.f32 %v1649, %v1650
  %v1652 = vrot.slane %v1651, 1
  %v1653 = vadd.f32 %v1651, %v1652
  %v1654 = vrot.slane %v1511, 4
  %v1655 = vadd.f32 %v1511, %v1654
  %v1656 = vrot.slane %v1655, 2
  %v1657 = vadd.f32 %v1655, %v1656
  %v1658 = vrot.slane %v1657, 1
  %v1659 = vadd.f32 %v1657, %v1658
  %v1660 = vrot.slane %v1512, 4
  %v1661 = vadd.f32 %v1512, %v1660
  %v1662 = vrot.slane %v1661, 2
  %v1663 = vadd.f32 %v1661, %v1662
  %v1664 = vrot.slane %v1663, 1
  %v1665 = vadd.f32 %v1663, %v1664
  %v1666 = vrot.slane %v1513, 4
  %v1667 = vadd.f32 %v1513, %v1666
  %v1668 = vrot.slane %v1667, 2
  %v1669 = vadd.f32 %v1667, %v1668
  %v1670 = vrot.slane %v1669, 1
  %v1671 = vadd.f32 %v1669, %v1670
  %v1672 = vrot.slane %v1514, 4
  %v1673 = vadd.f32 %v1514, %v1672
  %v1674 = vrot.slane %v1673, 2
  %v1675 = vadd.f32 %v1673, %v1674
  %v1676 = vrot.slane %v1675, 1
  %v1677 = vadd.f32 %v1675, %v1676
  %v1678 = vrot.slane %v1515, 4
  %v1679 = vadd.f32 %v1515, %v1678
  %v1680 = vrot.slane %v1679, 2
  %v1681 = vadd.f32 %v1679, %v1680
  %v1682 = vrot.slane %v1681, 1
  %v1683 = vadd.f32 %v1681, %v1682
  %v1684 = vrot.slane %v1516, 4
  %v1685 = vadd.f32 %v1516, %v1684
  %v1686 = vrot.slane %v1685, 2
  %v1687 = vadd.f32 %v1685, %v1686
  %v1688 = vrot.slane %v1687, 1
  %v1689 = vadd.f32 %v1687, %v1688
  %v1690 = vrot.slane %v1517, 4
  %v1691 = vadd.f32 %v1517, %v1690
  %v1692 = vrot.slane %v1691, 2
  %v1693 = vadd.f32 %v1691, %v1692
  %v1694 = vrot.slane %v1693, 1
  %v1695 = vadd.f32 %v1693, %v1694
  %v1696 = vrot.slane %v1518, 4
  %v1697 = vadd.f32 %v1518, %v1696
  %v1698 = vrot.slane %v1697, 2
  %v1699 = vadd.f32 %v1697, %v1698
  %v1700 = vrot.slane %v1699, 1
  %v1701 = vadd.f32 %v1699, %v1700
  %v1702 = vrot.slane %v1519, 4
  %v1703 = vadd.f32 %v1519, %v1702
  %v1704 = vrot.slane %v1703, 2
  %v1705 = vadd.f32 %v1703, %v1704
  %v1706 = vrot.slane %v1705, 1
  %v1707 = vadd.f32 %v1705, %v1706
  %v1708 = vrot.slane %v1520, 4
  %v1709 = vadd.f32 %v1520, %v1708
  %v1710 = vrot.slane %v1709, 2
  %v1711 = vadd.f32 %v1709, %v1710
  %v1712 = vrot.slane %v1711, 1
  %v1713 = vadd.f32 %v1711, %v1712
  %v1714 = vrot.slane %v1521, 4
  %v1715 = vadd.f32 %v1521, %v1714
  %v1716 = vrot.slane %v1715, 2
  %v1717 = vadd.f32 %v1715, %v1716
  %v1718 = vrot.slane %v1717, 1
  %v1719 = vadd.f32 %v1717, %v1718
  %v1720 = vrot.slane %v1522, 4
  %v1721 = vadd.f32 %v1522, %v1720
  %v1722 = vrot.slane %v1721, 2
  %v1723 = vadd.f32 %v1721, %v1722
  %v1724 = vrot.slane %v1723, 1
  %v1725 = vadd.f32 %v1723, %v1724
  %v1726 = vrot.slane %v1523, 4
  %v1727 = vadd.f32 %v1523, %v1726
  %v1728 = vrot.slane %v1727, 2
  %v1729 = vadd.f32 %v1727, %v1728
  %v1730 = vrot.slane %v1729, 1
  %v1731 = vadd.f32 %v1729, %v1730
  %v1732 = vrot.slane %v1524, 4
  %v1733 = vadd.f32 %v1524, %v1732
  %v1734 = vrot.slane %v1733, 2
  %v1735 = vadd.f32 %v1733, %v1734
  %v1736 = vrot.slane %v1735, 1
  %v1737 = vadd.f32 %v1735, %v1736
  %v1738 = vrot.slane %v1525, 4
  %v1739 = vadd.f32 %v1525, %v1738
  %v1740 = vrot.slane %v1739, 2
  %v1741 = vadd.f32 %v1739, %v1740
  %v1742 = vrot.slane %v1741, 1
  %v1743 = vadd.f32 %v1741, %v1742
  %v1744 = vrot.slane %v1526, 4
  %v1745 = vadd.f32 %v1526, %v1744
  %v1746 = vrot.slane %v1745, 2
  %v1747 = vadd.f32 %v1745, %v1746
  %v1748 = vrot.slane %v1747, 1
  %v1749 = vadd.f32 %v1747, %v1748
  %v1750 = vrot.slane %v1527, 4
  %v1751 = vadd.f32 %v1527, %v1750
  %v1752 = vrot.slane %v1751, 2
  %v1753 = vadd.f32 %v1751, %v1752
  %v1754 = vrot.slane %v1753, 1
  %v1755 = vadd.f32 %v1753, %v1754
  %v1756 = vrot.slane %v1528, 4
  %v1757 = vadd.f32 %v1528, %v1756
  %v1758 = vrot.slane %v1757, 2
  %v1759 = vadd.f32 %v1757, %v1758
  %v1760 = vrot.slane %v1759, 1
  %v1761 = vadd.f32 %v1759, %v1760
  %v1762 = vrot.slane %v1529, 4
  %v1763 = vadd.f32 %v1529, %v1762
  %v1764 = vrot.slane %v1763, 2
  %v1765 = vadd.f32 %v1763, %v1764
  %v1766 = vrot.slane %v1765, 1
  %v1767 = vadd.f32 %v1765, %v1766
  %v1768 = vrot.slane %v1530, 4
  %v1769 = vadd.f32 %v1530, %v1768
  %v1770 = vrot.slane %v1769, 2
  %v1771 = vadd.f32 %v1769, %v1770
  %v1772 = vrot.slane %v1771, 1
  %v1773 = vadd.f32 %v1771, %v1772
  %v1774 = vrot.slane %v1531, 4
  %v1775 = vadd.f32 %v1531, %v1774
  %v1776 = vrot.slane %v1775, 2
  %v1777 = vadd.f32 %v1775, %v1776
  %v1778 = vrot.slane %v1777, 1
  %v1779 = vadd.f32 %v1777, %v1778
  %v1780 = vrot.slane %v1532, 4
  %v1781 = vadd.f32 %v1532, %v1780
  %v1782 = vrot.slane %v1781, 2
  %v1783 = vadd.f32 %v1781, %v1782
  %v1784 = vrot.slane %v1783, 1
  %v1785 = vadd.f32 %v1783, %v1784
  %v1786 = vrot.slane %v1533, 4
  %v1787 = vadd.f32 %v1533, %v1786
  %v1788 = vrot.slane %v1787, 2
  %v1789 = vadd.f32 %v1787, %v1788
  %v1790 = vrot.slane %v1789, 1
  %v1791 = vadd.f32 %v1789, %v1790
  %v1792 = vrot.slane %v1534, 4
  %v1793 = vadd.f32 %v1534, %v1792
  %v1794 = vrot.slane %v1793, 2
  %v1795 = vadd.f32 %v1793, %v1794
  %v1796 = vrot.slane %v1795, 1
  %v1797 = vadd.f32 %v1795, %v1796
  %v1798 = vrot.slane %v1535, 4
  %v1799 = vadd.f32 %v1535, %v1798
  %v1800 = vrot.slane %v1799, 2
  %v1801 = vadd.f32 %v1799, %v1800
  %v1802 = vrot.slane %v1801, 1
  %v1803 = vadd.f32 %v1801, %v1802
  %v1804 = vrot.slane %v1536, 4
  %v1805 = vadd.f32 %v1536, %v1804
  %v1806 = vrot.slane %v1805, 2
  %v1807 = vadd.f32 %v1805, %v1806
  %v1808 = vrot.slane %v1807, 1
  %v1809 = vadd.f32 %v1807, %v1808
  %v1810 = vrot.slane %v1537, 4
  %v1811 = vadd.f32 %v1537, %v1810
  %v1812 = vrot.slane %v1811, 2
  %v1813 = vadd.f32 %v1811, %v1812
  %v1814 = vrot.slane %v1813, 1
  %v1815 = vadd.f32 %v1813, %v1814
  %v1816 = vrot.slane %v1538, 4
  %v1817 = vadd.f32 %v1538, %v1816
  %v1818 = vrot.slane %v1817, 2
  %v1819 = vadd.f32 %v1817, %v1818
  %v1820 = vrot.slane %v1819, 1
  %v1821 = vadd.f32 %v1819, %v1820
  %v1822 = vrot.slane %v1539, 4
  %v1823 = vadd.f32 %v1539, %v1822
  %v1824 = vrot.slane %v1823, 2
  %v1825 = vadd.f32 %v1823, %v1824
  %v1826 = vrot.slane %v1825, 1
  %v1827 = vadd.f32 %v1825, %v1826
  %v1828 = vcvt.s32.f32 %v1362
  %v1829 = vmax.f32 %v1828, 1e-09
  %v1830 = vrcp.pop %v1829
  %v1831 = vmul.f32 %v1829, %v1830
  %v1832 = vsub.f32 1.0, %v1831
  %v1833 = vmul.f32 %v1830, %v1832
  %v1834 = vadd.f32 %v1830, %v1833
  %vm1835 = vweird.f32 %v1829
  %vm1836 = vweird.f32 %v1830
  %vm1837 = vmor %vm1835, %vm1836
  %v1838 = vsel %vm1837, %v1830, %v1834
  %v1839 = vand.u32 2147483647, %v1829
  %vm1840 = vcmp.eq.f32.partialorder %v1839, 8.507059e+37
  %v1841 = vand.u32 %v1829, 2147483648
  %v1842 = vor.u32 1.1754944e-38, %v1841
  %v1843 = vsel %vm1840, %v1842, %v1838
  %1845 = vset.pattern.permute.xlu0 0
  %1846 = vperm.xlu0 %1845, %v1843
  %v1847 = vpop.permute.xlu0 %1846
  %v1848 = vrot.slane %v1847, 1
  %v1849 = vrot.slane %v1847, 2
  %v1850 = vrot.slane %v1847, 3
  %v1851 = vrot.slane %v1847, 4
  %v1852 = vrot.slane %v1847, 5
  %v1853 = vrot.slane %v1847, 6
  %v1854 = vrot.slane %v1847, 7
  %v1863 = vmul.f32 %v1545, %v1847
  %v1864 = vmul.f32 %v1551, %v1847
  %v1865 = vmul.f32 %v1557, %v1847
  %v1866 = vmul.f32 %v1563, %v1847
  %v1867 = vmul.f32 %v1569, %v1847
  %v1868 = vmul.f32 %v1575, %v1847
  %v1869 = vmul.f32 %v1581, %v1848
  %v1870 = vmul.f32 %v1587, %v1848
  %v1871 = vmul.f32 %v1593, %v1848
  %v1872 = vmul.f32 %v1599, %v1848
  %v1873 = vmul.f32 %v1605, %v1848
  %v1874 = vmul.f32 %v1611, %v1848
  %v1875 = vmul.f32 %v1617, %v1849
  %v1876 = vmul.f32 %v1623, %v1849
  %v1877 = vmul.f32 %v1629, %v1849
  %v1878 = vmul.f32 %v1635, %v1849
  %v1879 = vmul.f32 %v1641, %v1849
  %v1880 = vmul.f32 %v1647, %v1849
  %v1881 = vmul.f32 %v1653, %v1850
  %v1882 = vmul.f32 %v1659, %v1850
  %v1883 = vmul.f32 %v1665, %v1850
  %v1884 = vmul.f32 %v1671, %v1850
  %v1885 = vmul.f32 %v1677, %v1850
  %v1886 = vmul.f32 %v1683, %v1850
  %v1887 = vmul.f32 %v1689, %v1851
  %v1888 = vmul.f32 %v1695, %v1851
  %v1889 = vmul.f32 %v1701, %v1851
  %v1890 = vmul.f32 %v1707, %v1851
  %v1891 = vmul.f32 %v1713, %v1851
  %v1892 = vmul.f32 %v1719, %v1851
  %v1893 = vmul.f32 %v1725, %v1852
  %v1894 = vmul.f32 %v1731, %v1852
  %v1895 = vmul.f32 %v1737, %v1852
  %v1896 = vmul.f32 %v1743, %v1852
  %v1897 = vmul.f32 %v1749, %v1852
  %v1898 = vmul.f32 %v1755, %v1852
  %v1899 = vmul.f32 %v1761, %v1853
  %v1900 = vmul.f32 %v1767, %v1853
  %v1901 = vmul.f32 %v1773, %v1853
  %v1902 = vmul.f32 %v1779, %v1853
  %v1903 = vmul.f32 %v1785, %v1853
  %v1904 = vmul.f32 %v1791, %v1853
  %v1905 = vmul.f32 %v1797, %v1854
  %v1906 = vmul.f32 %v1803, %v1854
  %v1907 = vmul.f32 %v1809, %v1854
  %v1908 = vmul.f32 %v1815, %v1854
  %v1909 = vmul.f32 %v1821, %v1854
  %v1910 = vmul.f32 %v1827, %v1854
  %v1911 = vld [vmem:[%s7] sm:$0xff]
  %v1912 = vld [vmem:[%s7 + $0x8] sm:$0xff]
  %v1913 = vld [vmem:[%s7 + $0x10] sm:$0xff]
  %v1914 = vld [vmem:[%s7 + $0x18] sm:$0xff]
  %v1915 = vld [vmem:[%s7 + $0x20] sm:$0xff]
  %v1916 = vld [vmem:[%s7 + $0x28] sm:$0xff]
  %v1917 = vld [vmem:[%s7 + $0x30] sm:$0xff]
  %v1918 = vld [vmem:[%s7 + $0x38] sm:$0xff]
  %v1919 = vld [vmem:[%s7 + $0x40] sm:$0xff]
  %v1920 = vld [vmem:[%s7 + $0x48] sm:$0xff]
  %v1921 = vld [vmem:[%s7 + $0x50] sm:$0xff]
  %v1922 = vld [vmem:[%s7 + $0x58] sm:$0xff]
  %v1923 = vld [vmem:[%s7 + $0x60] sm:$0xff]
  %v1924 = vld [vmem:[%s7 + $0x68] sm:$0xff]
  %v1925 = vld [vmem:[%s7 + $0x70] sm:$0xff]
  %v1926 = vld [vmem:[%s7 + $0x78] sm:$0xff]
  %v1927 = vld [vmem:[%s7 + $0x80] sm:$0xff]
  %v1928 = vld [vmem:[%s7 + $0x88] sm:$0xff]
  %v1929 = vld [vmem:[%s7 + $0x90] sm:$0xff]
  %v1930 = vld [vmem:[%s7 + $0x98] sm:$0xff]
  %v1931 = vld [vmem:[%s7 + $0xa0] sm:$0xff]
  %v1932 = vld [vmem:[%s7 + $0xa8] sm:$0xff]
  %v1933 = vld [vmem:[%s7 + $0xb0] sm:$0xff]
  %v1934 = vld [vmem:[%s7 + $0xb8] sm:$0xff]
  %v1935 = vld [vmem:[%s7 + $0xc0] sm:$0xff]
  %v1936 = vld [vmem:[%s7 + $0xc8] sm:$0xff]
  %v1937 = vld [vmem:[%s7 + $0xd0] sm:$0xff]
  %v1938 = vld [vmem:[%s7 + $0xd8] sm:$0xff]
  %v1939 = vld [vmem:[%s7 + $0xe0] sm:$0xff]
  %v1940 = vld [vmem:[%s7 + $0xe8] sm:$0xff]
  %v1941 = vld [vmem:[%s7 + $0xf0] sm:$0xff]
  %v1942 = vld [vmem:[%s7 + $0xf8] sm:$0xff]
  %v1943 = vld [vmem:[%s7 + $0x100] sm:$0xff]
  %v1944 = vld [vmem:[%s7 + $0x108] sm:$0xff]
  %v1945 = vld [vmem:[%s7 + $0x110] sm:$0xff]
  %v1946 = vld [vmem:[%s7 + $0x118] sm:$0xff]
  %v1947 = vld [vmem:[%s7 + $0x120] sm:$0xff]
  %v1948 = vld [vmem:[%s7 + $0x128] sm:$0xff]
  %v1949 = vld [vmem:[%s7 + $0x130] sm:$0xff]
  %v1950 = vld [vmem:[%s7 + $0x138] sm:$0xff]
  %v1951 = vld [vmem:[%s7 + $0x140] sm:$0xff]
  %v1952 = vld [vmem:[%s7 + $0x148] sm:$0xff]
  %v1953 = vld [vmem:[%s7 + $0x150] sm:$0xff]
  %v1954 = vld [vmem:[%s7 + $0x158] sm:$0xff]
  %v1955 = vld [vmem:[%s7 + $0x160] sm:$0xff]
  %v1956 = vld [vmem:[%s7 + $0x168] sm:$0xff]
  %v1957 = vld [vmem:[%s7 + $0x170] sm:$0xff]
  %v1958 = vld [vmem:[%s7 + $0x178] sm:$0xff]
  %v1959 = vld [vmem:[%s7 + $0x180] sm:$0xff]
  %v1960 = vld [vmem:[%s7 + $0x188] sm:$0xff]
  %v1961 = vld [vmem:[%s7 + $0x190] sm:$0xff]
  %v1962 = vld [vmem:[%s7 + $0x198] sm:$0xff]
  %v1963 = vld [vmem:[%s7 + $0x1a0] sm:$0xff]
  %v1964 = vld [vmem:[%s7 + $0x1a8] sm:$0xff]
  %v1965 = vld [vmem:[%s7 + $0x1b0] sm:$0xff]
  %v1966 = vld [vmem:[%s7 + $0x1b8] sm:$0xff]
  %v1967 = vld [vmem:[%s7 + $0x1c0] sm:$0xff]
  %v1968 = vld [vmem:[%s7 + $0x1c8] sm:$0xff]
  %v1969 = vld [vmem:[%s7 + $0x1d0] sm:$0xff]
  %v1970 = vld [vmem:[%s7 + $0x1d8] sm:$0xff]
  %v1971 = vld [vmem:[%s7 + $0x1e0] sm:$0xff]
  %v1972 = vld [vmem:[%s7 + $0x1e8] sm:$0xff]
  %v1973 = vld [vmem:[%s7 + $0x1f0] sm:$0xff]
  %v1974 = vld [vmem:[%s7 + $0x1f8] sm:$0xff]
  %v1975 = vld [vmem:[%s7 + $0x200] sm:$0xff]
  %v1976 = vld [vmem:[%s7 + $0x208] sm:$0xff]
  %v1977 = vld [vmem:[%s7 + $0x210] sm:$0xff]
  %v1978 = vld [vmem:[%s7 + $0x218] sm:$0xff]
  %v1979 = vld [vmem:[%s7 + $0x220] sm:$0xff]
  %v1980 = vld [vmem:[%s7 + $0x228] sm:$0xff]
  %v1981 = vld [vmem:[%s7 + $0x230] sm:$0xff]
  %v1982 = vld [vmem:[%s7 + $0x238] sm:$0xff]
  %v1983 = vld [vmem:[%s7 + $0x240] sm:$0xff]
  %v1984 = vld [vmem:[%s7 + $0x248] sm:$0xff]
  %v1985 = vld [vmem:[%s7 + $0x250] sm:$0xff]
  %v1986 = vld [vmem:[%s7 + $0x258] sm:$0xff]
  %v1987 = vld [vmem:[%s7 + $0x260] sm:$0xff]
  %v1988 = vld [vmem:[%s7 + $0x268] sm:$0xff]
  %v1989 = vld [vmem:[%s7 + $0x270] sm:$0xff]
  %v1990 = vld [vmem:[%s7 + $0x278] sm:$0xff]
  %v1991 = vld [vmem:[%s7 + $0x280] sm:$0xff]
  %v1992 = vld [vmem:[%s7 + $0x288] sm:$0xff]
  %v1993 = vld [vmem:[%s7 + $0x290] sm:$0xff]
  %v1994 = vld [vmem:[%s7 + $0x298] sm:$0xff]
  %v1995 = vld [vmem:[%s7 + $0x2a0] sm:$0xff]
  %v1996 = vld [vmem:[%s7 + $0x2a8] sm:$0xff]
  %v1997 = vld [vmem:[%s7 + $0x2b0] sm:$0xff]
  %v1998 = vld [vmem:[%s7 + $0x2b8] sm:$0xff]
  %v1999 = vld [vmem:[%s7 + $0x2c0] sm:$0xff]
  %v2000 = vld [vmem:[%s7 + $0x2c8] sm:$0xff]
  %v2001 = vld [vmem:[%s7 + $0x2d0] sm:$0xff]
  %v2002 = vld [vmem:[%s7 + $0x2d8] sm:$0xff]
  %v2003 = vld [vmem:[%s7 + $0x2e0] sm:$0xff]
  %v2004 = vld [vmem:[%s7 + $0x2e8] sm:$0xff]
  %v2005 = vld [vmem:[%s7 + $0x2f0] sm:$0xff]
  %v2006 = vld [vmem:[%s7 + $0x2f8] sm:$0xff]
  %v2007 = vld [vmem:[%s7 + $0x300] sm:$0xff]
  %v2008 = vld [vmem:[%s7 + $0x308] sm:$0xff]
  %v2009 = vld [vmem:[%s7 + $0x310] sm:$0xff]
  %v2010 = vld [vmem:[%s7 + $0x318] sm:$0xff]
  %v2011 = vld [vmem:[%s7 + $0x320] sm:$0xff]
  %v2012 = vld [vmem:[%s7 + $0x328] sm:$0xff]
  %v2013 = vld [vmem:[%s7 + $0x330] sm:$0xff]
  %v2014 = vld [vmem:[%s7 + $0x338] sm:$0xff]
  %v2015 = vld [vmem:[%s7 + $0x340] sm:$0xff]
  %v2016 = vld [vmem:[%s7 + $0x348] sm:$0xff]
  %v2017 = vld [vmem:[%s7 + $0x350] sm:$0xff]
  %v2018 = vld [vmem:[%s7 + $0x358] sm:$0xff]
  %v2019 = vld [vmem:[%s7 + $0x360] sm:$0xff]
  %v2020 = vld [vmem:[%s7 + $0x368] sm:$0xff]
  %v2021 = vld [vmem:[%s7 + $0x370] sm:$0xff]
  %v2022 = vld [vmem:[%s7 + $0x378] sm:$0xff]
  %v2023 = vld [vmem:[%s7 + $0x380] sm:$0xff]
  %v2024 = vld [vmem:[%s7 + $0x388] sm:$0xff]
  %v2025 = vld [vmem:[%s7 + $0x390] sm:$0xff]
  %v2026 = vld [vmem:[%s7 + $0x398] sm:$0xff]
  %v2027 = vld [vmem:[%s7 + $0x3a0] sm:$0xff]
  %v2028 = vld [vmem:[%s7 + $0x3a8] sm:$0xff]
  %v2029 = vld [vmem:[%s7 + $0x3b0] sm:$0xff]
  %v2030 = vld [vmem:[%s7 + $0x3b8] sm:$0xff]
  %v2031 = vld [vmem:[%s7 + $0x3c0] sm:$0xff]
  %v2032 = vld [vmem:[%s7 + $0x3c8] sm:$0xff]
  %v2033 = vld [vmem:[%s7 + $0x3d0] sm:$0xff]
  %v2034 = vld [vmem:[%s7 + $0x3d8] sm:$0xff]
  %v2035 = vld [vmem:[%s7 + $0x3e0] sm:$0xff]
  %v2036 = vld [vmem:[%s7 + $0x3e8] sm:$0xff]
  %v2037 = vld [vmem:[%s7 + $0x3f0] sm:$0xff]
  %v2038 = vld [vmem:[%s7 + $0x3f8] sm:$0xff]
  %v2039 = vld [vmem:[%s7 + $0x400] sm:$0xff]
  %v2040 = vld [vmem:[%s7 + $0x408] sm:$0xff]
  %v2041 = vld [vmem:[%s7 + $0x410] sm:$0xff]
  %v2042 = vld [vmem:[%s7 + $0x418] sm:$0xff]
  %v2043 = vld [vmem:[%s7 + $0x420] sm:$0xff]
  %v2044 = vld [vmem:[%s7 + $0x428] sm:$0xff]
  %v2045 = vld [vmem:[%s7 + $0x430] sm:$0xff]
  %v2046 = vld [vmem:[%s7 + $0x438] sm:$0xff]
  %v2047 = vld [vmem:[%s7 + $0x440] sm:$0xff]
  %v2048 = vld [vmem:[%s7 + $0x448] sm:$0xff]
  %v2049 = vld [vmem:[%s7 + $0x450] sm:$0xff]
  %v2050 = vld [vmem:[%s7 + $0x458] sm:$0xff]
  %v2051 = vld [vmem:[%s7 + $0x460] sm:$0xff]
  %v2052 = vld [vmem:[%s7 + $0x468] sm:$0xff]
  %v2053 = vld [vmem:[%s7 + $0x470] sm:$0xff]
  %v2054 = vld [vmem:[%s7 + $0x478] sm:$0xff]
  %v2055 = vld [vmem:[%s7 + $0x480] sm:$0xff]
  %v2056 = vld [vmem:[%s7 + $0x488] sm:$0xff]
  %v2057 = vld [vmem:[%s7 + $0x490] sm:$0xff]
  %v2058 = vld [vmem:[%s7 + $0x498] sm:$0xff]
  %v2059 = vld [vmem:[%s7 + $0x4a0] sm:$0xff]
  %v2060 = vld [vmem:[%s7 + $0x4a8] sm:$0xff]
  %v2061 = vld [vmem:[%s7 + $0x4b0] sm:$0xff]
  %v2062 = vld [vmem:[%s7 + $0x4b8] sm:$0xff]
  %v2063 = vld [vmem:[%s7 + $0x4c0] sm:$0xff]
  %v2064 = vld [vmem:[%s7 + $0x4c8] sm:$0xff]
  %v2065 = vld [vmem:[%s7 + $0x4d0] sm:$0xff]
  %v2066 = vld [vmem:[%s7 + $0x4d8] sm:$0xff]
  %v2067 = vld [vmem:[%s7 + $0x4e0] sm:$0xff]
  %v2068 = vld [vmem:[%s7 + $0x4e8] sm:$0xff]
  %v2069 = vld [vmem:[%s7 + $0x4f0] sm:$0xff]
  %v2070 = vld [vmem:[%s7 + $0x4f8] sm:$0xff]
  %v2071 = vld [vmem:[%s7 + $0x500] sm:$0xff]
  %v2072 = vld [vmem:[%s7 + $0x508] sm:$0xff]
  %v2073 = vld [vmem:[%s7 + $0x510] sm:$0xff]
  %v2074 = vld [vmem:[%s7 + $0x518] sm:$0xff]
  %v2075 = vld [vmem:[%s7 + $0x520] sm:$0xff]
  %v2076 = vld [vmem:[%s7 + $0x528] sm:$0xff]
  %v2077 = vld [vmem:[%s7 + $0x530] sm:$0xff]
  %v2078 = vld [vmem:[%s7 + $0x538] sm:$0xff]
  %v2079 = vld [vmem:[%s7 + $0x540] sm:$0xff]
  %v2080 = vld [vmem:[%s7 + $0x548] sm:$0xff]
  %v2081 = vld [vmem:[%s7 + $0x550] sm:$0xff]
  %v2082 = vld [vmem:[%s7 + $0x558] sm:$0xff]
  %v2083 = vld [vmem:[%s7 + $0x560] sm:$0xff]
  %v2084 = vld [vmem:[%s7 + $0x568] sm:$0xff]
  %v2085 = vld [vmem:[%s7 + $0x570] sm:$0xff]
  %v2086 = vld [vmem:[%s7 + $0x578] sm:$0xff]
  %v2087 = vld [vmem:[%s7 + $0x580] sm:$0xff]
  %v2088 = vld [vmem:[%s7 + $0x588] sm:$0xff]
  %v2089 = vld [vmem:[%s7 + $0x590] sm:$0xff]
  %v2090 = vld [vmem:[%s7 + $0x598] sm:$0xff]
  %v2091 = vld [vmem:[%s7 + $0x5a0] sm:$0xff]
  %v2092 = vld [vmem:[%s7 + $0x5a8] sm:$0xff]
  %v2093 = vld [vmem:[%s7 + $0x5b0] sm:$0xff]
  %v2094 = vld [vmem:[%s7 + $0x5b8] sm:$0xff]
  %v2095 = vld [vmem:[%s7 + $0x5c0] sm:$0xff]
  %v2096 = vld [vmem:[%s7 + $0x5c8] sm:$0xff]
  %v2097 = vld [vmem:[%s7 + $0x5d0] sm:$0xff]
  %v2098 = vld [vmem:[%s7 + $0x5d8] sm:$0xff]
  %v2099 = vld [vmem:[%s7 + $0x5e0] sm:$0xff]
  %v2100 = vld [vmem:[%s7 + $0x5e8] sm:$0xff]
  %v2101 = vld [vmem:[%s7 + $0x5f0] sm:$0xff]
  %v2102 = vld [vmem:[%s7 + $0x5f8] sm:$0xff]
  %v2103 = vld [vmem:[%s7 + $0x600] sm:$0xff]
  %v2104 = vld [vmem:[%s7 + $0x608] sm:$0xff]
  %v2105 = vld [vmem:[%s7 + $0x610] sm:$0xff]
  %v2106 = vld [vmem:[%s7 + $0x618] sm:$0xff]
  %v2107 = vld [vmem:[%s7 + $0x620] sm:$0xff]
  %v2108 = vld [vmem:[%s7 + $0x628] sm:$0xff]
  %v2109 = vld [vmem:[%s7 + $0x630] sm:$0xff]
  %v2110 = vld [vmem:[%s7 + $0x638] sm:$0xff]
  %v2111 = vld [vmem:[%s7 + $0x640] sm:$0xff]
  %v2112 = vld [vmem:[%s7 + $0x648] sm:$0xff]
  %v2113 = vld [vmem:[%s7 + $0x650] sm:$0xff]
  %v2114 = vld [vmem:[%s7 + $0x658] sm:$0xff]
  %v2115 = vld [vmem:[%s7 + $0x660] sm:$0xff]
  %v2116 = vld [vmem:[%s7 + $0x668] sm:$0xff]
  %v2117 = vld [vmem:[%s7 + $0x670] sm:$0xff]
  %v2118 = vld [vmem:[%s7 + $0x678] sm:$0xff]
  %v2119 = vld [vmem:[%s7 + $0x680] sm:$0xff]
  %v2120 = vld [vmem:[%s7 + $0x688] sm:$0xff]
  %v2121 = vld [vmem:[%s7 + $0x690] sm:$0xff]
  %v2122 = vld [vmem:[%s7 + $0x698] sm:$0xff]
  %v2123 = vld [vmem:[%s7 + $0x6a0] sm:$0xff]
  %v2124 = vld [vmem:[%s7 + $0x6a8] sm:$0xff]
  %v2125 = vld [vmem:[%s7 + $0x6b0] sm:$0xff]
  %v2126 = vld [vmem:[%s7 + $0x6b8] sm:$0xff]
  %v2127 = vld [vmem:[%s7 + $0x6c0] sm:$0xff]
  %v2128 = vld [vmem:[%s7 + $0x6c8] sm:$0xff]
  %v2129 = vld [vmem:[%s7 + $0x6d0] sm:$0xff]
  %v2130 = vld [vmem:[%s7 + $0x6d8] sm:$0xff]
  %v2131 = vld [vmem:[%s7 + $0x6e0] sm:$0xff]
  %v2132 = vld [vmem:[%s7 + $0x6e8] sm:$0xff]
  %v2133 = vld [vmem:[%s7 + $0x6f0] sm:$0xff]
  %v2134 = vld [vmem:[%s7 + $0x6f8] sm:$0xff]
  %v2135 = vld [vmem:[%s7 + $0x700] sm:$0xff]
  %v2136 = vld [vmem:[%s7 + $0x708] sm:$0xff]
  %v2137 = vld [vmem:[%s7 + $0x710] sm:$0xff]
  %v2138 = vld [vmem:[%s7 + $0x718] sm:$0xff]
  %v2139 = vld [vmem:[%s7 + $0x720] sm:$0xff]
  %v2140 = vld [vmem:[%s7 + $0x728] sm:$0xff]
  %v2141 = vld [vmem:[%s7 + $0x730] sm:$0xff]
  %v2142 = vld [vmem:[%s7 + $0x738] sm:$0xff]
  %v2143 = vld [vmem:[%s7 + $0x740] sm:$0xff]
  %v2144 = vld [vmem:[%s7 + $0x748] sm:$0xff]
  %v2145 = vld [vmem:[%s7 + $0x750] sm:$0xff]
  %v2146 = vld [vmem:[%s7 + $0x758] sm:$0xff]
  %v2147 = vld [vmem:[%s7 + $0x760] sm:$0xff]
  %v2148 = vld [vmem:[%s7 + $0x768] sm:$0xff]
  %v2149 = vld [vmem:[%s7 + $0x770] sm:$0xff]
  %v2150 = vld [vmem:[%s7 + $0x778] sm:$0xff]
  %v2151 = vld [vmem:[%s7 + $0x780] sm:$0xff]
  %v2152 = vld [vmem:[%s7 + $0x788] sm:$0xff]
  %v2153 = vld [vmem:[%s7 + $0x790] sm:$0xff]
  %v2154 = vld [vmem:[%s7 + $0x798] sm:$0xff]
  %v2155 = vld [vmem:[%s7 + $0x7a0] sm:$0xff]
  %v2156 = vld [vmem:[%s7 + $0x7a8] sm:$0xff]
  %v2157 = vld [vmem:[%s7 + $0x7b0] sm:$0xff]
  %v2158 = vld [vmem:[%s7 + $0x7b8] sm:$0xff]
  %v2159 = vld [vmem:[%s7 + $0x7c0] sm:$0xff]
  %v2160 = vld [vmem:[%s7 + $0x7c8] sm:$0xff]
  %v2161 = vld [vmem:[%s7 + $0x7d0] sm:$0xff]
  %v2162 = vld [vmem:[%s7 + $0x7d8] sm:$0xff]
  %v2163 = vld [vmem:[%s7 + $0x7e0] sm:$0xff]
  %v2164 = vld [vmem:[%s7 + $0x7e8] sm:$0xff]
  %v2165 = vld [vmem:[%s7 + $0x7f0] sm:$0xff]
  %v2166 = vld [vmem:[%s7 + $0x7f8] sm:$0xff]
  %v2167 = vld [vmem:[%s7 + $0x800] sm:$0xff]
  %v2168 = vld [vmem:[%s7 + $0x808] sm:$0xff]
  %v2169 = vld [vmem:[%s7 + $0x810] sm:$0xff]
  %v2170 = vld [vmem:[%s7 + $0x818] sm:$0xff]
  %v2171 = vld [vmem:[%s7 + $0x820] sm:$0xff]
  %v2172 = vld [vmem:[%s7 + $0x828] sm:$0xff]
  %v2173 = vld [vmem:[%s7 + $0x830] sm:$0xff]
  %v2174 = vld [vmem:[%s7 + $0x838] sm:$0xff]
  %v2175 = vld [vmem:[%s7 + $0x840] sm:$0xff]
  %v2176 = vld [vmem:[%s7 + $0x848] sm:$0xff]
  %v2177 = vld [vmem:[%s7 + $0x850] sm:$0xff]
  %v2178 = vld [vmem:[%s7 + $0x858] sm:$0xff]
  %v2179 = vld [vmem:[%s7 + $0x860] sm:$0xff]
  %v2180 = vld [vmem:[%s7 + $0x868] sm:$0xff]
  %v2181 = vld [vmem:[%s7 + $0x870] sm:$0xff]
  %v2182 = vld [vmem:[%s7 + $0x878] sm:$0xff]
  %v2183 = vld [vmem:[%s7 + $0x880] sm:$0xff]
  %v2184 = vld [vmem:[%s7 + $0x888] sm:$0xff]
  %v2185 = vld [vmem:[%s7 + $0x890] sm:$0xff]
  %v2186 = vld [vmem:[%s7 + $0x898] sm:$0xff]
  %v2187 = vld [vmem:[%s7 + $0x8a0] sm:$0xff]
  %v2188 = vld [vmem:[%s7 + $0x8a8] sm:$0xff]
  %v2189 = vld [vmem:[%s7 + $0x8b0] sm:$0xff]
  %v2190 = vld [vmem:[%s7 + $0x8b8] sm:$0xff]
  %v2191 = vld [vmem:[%s7 + $0x8c0] sm:$0xff]
  %v2192 = vld [vmem:[%s7 + $0x8c8] sm:$0xff]
  %v2193 = vld [vmem:[%s7 + $0x8d0] sm:$0xff]
  %v2194 = vld [vmem:[%s7 + $0x8d8] sm:$0xff]
  %v2195 = vld [vmem:[%s7 + $0x8e0] sm:$0xff]
  %v2196 = vld [vmem:[%s7 + $0x8e8] sm:$0xff]
  %v2197 = vld [vmem:[%s7 + $0x8f0] sm:$0xff]
  %v2198 = vld [vmem:[%s7 + $0x8f8] sm:$0xff]
  %v2199 = vunpack.c.l.bf16 %v1911
  %v2200 = vunpack.c.h.bf16 %v1911
  %v2201 = vunpack.c.l.bf16 %v1912
  %v2202 = vunpack.c.h.bf16 %v1912
  %v2203 = vunpack.c.l.bf16 %v1913
  %v2204 = vunpack.c.h.bf16 %v1913
  %v2205 = vunpack.c.l.bf16 %v1914
  %v2206 = vunpack.c.h.bf16 %v1914
  %v2207 = vunpack.c.l.bf16 %v1915
  %v2208 = vunpack.c.h.bf16 %v1915
  %v2209 = vunpack.c.l.bf16 %v1916
  %v2210 = vunpack.c.h.bf16 %v1916
  %v2211 = vunpack.c.l.bf16 %v1917
  %v2212 = vunpack.c.h.bf16 %v1917
  %v2213 = vunpack.c.l.bf16 %v1918
  %v2214 = vunpack.c.h.bf16 %v1918
  %v2215 = vunpack.c.l.bf16 %v1919
  %v2216 = vunpack.c.h.bf16 %v1919
  %v2217 = vunpack.c.l.bf16 %v1920
  %v2218 = vunpack.c.h.bf16 %v1920
  %v2219 = vunpack.c.l.bf16 %v1921
  %v2220 = vunpack.c.h.bf16 %v1921
  %v2221 = vunpack.c.l.bf16 %v1922
  %v2222 = vunpack.c.h.bf16 %v1922
  %v2223 = vunpack.c.l.bf16 %v1923
  %v2224 = vunpack.c.h.bf16 %v1923
  %v2225 = vunpack.c.l.bf16 %v1924
  %v2226 = vunpack.c.h.bf16 %v1924
  %v2227 = vunpack.c.l.bf16 %v1925
  %v2228 = vunpack.c.h.bf16 %v1925
  %v2229 = vunpack.c.l.bf16 %v1926
  %v2230 = vunpack.c.h.bf16 %v1926
  %v2231 = vunpack.c.l.bf16 %v1927
  %v2232 = vunpack.c.h.bf16 %v1927
  %v2233 = vunpack.c.l.bf16 %v1928
  %v2234 = vunpack.c.h.bf16 %v1928
  %v2235 = vunpack.c.l.bf16 %v1929
  %v2236 = vunpack.c.h.bf16 %v1929
  %v2237 = vunpack.c.l.bf16 %v1930
  %v2238 = vunpack.c.h.bf16 %v1930
  %v2239 = vunpack.c.l.bf16 %v1931
  %v2240 = vunpack.c.h.bf16 %v1931
  %v2241 = vunpack.c.l.bf16 %v1932
  %v2242 = vunpack.c.h.bf16 %v1932
  %v2243 = vunpack.c.l.bf16 %v1933
  %v2244 = vunpack.c.h.bf16 %v1933
  %v2245 = vunpack.c.l.bf16 %v1934
  %v2246 = vunpack.c.h.bf16 %v1934
  %v2247 = vunpack.c.l.bf16 %v1935
  %v2248 = vunpack.c.h.bf16 %v1935
  %v2249 = vunpack.c.l.bf16 %v1936
  %v2250 = vunpack.c.h.bf16 %v1936
  %v2251 = vunpack.c.l.bf16 %v1937
  %v2252 = vunpack.c.h.bf16 %v1937
  %v2253 = vunpack.c.l.bf16 %v1938
  %v2254 = vunpack.c.h.bf16 %v1938
  %v2255 = vunpack.c.l.bf16 %v1939
  %v2256 = vunpack.c.h.bf16 %v1939
  %v2257 = vunpack.c.l.bf16 %v1940
  %v2258 = vunpack.c.h.bf16 %v1940
  %v2259 = vunpack.c.l.bf16 %v1941
  %v2260 = vunpack.c.h.bf16 %v1941
  %v2261 = vunpack.c.l.bf16 %v1942
  %v2262 = vunpack.c.h.bf16 %v1942
  %v2263 = vunpack.c.l.bf16 %v1943
  %v2264 = vunpack.c.h.bf16 %v1943
  %v2265 = vunpack.c.l.bf16 %v1944
  %v2266 = vunpack.c.h.bf16 %v1944
  %v2267 = vunpack.c.l.bf16 %v1945
  %v2268 = vunpack.c.h.bf16 %v1945
  %v2269 = vunpack.c.l.bf16 %v1946
  %v2270 = vunpack.c.h.bf16 %v1946
  %v2271 = vunpack.c.l.bf16 %v1947
  %v2272 = vunpack.c.h.bf16 %v1947
  %v2273 = vunpack.c.l.bf16 %v1948
  %v2274 = vunpack.c.h.bf16 %v1948
  %v2275 = vunpack.c.l.bf16 %v1949
  %v2276 = vunpack.c.h.bf16 %v1949
  %v2277 = vunpack.c.l.bf16 %v1950
  %v2278 = vunpack.c.h.bf16 %v1950
  %v2279 = vunpack.c.l.bf16 %v1951
  %v2280 = vunpack.c.h.bf16 %v1951
  %v2281 = vunpack.c.l.bf16 %v1952
  %v2282 = vunpack.c.h.bf16 %v1952
  %v2283 = vunpack.c.l.bf16 %v1953
  %v2284 = vunpack.c.h.bf16 %v1953
  %v2285 = vunpack.c.l.bf16 %v1954
  %v2286 = vunpack.c.h.bf16 %v1954
  %v2287 = vunpack.c.l.bf16 %v1955
  %v2288 = vunpack.c.h.bf16 %v1955
  %v2289 = vunpack.c.l.bf16 %v1956
  %v2290 = vunpack.c.h.bf16 %v1956
  %v2291 = vunpack.c.l.bf16 %v1957
  %v2292 = vunpack.c.h.bf16 %v1957
  %v2293 = vunpack.c.l.bf16 %v1958
  %v2294 = vunpack.c.h.bf16 %v1958
  %v2295 = vunpack.c.l.bf16 %v1959
  %v2296 = vunpack.c.h.bf16 %v1959
  %v2297 = vunpack.c.l.bf16 %v1960
  %v2298 = vunpack.c.h.bf16 %v1960
  %v2299 = vunpack.c.l.bf16 %v1961
  %v2300 = vunpack.c.h.bf16 %v1961
  %v2301 = vunpack.c.l.bf16 %v1962
  %v2302 = vunpack.c.h.bf16 %v1962
  %v2303 = vunpack.c.l.bf16 %v1963
  %v2304 = vunpack.c.h.bf16 %v1963
  %v2305 = vunpack.c.l.bf16 %v1964
  %v2306 = vunpack.c.h.bf16 %v1964
  %v2307 = vunpack.c.l.bf16 %v1965
  %v2308 = vunpack.c.h.bf16 %v1965
  %v2309 = vunpack.c.l.bf16 %v1966
  %v2310 = vunpack.c.h.bf16 %v1966
  %v2311 = vunpack.c.l.bf16 %v1967
  %v2312 = vunpack.c.h.bf16 %v1967
  %v2313 = vunpack.c.l.bf16 %v1968
  %v2314 = vunpack.c.h.bf16 %v1968
  %v2315 = vunpack.c.l.bf16 %v1969
  %v2316 = vunpack.c.h.bf16 %v1969
  %v2317 = vunpack.c.l.bf16 %v1970
  %v2318 = vunpack.c.h.bf16 %v1970
  %v2319 = vunpack.c.l.bf16 %v1971
  %v2320 = vunpack.c.h.bf16 %v1971
  %v2321 = vunpack.c.l.bf16 %v1972
  %v2322 = vunpack.c.h.bf16 %v1972
  %v2323 = vunpack.c.l.bf16 %v1973
  %v2324 = vunpack.c.h.bf16 %v1973
  %v2325 = vunpack.c.l.bf16 %v1974
  %v2326 = vunpack.c.h.bf16 %v1974
  %v2327 = vunpack.c.l.bf16 %v1975
  %v2328 = vunpack.c.h.bf16 %v1975
  %v2329 = vunpack.c.l.bf16 %v1976
  %v2330 = vunpack.c.h.bf16 %v1976
  %v2331 = vunpack.c.l.bf16 %v1977
  %v2332 = vunpack.c.h.bf16 %v1977
  %v2333 = vunpack.c.l.bf16 %v1978
  %v2334 = vunpack.c.h.bf16 %v1978
  %v2335 = vunpack.c.l.bf16 %v1979
  %v2336 = vunpack.c.h.bf16 %v1979
  %v2337 = vunpack.c.l.bf16 %v1980
  %v2338 = vunpack.c.h.bf16 %v1980
  %v2339 = vunpack.c.l.bf16 %v1981
  %v2340 = vunpack.c.h.bf16 %v1981
  %v2341 = vunpack.c.l.bf16 %v1982
  %v2342 = vunpack.c.h.bf16 %v1982
  %v2343 = vunpack.c.l.bf16 %v1983
  %v2344 = vunpack.c.h.bf16 %v1983
  %v2345 = vunpack.c.l.bf16 %v1984
  %v2346 = vunpack.c.h.bf16 %v1984
  %v2347 = vunpack.c.l.bf16 %v1985
  %v2348 = vunpack.c.h.bf16 %v1985
  %v2349 = vunpack.c.l.bf16 %v1986
  %v2350 = vunpack.c.h.bf16 %v1986
  %v2351 = vunpack.c.l.bf16 %v1987
  %v2352 = vunpack.c.h.bf16 %v1987
  %v2353 = vunpack.c.l.bf16 %v1988
  %v2354 = vunpack.c.h.bf16 %v1988
  %v2355 = vunpack.c.l.bf16 %v1989
  %v2356 = vunpack.c.h.bf16 %v1989
  %v2357 = vunpack.c.l.bf16 %v1990
  %v2358 = vunpack.c.h.bf16 %v1990
  %v2359 = vunpack.c.l.bf16 %v1991
  %v2360 = vunpack.c.h.bf16 %v1991
  %v2361 = vunpack.c.l.bf16 %v1992
  %v2362 = vunpack.c.h.bf16 %v1992
  %v2363 = vunpack.c.l.bf16 %v1993
  %v2364 = vunpack.c.h.bf16 %v1993
  %v2365 = vunpack.c.l.bf16 %v1994
  %v2366 = vunpack.c.h.bf16 %v1994
  %v2367 = vunpack.c.l.bf16 %v1995
  %v2368 = vunpack.c.h.bf16 %v1995
  %v2369 = vunpack.c.l.bf16 %v1996
  %v2370 = vunpack.c.h.bf16 %v1996
  %v2371 = vunpack.c.l.bf16 %v1997
  %v2372 = vunpack.c.h.bf16 %v1997
  %v2373 = vunpack.c.l.bf16 %v1998
  %v2374 = vunpack.c.h.bf16 %v1998
  %v2375 = vunpack.c.l.bf16 %v1999
  %v2376 = vunpack.c.h.bf16 %v1999
  %v2377 = vunpack.c.l.bf16 %v2000
  %v2378 = vunpack.c.h.bf16 %v2000
  %v2379 = vunpack.c.l.bf16 %v2001
  %v2380 = vunpack.c.h.bf16 %v2001
  %v2381 = vunpack.c.l.bf16 %v2002
  %v2382 = vunpack.c.h.bf16 %v2002
  %v2383 = vunpack.c.l.bf16 %v2003
  %v2384 = vunpack.c.h.bf16 %v2003
  %v2385 = vunpack.c.l.bf16 %v2004
  %v2386 = vunpack.c.h.bf16 %v2004
  %v2387 = vunpack.c.l.bf16 %v2005
  %v2388 = vunpack.c.h.bf16 %v2005
  %v2389 = vunpack.c.l.bf16 %v2006
  %v2390 = vunpack.c.h.bf16 %v2006
  %v2391 = vunpack.c.l.bf16 %v2007
  %v2392 = vunpack.c.h.bf16 %v2007
  %v2393 = vunpack.c.l.bf16 %v2008
  %v2394 = vunpack.c.h.bf16 %v2008
  %v2395 = vunpack.c.l.bf16 %v2009
  %v2396 = vunpack.c.h.bf16 %v2009
  %v2397 = vunpack.c.l.bf16 %v2010
  %v2398 = vunpack.c.h.bf16 %v2010
  %v2399 = vunpack.c.l.bf16 %v2011
  %v2400 = vunpack.c.h.bf16 %v2011
  %v2401 = vunpack.c.l.bf16 %v2012
  %v2402 = vunpack.c.h.bf16 %v2012
  %v2403 = vunpack.c.l.bf16 %v2013
  %v2404 = vunpack.c.h.bf16 %v2013
  %v2405 = vunpack.c.l.bf16 %v2014
  %v2406 = vunpack.c.h.bf16 %v2014
  %v2407 = vunpack.c.l.bf16 %v2015
  %v2408 = vunpack.c.h.bf16 %v2015
  %v2409 = vunpack.c.l.bf16 %v2016
  %v2410 = vunpack.c.h.bf16 %v2016
  %v2411 = vunpack.c.l.bf16 %v2017
  %v2412 = vunpack.c.h.bf16 %v2017
  %v2413 = vunpack.c.l.bf16 %v2018
  %v2414 = vunpack.c.h.bf16 %v2018
  %v2415 = vunpack.c.l.bf16 %v2019
  %v2416 = vunpack.c.h.bf16 %v2019
  %v2417 = vunpack.c.l.bf16 %v2020
  %v2418 = vunpack.c.h.bf16 %v2020
  %v2419 = vunpack.c.l.bf16 %v2021
  %v2420 = vunpack.c.h.bf16 %v2021
  %v2421 = vunpack.c.l.bf16 %v2022
  %v2422 = vunpack.c.h.bf16 %v2022
  %v2423 = vunpack.c.l.bf16 %v2023
  %v2424 = vunpack.c.h.bf16 %v2023
  %v2425 = vunpack.c.l.bf16 %v2024
  %v2426 = vunpack.c.h.bf16 %v2024
  %v2427 = vunpack.c.l.bf16 %v2025
  %v2428 = vunpack.c.h.bf16 %v2025
  %v2429 = vunpack.c.l.bf16 %v2026
  %v2430 = vunpack.c.h.bf16 %v2026
  %v2431 = vunpack.c.l.bf16 %v2027
  %v2432 = vunpack.c.h.bf16 %v2027
  %v2433 = vunpack.c.l.bf16 %v2028
  %v2434 = vunpack.c.h.bf16 %v2028
  %v2435 = vunpack.c.l.bf16 %v2029
  %v2436 = vunpack.c.h.bf16 %v2029
  %v2437 = vunpack.c.l.bf16 %v2030
  %v2438 = vunpack.c.h.bf16 %v2030
  %v2439 = vunpack.c.l.bf16 %v2031
  %v2440 = vunpack.c.h.bf16 %v2031
  %v2441 = vunpack.c.l.bf16 %v2032
  %v2442 = vunpack.c.h.bf16 %v2032
  %v2443 = vunpack.c.l.bf16 %v2033
  %v2444 = vunpack.c.h.bf16 %v2033
  %v2445 = vunpack.c.l.bf16 %v2034
  %v2446 = vunpack.c.h.bf16 %v2034
  %v2447 = vunpack.c.l.bf16 %v2035
  %v2448 = vunpack.c.h.bf16 %v2035
  %v2449 = vunpack.c.l.bf16 %v2036
  %v2450 = vunpack.c.h.bf16 %v2036
  %v2451 = vunpack.c.l.bf16 %v2037
  %v2452 = vunpack.c.h.bf16 %v2037
  %v2453 = vunpack.c.l.bf16 %v2038
  %v2454 = vunpack.c.h.bf16 %v2038
  %v2455 = vunpack.c.l.bf16 %v2039
  %v2456 = vunpack.c.h.bf16 %v2039
  %v2457 = vunpack.c.l.bf16 %v2040
  %v2458 = vunpack.c.h.bf16 %v2040
  %v2459 = vunpack.c.l.bf16 %v2041
  %v2460 = vunpack.c.h.bf16 %v2041
  %v2461 = vunpack.c.l.bf16 %v2042
  %v2462 = vunpack.c.h.bf16 %v2042
  %v2463 = vunpack.c.l.bf16 %v2043
  %v2464 = vunpack.c.h.bf16 %v2043
  %v2465 = vunpack.c.l.bf16 %v2044
  %v2466 = vunpack.c.h.bf16 %v2044
  %v2467 = vunpack.c.l.bf16 %v2045
  %v2468 = vunpack.c.h.bf16 %v2045
  %v2469 = vunpack.c.l.bf16 %v2046
  %v2470 = vunpack.c.h.bf16 %v2046
  %v2471 = vunpack.c.l.bf16 %v2047
  %v2472 = vunpack.c.h.bf16 %v2047
  %v2473 = vunpack.c.l.bf16 %v2048
  %v2474 = vunpack.c.h.bf16 %v2048
  %v2475 = vunpack.c.l.bf16 %v2049
  %v2476 = vunpack.c.h.bf16 %v2049
  %v2477 = vunpack.c.l.bf16 %v2050
  %v2478 = vunpack.c.h.bf16 %v2050
  %v2479 = vunpack.c.l.bf16 %v2051
  %v2480 = vunpack.c.h.bf16 %v2051
  %v2481 = vunpack.c.l.bf16 %v2052
  %v2482 = vunpack.c.h.bf16 %v2052
  %v2483 = vunpack.c.l.bf16 %v2053
  %v2484 = vunpack.c.h.bf16 %v2053
  %v2485 = vunpack.c.l.bf16 %v2054
  %v2486 = vunpack.c.h.bf16 %v2054
  %v2487 = vunpack.c.l.bf16 %v2055
  %v2488 = vunpack.c.h.bf16 %v2055
  %v2489 = vunpack.c.l.bf16 %v2056
  %v2490 = vunpack.c.h.bf16 %v2056
  %v2491 = vunpack.c.l.bf16 %v2057
  %v2492 = vunpack.c.h.bf16 %v2057
  %v2493 = vunpack.c.l.bf16 %v2058
  %v2494 = vunpack.c.h.bf16 %v2058
  %v2495 = vunpack.c.l.bf16 %v2059
  %v2496 = vunpack.c.h.bf16 %v2059
  %v2497 = vunpack.c.l.bf16 %v2060
  %v2498 = vunpack.c.h.bf16 %v2060
  %v2499 = vunpack.c.l.bf16 %v2061
  %v2500 = vunpack.c.h.bf16 %v2061
  %v2501 = vunpack.c.l.bf16 %v2062
  %v2502 = vunpack.c.h.bf16 %v2062
  %v2503 = vunpack.c.l.bf16 %v2063
  %v2504 = vunpack.c.h.bf16 %v2063
  %v2505 = vunpack.c.l.bf16 %v2064
  %v2506 = vunpack.c.h.bf16 %v2064
  %v2507 = vunpack.c.l.bf16 %v2065
  %v2508 = vunpack.c.h.bf16 %v2065
  %v2509 = vunpack.c.l.bf16 %v2066
  %v2510 = vunpack.c.h.bf16 %v2066
  %v2511 = vunpack.c.l.bf16 %v2067
  %v2512 = vunpack.c.h.bf16 %v2067
  %v2513 = vunpack.c.l.bf16 %v2068
  %v2514 = vunpack.c.h.bf16 %v2068
  %v2515 = vunpack.c.l.bf16 %v2069
  %v2516 = vunpack.c.h.bf16 %v2069
  %v2517 = vunpack.c.l.bf16 %v2070
  %v2518 = vunpack.c.h.bf16 %v2070
  %v2519 = vunpack.c.l.bf16 %v2071
  %v2520 = vunpack.c.h.bf16 %v2071
  %v2521 = vunpack.c.l.bf16 %v2072
  %v2522 = vunpack.c.h.bf16 %v2072
  %v2523 = vunpack.c.l.bf16 %v2073
  %v2524 = vunpack.c.h.bf16 %v2073
  %v2525 = vunpack.c.l.bf16 %v2074
  %v2526 = vunpack.c.h.bf16 %v2074
  %v2527 = vunpack.c.l.bf16 %v2075
  %v2528 = vunpack.c.h.bf16 %v2075
  %v2529 = vunpack.c.l.bf16 %v2076
  %v2530 = vunpack.c.h.bf16 %v2076
  %v2531 = vunpack.c.l.bf16 %v2077
  %v2532 = vunpack.c.h.bf16 %v2077
  %v2533 = vunpack.c.l.bf16 %v2078
  %v2534 = vunpack.c.h.bf16 %v2078
  %v2535 = vunpack.c.l.bf16 %v2079
  %v2536 = vunpack.c.h.bf16 %v2079
  %v2537 = vunpack.c.l.bf16 %v2080
  %v2538 = vunpack.c.h.bf16 %v2080
  %v2539 = vunpack.c.l.bf16 %v2081
  %v2540 = vunpack.c.h.bf16 %v2081
  %v2541 = vunpack.c.l.bf16 %v2082
  %v2542 = vunpack.c.h.bf16 %v2082
  %v2543 = vunpack.c.l.bf16 %v2083
  %v2544 = vunpack.c.h.bf16 %v2083
  %v2545 = vunpack.c.l.bf16 %v2084
  %v2546 = vunpack.c.h.bf16 %v2084
  %v2547 = vunpack.c.l.bf16 %v2085
  %v2548 = vunpack.c.h.bf16 %v2085
  %v2549 = vunpack.c.l.bf16 %v2086
  %v2550 = vunpack.c.h.bf16 %v2086
  %v2551 = vunpack.c.l.bf16 %v2087
  %v2552 = vunpack.c.h.bf16 %v2087
  %v2553 = vunpack.c.l.bf16 %v2088
  %v2554 = vunpack.c.h.bf16 %v2088
  %v2555 = vunpack.c.l.bf16 %v2089
  %v2556 = vunpack.c.h.bf16 %v2089
  %v2557 = vunpack.c.l.bf16 %v2090
  %v2558 = vunpack.c.h.bf16 %v2090
  %v2559 = vunpack.c.l.bf16 %v2091
  %v2560 = vunpack.c.h.bf16 %v2091
  %v2561 = vunpack.c.l.bf16 %v2092
  %v2562 = vunpack.c.h.bf16 %v2092
  %v2563 = vunpack.c.l.bf16 %v2093
  %v2564 = vunpack.c.h.bf16 %v2093
  %v2565 = vunpack.c.l.bf16 %v2094
  %v2566 = vunpack.c.h.bf16 %v2094
  %v2567 = vunpack.c.l.bf16 %v2095
  %v2568 = vunpack.c.h.bf16 %v2095
  %v2569 = vunpack.c.l.bf16 %v2096
  %v2570 = vunpack.c.h.bf16 %v2096
  %v2571 = vunpack.c.l.bf16 %v2097
  %v2572 = vunpack.c.h.bf16 %v2097
  %v2573 = vunpack.c.l.bf16 %v2098
  %v2574 = vunpack.c.h.bf16 %v2098
  %v2575 = vunpack.c.l.bf16 %v2099
  %v2576 = vunpack.c.h.bf16 %v2099
  %v2577 = vunpack.c.l.bf16 %v2100
  %v2578 = vunpack.c.h.bf16 %v2100
  %v2579 = vunpack.c.l.bf16 %v2101
  %v2580 = vunpack.c.h.bf16 %v2101
  %v2581 = vunpack.c.l.bf16 %v2102
  %v2582 = vunpack.c.h.bf16 %v2102
  %v2583 = vunpack.c.l.bf16 %v2103
  %v2584 = vunpack.c.h.bf16 %v2103
  %v2585 = vunpack.c.l.bf16 %v2104
  %v2586 = vunpack.c.h.bf16 %v2104
  %v2587 = vunpack.c.l.bf16 %v2105
  %v2588 = vunpack.c.h.bf16 %v2105
  %v2589 = vunpack.c.l.bf16 %v2106
  %v2590 = vunpack.c.h.bf16 %v2106
  %v2591 = vunpack.c.l.bf16 %v2107
  %v2592 = vunpack.c.h.bf16 %v2107
  %v2593 = vunpack.c.l.bf16 %v2108
  %v2594 = vunpack.c.h.bf16 %v2108
  %v2595 = vunpack.c.l.bf16 %v2109
  %v2596 = vunpack.c.h.bf16 %v2109
  %v2597 = vunpack.c.l.bf16 %v2110
  %v2598 = vunpack.c.h.bf16 %v2110
  %v2599 = vunpack.c.l.bf16 %v2111
  %v2600 = vunpack.c.h.bf16 %v2111
  %v2601 = vunpack.c.l.bf16 %v2112
  %v2602 = vunpack.c.h.bf16 %v2112
  %v2603 = vunpack.c.l.bf16 %v2113
  %v2604 = vunpack.c.h.bf16 %v2113
  %v2605 = vunpack.c.l.bf16 %v2114
  %v2606 = vunpack.c.h.bf16 %v2114
  %v2607 = vunpack.c.l.bf16 %v2115
  %v2608 = vunpack.c.h.bf16 %v2115
  %v2609 = vunpack.c.l.bf16 %v2116
  %v2610 = vunpack.c.h.bf16 %v2116
  %v2611 = vunpack.c.l.bf16 %v2117
  %v2612 = vunpack.c.h.bf16 %v2117
  %v2613 = vunpack.c.l.bf16 %v2118
  %v2614 = vunpack.c.h.bf16 %v2118
  %v2615 = vunpack.c.l.bf16 %v2119
  %v2616 = vunpack.c.h.bf16 %v2119
  %v2617 = vunpack.c.l.bf16 %v2120
  %v2618 = vunpack.c.h.bf16 %v2120
  %v2619 = vunpack.c.l.bf16 %v2121
  %v2620 = vunpack.c.h.bf16 %v2121
  %v2621 = vunpack.c.l.bf16 %v2122
  %v2622 = vunpack.c.h.bf16 %v2122
  %v2623 = vunpack.c.l.bf16 %v2123
  %v2624 = vunpack.c.h.bf16 %v2123
  %v2625 = vunpack.c.l.bf16 %v2124
  %v2626 = vunpack.c.h.bf16 %v2124
  %v2627 = vunpack.c.l.bf16 %v2125
  %v2628 = vunpack.c.h.bf16 %v2125
  %v2629 = vunpack.c.l.bf16 %v2126
  %v2630 = vunpack.c.h.bf16 %v2126
  %v2631 = vunpack.c.l.bf16 %v2127
  %v2632 = vunpack.c.h.bf16 %v2127
  %v2633 = vunpack.c.l.bf16 %v2128
  %v2634 = vunpack.c.h.bf16 %v2128
  %v2635 = vunpack.c.l.bf16 %v2129
  %v2636 = vunpack.c.h.bf16 %v2129
  %v2637 = vunpack.c.l.bf16 %v2130
  %v2638 = vunpack.c.h.bf16 %v2130
  %v2639 = vunpack.c.l.bf16 %v2131
  %v2640 = vunpack.c.h.bf16 %v2131
  %v2641 = vunpack.c.l.bf16 %v2132
  %v2642 = vunpack.c.h.bf16 %v2132
  %v2643 = vunpack.c.l.bf16 %v2133
  %v2644 = vunpack.c.h.bf16 %v2133
  %v2645 = vunpack.c.l.bf16 %v2134
  %v2646 = vunpack.c.h.bf16 %v2134
  %v2647 = vunpack.c.l.bf16 %v2135
  %v2648 = vunpack.c.h.bf16 %v2135
  %v2649 = vunpack.c.l.bf16 %v2136
  %v2650 = vunpack.c.h.bf16 %v2136
  %v2651 = vunpack.c.l.bf16 %v2137
  %v2652 = vunpack.c.h.bf16 %v2137
  %v2653 = vunpack.c.l.bf16 %v2138
  %v2654 = vunpack.c.h.bf16 %v2138
  %v2655 = vunpack.c.l.bf16 %v2139
  %v2656 = vunpack.c.h.bf16 %v2139
  %v2657 = vunpack.c.l.bf16 %v2140
  %v2658 = vunpack.c.h.bf16 %v2140
  %v2659 = vunpack.c.l.bf16 %v2141
  %v2660 = vunpack.c.h.bf16 %v2141
  %v2661 = vunpack.c.l.bf16 %v2142
  %v2662 = vunpack.c.h.bf16 %v2142
  %v2663 = vunpack.c.l.bf16 %v2143
  %v2664 = vunpack.c.h.bf16 %v2143
  %v2665 = vunpack.c.l.bf16 %v2144
  %v2666 = vunpack.c.h.bf16 %v2144
  %v2667 = vunpack.c.l.bf16 %v2145
  %v2668 = vunpack.c.h.bf16 %v2145
  %v2669 = vunpack.c.l.bf16 %v2146
  %v2670 = vunpack.c.h.bf16 %v2146
  %v2671 = vunpack.c.l.bf16 %v2147
  %v2672 = vunpack.c.h.bf16 %v2147
  %v2673 = vunpack.c.l.bf16 %v2148
  %v2674 = vunpack.c.h.bf16 %v2148
  %v2675 = vunpack.c.l.bf16 %v2149
  %v2676 = vunpack.c.h.bf16 %v2149
  %v2677 = vunpack.c.l.bf16 %v2150
  %v2678 = vunpack.c.h.bf16 %v2150
  %v2679 = vunpack.c.l.bf16 %v2151
  %v2680 = vunpack.c.h.bf16 %v2151
  %v2681 = vunpack.c.l.bf16 %v2152
  %v2682 = vunpack.c.h.bf16 %v2152
  %v2683 = vunpack.c.l.bf16 %v2153
  %v2684 = vunpack.c.h.bf16 %v2153
  %v2685 = vunpack.c.l.bf16 %v2154
  %v2686 = vunpack.c.h.bf16 %v2154
  %v2687 = vunpack.c.l.bf16 %v2155
  %v2688 = vunpack.c.h.bf16 %v2155
  %v2689 = vunpack.c.l.bf16 %v2156
  %v2690 = vunpack.c.h.bf16 %v2156
  %v2691 = vunpack.c.l.bf16 %v2157
  %v2692 = vunpack.c.h.bf16 %v2157
  %v2693 = vunpack.c.l.bf16 %v2158
  %v2694 = vunpack.c.h.bf16 %v2158
  %v2695 = vunpack.c.l.bf16 %v2159
  %v2696 = vunpack.c.h.bf16 %v2159
  %v2697 = vunpack.c.l.bf16 %v2160
  %v2698 = vunpack.c.h.bf16 %v2160
  %v2699 = vunpack.c.l.bf16 %v2161
  %v2700 = vunpack.c.h.bf16 %v2161
  %v2701 = vunpack.c.l.bf16 %v2162
  %v2702 = vunpack.c.h.bf16 %v2162
  %v2703 = vunpack.c.l.bf16 %v2163
  %v2704 = vunpack.c.h.bf16 %v2163
  %v2705 = vunpack.c.l.bf16 %v2164
  %v2706 = vunpack.c.h.bf16 %v2164
  %v2707 = vunpack.c.l.bf16 %v2165
  %v2708 = vunpack.c.h.bf16 %v2165
  %v2709 = vunpack.c.l.bf16 %v2166
  %v2710 = vunpack.c.h.bf16 %v2166
  %v2711 = vunpack.c.l.bf16 %v2167
  %v2712 = vunpack.c.h.bf16 %v2167
  %v2713 = vunpack.c.l.bf16 %v2168
  %v2714 = vunpack.c.h.bf16 %v2168
  %v2715 = vunpack.c.l.bf16 %v2169
  %v2716 = vunpack.c.h.bf16 %v2169
  %v2717 = vunpack.c.l.bf16 %v2170
  %v2718 = vunpack.c.h.bf16 %v2170
  %v2719 = vunpack.c.l.bf16 %v2171
  %v2720 = vunpack.c.h.bf16 %v2171
  %v2721 = vunpack.c.l.bf16 %v2172
  %v2722 = vunpack.c.h.bf16 %v2172
  %v2723 = vunpack.c.l.bf16 %v2173
  %v2724 = vunpack.c.h.bf16 %v2173
  %v2725 = vunpack.c.l.bf16 %v2174
  %v2726 = vunpack.c.h.bf16 %v2174
  %v2727 = vunpack.c.l.bf16 %v2175
  %v2728 = vunpack.c.h.bf16 %v2175
  %v2729 = vunpack.c.l.bf16 %v2176
  %v2730 = vunpack.c.h.bf16 %v2176
  %v2731 = vunpack.c.l.bf16 %v2177
  %v2732 = vunpack.c.h.bf16 %v2177
  %v2733 = vunpack.c.l.bf16 %v2178
  %v2734 = vunpack.c.h.bf16 %v2178
  %v2735 = vunpack.c.l.bf16 %v2179
  %v2736 = vunpack.c.h.bf16 %v2179
  %v2737 = vunpack.c.l.bf16 %v2180
  %v2738 = vunpack.c.h.bf16 %v2180
  %v2739 = vunpack.c.l.bf16 %v2181
  %v2740 = vunpack.c.h.bf16 %v2181
  %v2741 = vunpack.c.l.bf16 %v2182
  %v2742 = vunpack.c.h.bf16 %v2182
  %v2743 = vunpack.c.l.bf16 %v2183
  %v2744 = vunpack.c.h.bf16 %v2183
  %v2745 = vunpack.c.l.bf16 %v2184
  %v2746 = vunpack.c.h.bf16 %v2184
  %v2747 = vunpack.c.l.bf16 %v2185
  %v2748 = vunpack.c.h.bf16 %v2185
  %v2749 = vunpack.c.l.bf16 %v2186
  %v2750 = vunpack.c.h.bf16 %v2186
  %v2751 = vunpack.c.l.bf16 %v2187
  %v2752 = vunpack.c.h.bf16 %v2187
  %v2753 = vunpack.c.l.bf16 %v2188
  %v2754 = vunpack.c.h.bf16 %v2188
  %v2755 = vunpack.c.l.bf16 %v2189
  %v2756 = vunpack.c.h.bf16 %v2189
  %v2757 = vunpack.c.l.bf16 %v2190
  %v2758 = vunpack.c.h.bf16 %v2190
  %v2759 = vunpack.c.l.bf16 %v2191
  %v2760 = vunpack.c.h.bf16 %v2191
  %v2761 = vunpack.c.l.bf16 %v2192
  %v2762 = vunpack.c.h.bf16 %v2192
  %v2763 = vunpack.c.l.bf16 %v2193
  %v2764 = vunpack.c.h.bf16 %v2193
  %v2765 = vunpack.c.l.bf16 %v2194
  %v2766 = vunpack.c.h.bf16 %v2194
  %v2767 = vunpack.c.l.bf16 %v2195
  %v2768 = vunpack.c.h.bf16 %v2195
  %v2769 = vunpack.c.l.bf16 %v2196
  %v2770 = vunpack.c.h.bf16 %v2196
  %v2771 = vunpack.c.l.bf16 %v2197
  %v2772 = vunpack.c.h.bf16 %v2197
  %v2773 = vunpack.c.l.bf16 %v2198
  %v2774 = vunpack.c.h.bf16 %v2198
  %v2775 = vld [vmem:[%s8] sm:$0x3f]
  %v2777 = vperm.slane %v2775, 0
  %v2778 = vperm.slane %v2775, 1
  %v2779 = vperm.slane %v2775, 2
  %v2780 = vperm.slane %v2775, 3
  %v2781 = vperm.slane %v2775, 4
  %v2782 = vperm.slane %v2775, 5
  %v2837 = vrot.slane %v1869, 7
  %v2838 = vsel %vm786, %v2837, %v1863
  %v2839 = vrot.slane %v1875, 6
  %v2840 = vsel %vm788, %v2839, %v2838
  %v2841 = vrot.slane %v1881, 5
  %v2842 = vsel %vm790, %v2841, %v2840
  %v2843 = vrot.slane %v1887, 4
  %v2844 = vsel %vm792, %v2843, %v2842
  %v2845 = vrot.slane %v1893, 3
  %v2846 = vsel %vm794, %v2845, %v2844
  %v2847 = vrot.slane %v1899, 2
  %v2848 = vsel %vm796, %v2847, %v2846
  %v2849 = vrot.slane %v1905, 1
  %v2850 = vsel %vm798, %v2849, %v2848
  %v2851 = vrot.slane %v1870, 7
  %v2852 = vsel %vm786, %v2851, %v1864
  %v2853 = vrot.slane %v1876, 6
  %v2854 = vsel %vm788, %v2853, %v2852
  %v2855 = vrot.slane %v1882, 5
  %v2856 = vsel %vm790, %v2855, %v2854
  %v2857 = vrot.slane %v1888, 4
  %v2858 = vsel %vm792, %v2857, %v2856
  %v2859 = vrot.slane %v1894, 3
  %v2860 = vsel %vm794, %v2859, %v2858
  %v2861 = vrot.slane %v1900, 2
  %v2862 = vsel %vm796, %v2861, %v2860
  %v2863 = vrot.slane %v1906, 1
  %v2864 = vsel %vm798, %v2863, %v2862
  %v2865 = vrot.slane %v1871, 7
  %v2866 = vsel %vm786, %v2865, %v1865
  %v2867 = vrot.slane %v1877, 6
  %v2868 = vsel %vm788, %v2867, %v2866
  %v2869 = vrot.slane %v1883, 5
  %v2870 = vsel %vm790, %v2869, %v2868
  %v2871 = vrot.slane %v1889, 4
  %v2872 = vsel %vm792, %v2871, %v2870
  %v2873 = vrot.slane %v1895, 3
  %v2874 = vsel %vm794, %v2873, %v2872
  %v2875 = vrot.slane %v1901, 2
  %v2876 = vsel %vm796, %v2875, %v2874
  %v2877 = vrot.slane %v1907, 1
  %v2878 = vsel %vm798, %v2877, %v2876
  %v2879 = vrot.slane %v1872, 7
  %v2880 = vsel %vm786, %v2879, %v1866
  %v2881 = vrot.slane %v1878, 6
  %v2882 = vsel %vm788, %v2881, %v2880
  %v2883 = vrot.slane %v1884, 5
  %v2884 = vsel %vm790, %v2883, %v2882
  %v2885 = vrot.slane %v1890, 4
  %v2886 = vsel %vm792, %v2885, %v2884
  %v2887 = vrot.slane %v1896, 3
  %v2888 = vsel %vm794, %v2887, %v2886
  %v2889 = vrot.slane %v1902, 2
  %v2890 = vsel %vm796, %v2889, %v2888
  %v2891 = vrot.slane %v1908, 1
  %v2892 = vsel %vm798, %v2891, %v2890
  %v2893 = vrot.slane %v1873, 7
  %v2894 = vsel %vm786, %v2893, %v1867
  %v2895 = vrot.slane %v1879, 6
  %v2896 = vsel %vm788, %v2895, %v2894
  %v2897 = vrot.slane %v1885, 5
  %v2898 = vsel %vm790, %v2897, %v2896
  %v2899 = vrot.slane %v1891, 4
  %v2900 = vsel %vm792, %v2899, %v2898
  %v2901 = vrot.slane %v1897, 3
  %v2902 = vsel %vm794, %v2901, %v2900
  %v2903 = vrot.slane %v1903, 2
  %v2904 = vsel %vm796, %v2903, %v2902
  %v2905 = vrot.slane %v1909, 1
  %v2906 = vsel %vm798, %v2905, %v2904
  %v2907 = vrot.slane %v1874, 7
  %v2908 = vsel %vm786, %v2907, %v1868
  %v2909 = vrot.slane %v1880, 6
  %v2910 = vsel %vm788, %v2909, %v2908
  %v2911 = vrot.slane %v1886, 5
  %v2912 = vsel %vm790, %v2911, %v2910
  %v2913 = vrot.slane %v1892, 4
  %v2914 = vsel %vm792, %v2913, %v2912
  %v2915 = vrot.slane %v1898, 3
  %v2916 = vsel %vm794, %v2915, %v2914
  %v2917 = vrot.slane %v1904, 2
  %v2918 = vsel %vm796, %v2917, %v2916
  %v2919 = vrot.slane %v1910, 1
  %v2920 = vsel %vm798, %v2919, %v2918
  %2927 = vmatpush.msra.mxu0 %v2289
  %2928 = vmatpush.msra.mxu0 %v2283
  %2929 = vmatpush.msra.mxu0 %v2277
  %2930 = vmatpush.msra.mxu0 %v2271
  %2931 = vmatpush.msra.mxu0 %v2265
  %2932 = vmatpush.msra.mxu0 %v2259
  %2933 = vmatpush.msra.mxu0 %v2253
  %2934 = vmatpush.msra.mxu0 %v2247
  %2935 = vmatpush.msra.mxu0 %v2241
  %2936 = vmatpush.msra.mxu0 %v2235
  %2937 = vmatpush.msra.mxu0 %v2229
  %2938 = vmatpush.msra.mxu0 %v2223
  %2939 = vmatpush.msra.mxu0 %v2217
  %2940 = vmatpush.msra.mxu0 %v2211
  %2941 = vmatpush.msra.mxu0 %v2205
  %2942 = vmatpush.msra.mxu0 %v2199
  %2943 = vmatmul.f32.gmra.mxu0 %v2850
  %v2944 = vpop.f32.mrf.mxu0
  %v2945 = vadd.f32 %v2777, %v2944
  %2946 = vdwg.mxu0
  %2947 = vmatpush.msra.mxu0 %v2385
  %2948 = vmatpush.msra.mxu0 %v2379
  %2949 = vmatpush.msra.mxu0 %v2373
  %2950 = vmatpush.msra.mxu0 %v2367
  %2951 = vmatpush.msra.mxu0 %v2361
  %2952 = vmatpush.msra.mxu0 %v2355
  %2953 = vmatpush.msra.mxu0 %v2349
  %2954 = vmatpush.msra.mxu0 %v2343
  %2955 = vmatpush.msra.mxu0 %v2337
  %2956 = vmatpush.msra.mxu0 %v2331
  %2957 = vmatpush.msra.mxu0 %v2325
  %2958 = vmatpush.msra.mxu0 %v2319
  %2959 = vmatpush.msra.mxu0 %v2313
  %2960 = vmatpush.msra.mxu0 %v2307
  %2961 = vmatpush.msra.mxu0 %v2301
  %2962 = vmatpush.msra.mxu0 %v2295
  %2963 = vmatmul.f32.gmra.mxu0 %v2864
  %v2964 = vpop.f32.mrf.mxu0
  %v2965 = vadd.f32 %v2945, %v2964
  %2966 = vdwg.mxu0
  %2967 = vmatpush.msra.mxu0 %v2481
  %2968 = vmatpush.msra.mxu0 %v2475
  %2969 = vmatpush.msra.mxu0 %v2469
  %2970 = vmatpush.msra.mxu0 %v2463
  %2971 = vmatpush.msra.mxu0 %v2457
  %2972 = vmatpush.msra.mxu0 %v2451
  %2973 = vmatpush.msra.mxu0 %v2445
  %2974 = vmatpush.msra.mxu0 %v2439
  %2975 = vmatpush.msra.mxu0 %v2433
  %2976 = vmatpush.msra.mxu0 %v2427
  %2977 = vmatpush.msra.mxu0 %v2421
  %2978 = vmatpush.msra.mxu0 %v2415
  %2979 = vmatpush.msra.mxu0 %v2409
  %2980 = vmatpush.msra.mxu0 %v2403
  %2981 = vmatpush.msra.mxu0 %v2397
  %2982 = vmatpush.msra.mxu0 %v2391
  %2983 = vmatmul.f32.gmra.mxu0 %v2878
  %v2984 = vpop.f32.mrf.mxu0
  %v2985 = vadd.f32 %v2965, %v2984
  %2986 = vdwg.mxu0
  %2987 = vmatpush.msra.mxu0 %v2577
  %2988 = vmatpush.msra.mxu0 %v2571
  %2989 = vmatpush.msra.mxu0 %v2565
  %2990 = vmatpush.msra.mxu0 %v2559
  %2991 = vmatpush.msra.mxu0 %v2553
  %2992 = vmatpush.msra.mxu0 %v2547
  %2993 = vmatpush.msra.mxu0 %v2541
  %2994 = vmatpush.msra.mxu0 %v2535
  %2995 = vmatpush.msra.mxu0 %v2529
  %2996 = vmatpush.msra.mxu0 %v2523
  %2997 = vmatpush.msra.mxu0 %v2517
  %2998 = vmatpush.msra.mxu0 %v2511
  %2999 = vmatpush.msra.mxu0 %v2505
  %3000 = vmatpush.msra.mxu0 %v2499
  %3001 = vmatpush.msra.mxu0 %v2493
  %3002 = vmatpush.msra.mxu0 %v2487
  %3003 = vmatmul.f32.gmra.mxu0 %v2892
  %v3004 = vpop.f32.mrf.mxu0
  %v3005 = vadd.f32 %v2985, %v3004
  %3006 = vdwg.mxu0
  %3007 = vmatpush.msra.mxu0 %v2673
  %3008 = vmatpush.msra.mxu0 %v2667
  %3009 = vmatpush.msra.mxu0 %v2661
  %3010 = vmatpush.msra.mxu0 %v2655
  %3011 = vmatpush.msra.mxu0 %v2649
  %3012 = vmatpush.msra.mxu0 %v2643
  %3013 = vmatpush.msra.mxu0 %v2637
  %3014 = vmatpush.msra.mxu0 %v2631
  %3015 = vmatpush.msra.mxu0 %v2625
  %3016 = vmatpush.msra.mxu0 %v2619
  %3017 = vmatpush.msra.mxu0 %v2613
  %3018 = vmatpush.msra.mxu0 %v2607
  %3019 = vmatpush.msra.mxu0 %v2601
  %3020 = vmatpush.msra.mxu0 %v2595
  %3021 = vmatpush.msra.mxu0 %v2589
  %3022 = vmatpush.msra.mxu0 %v2583
  %3023 = vmatmul.f32.gmra.mxu0 %v2906
  %v3024 = vpop.f32.mrf.mxu0
  %v3025 = vadd.f32 %v3005, %v3024
  %3026 = vdwg.mxu0
  %3027 = vmatpush.msra.mxu0 %v2769
  %3028 = vmatpush.msra.mxu0 %v2763
  %3029 = vmatpush.msra.mxu0 %v2757
  %3030 = vmatpush.msra.mxu0 %v2751
  %3031 = vmatpush.msra.mxu0 %v2745
  %3032 = vmatpush.msra.mxu0 %v2739
  %3033 = vmatpush.msra.mxu0 %v2733
  %3034 = vmatpush.msra.mxu0 %v2727
  %3035 = vmatpush.msra.mxu0 %v2721
  %3036 = vmatpush.msra.mxu0 %v2715
  %3037 = vmatpush.msra.mxu0 %v2709
  %3038 = vmatpush.msra.mxu0 %v2703
  %3039 = vmatpush.msra.mxu0 %v2697
  %3040 = vmatpush.msra.mxu0 %v2691
  %3041 = vmatpush.msra.mxu0 %v2685
  %3042 = vmatpush.msra.mxu0 %v2679
  %3043 = vmatmul.f32.gmra.mxu0 %v2920
  %v3044 = vpop.f32.mrf.mxu0
  %v3045 = vadd.f32 %v3025, %v3044
  %3046 = vdwg.mxu0
  %3047 = vmatpush.msra.mxu0 %v2290
  %3048 = vmatpush.msra.mxu0 %v2284
  %3049 = vmatpush.msra.mxu0 %v2278
  %3050 = vmatpush.msra.mxu0 %v2272
  %3051 = vmatpush.msra.mxu0 %v2266
  %3052 = vmatpush.msra.mxu0 %v2260
  %3053 = vmatpush.msra.mxu0 %v2254
  %3054 = vmatpush.msra.mxu0 %v2248
  %3055 = vmatpush.msra.mxu0 %v2242
  %3056 = vmatpush.msra.mxu0 %v2236
  %3057 = vmatpush.msra.mxu0 %v2230
  %3058 = vmatpush.msra.mxu0 %v2224
  %3059 = vmatpush.msra.mxu0 %v2218
  %3060 = vmatpush.msra.mxu0 %v2212
  %3061 = vmatpush.msra.mxu0 %v2206
  %3062 = vmatpush.msra.mxu0 %v2200
  %3063 = vmatmul.f32.gmra.mxu0 %v2850
  %v3064 = vpop.f32.mrf.mxu0
  %v3065 = vadd.f32 %v2778, %v3064
  %3066 = vdwg.mxu0
  %3067 = vmatpush.msra.mxu0 %v2386
  %3068 = vmatpush.msra.mxu0 %v2380
  %3069 = vmatpush.msra.mxu0 %v2374
  %3070 = vmatpush.msra.mxu0 %v2368
  %3071 = vmatpush.msra.mxu0 %v2362
  %3072 = vmatpush.msra.mxu0 %v2356
  %3073 = vmatpush.msra.mxu0 %v2350
  %3074 = vmatpush.msra.mxu0 %v2344
  %3075 = vmatpush.msra.mxu0 %v2338
  %3076 = vmatpush.msra.mxu0 %v2332
  %3077 = vmatpush.msra.mxu0 %v2326
  %3078 = vmatpush.msra.mxu0 %v2320
  %3079 = vmatpush.msra.mxu0 %v2314
  %3080 = vmatpush.msra.mxu0 %v2308
  %3081 = vmatpush.msra.mxu0 %v2302
  %3082 = vmatpush.msra.mxu0 %v2296
  %3083 = vmatmul.f32.gmra.mxu0 %v2864
  %v3084 = vpop.f32.mrf.mxu0
  %v3085 = vadd.f32 %v3065, %v3084
  %3086 = vdwg.mxu0
  %3087 = vmatpush.msra.mxu0 %v2482
  %3088 = vmatpush.msra.mxu0 %v2476
  %3089 = vmatpush.msra.mxu0 %v2470
  %3090 = vmatpush.msra.mxu0 %v2464
  %3091 = vmatpush.msra.mxu0 %v2458
  %3092 = vmatpush.msra.mxu0 %v2452
  %3093 = vmatpush.msra.mxu0 %v2446
  %3094 = vmatpush.msra.mxu0 %v2440
  %3095 = vmatpush.msra.mxu0 %v2434
  %3096 = vmatpush.msra.mxu0 %v2428
  %3097 = vmatpush.msra.mxu0 %v2422
  %3098 = vmatpush.msra.mxu0 %v2416
  %3099 = vmatpush.msra.mxu0 %v2410
  %3100 = vmatpush.msra.mxu0 %v2404
  %3101 = vmatpush.msra.mxu0 %v2398
  %3102 = vmatpush.msra.mxu0 %v2392
  %3103 = vmatmul.f32.gmra.mxu0 %v2878
  %v3104 = vpop.f32.mrf.mxu0
  %v3105 = vadd.f32 %v3085, %v3104
  %3106 = vdwg.mxu0
  %3107 = vmatpush.msra.mxu0 %v2578
  %3108 = vmatpush.msra.mxu0 %v2572
  %3109 = vmatpush.msra.mxu0 %v2566
  %3110 = vmatpush.msra.mxu0 %v2560
  %3111 = vmatpush.msra.mxu0 %v2554
  %3112 = vmatpush.msra.mxu0 %v2548
  %3113 = vmatpush.msra.mxu0 %v2542
  %3114 = vmatpush.msra.mxu0 %v2536
  %3115 = vmatpush.msra.mxu0 %v2530
  %3116 = vmatpush.msra.mxu0 %v2524
  %3117 = vmatpush.msra.mxu0 %v2518
  %3118 = vmatpush.msra.mxu0 %v2512
  %3119 = vmatpush.msra.mxu0 %v2506
  %3120 = vmatpush.msra.mxu0 %v2500
  %3121 = vmatpush.msra.mxu0 %v2494
  %3122 = vmatpush.msra.mxu0 %v2488
  %3123 = vmatmul.f32.gmra.mxu0 %v2892
  %v3124 = vpop.f32.mrf.mxu0
  %v3125 = vadd.f32 %v3105, %v3124
  %3126 = vdwg.mxu0
  %3127 = vmatpush.msra.mxu0 %v2674
  %3128 = vmatpush.msra.mxu0 %v2668
  %3129 = vmatpush.msra.mxu0 %v2662
  %3130 = vmatpush.msra.mxu0 %v2656
  %3131 = vmatpush.msra.mxu0 %v2650
  %3132 = vmatpush.msra.mxu0 %v2644
  %3133 = vmatpush.msra.mxu0 %v2638
  %3134 = vmatpush.msra.mxu0 %v2632
  %3135 = vmatpush.msra.mxu0 %v2626
  %3136 = vmatpush.msra.mxu0 %v2620
  %3137 = vmatpush.msra.mxu0 %v2614
  %3138 = vmatpush.msra.mxu0 %v2608
  %3139 = vmatpush.msra.mxu0 %v2602
  %3140 = vmatpush.msra.mxu0 %v2596
  %3141 = vmatpush.msra.mxu0 %v2590
  %3142 = vmatpush.msra.mxu0 %v2584
  %3143 = vmatmul.f32.gmra.mxu0 %v2906
  %v3144 = vpop.f32.mrf.mxu0
  %v3145 = vadd.f32 %v3125, %v3144
  %3146 = vdwg.mxu0
  %3147 = vmatpush.msra.mxu0 %v2770
  %3148 = vmatpush.msra.mxu0 %v2764
  %3149 = vmatpush.msra.mxu0 %v2758
  %3150 = vmatpush.msra.mxu0 %v2752
  %3151 = vmatpush.msra.mxu0 %v2746
  %3152 = vmatpush.msra.mxu0 %v2740
  %3153 = vmatpush.msra.mxu0 %v2734
  %3154 = vmatpush.msra.mxu0 %v2728
  %3155 = vmatpush.msra.mxu0 %v2722
  %3156 = vmatpush.msra.mxu0 %v2716
  %3157 = vmatpush.msra.mxu0 %v2710
  %3158 = vmatpush.msra.mxu0 %v2704
  %3159 = vmatpush.msra.mxu0 %v2698
  %3160 = vmatpush.msra.mxu0 %v2692
  %3161 = vmatpush.msra.mxu0 %v2686
  %3162 = vmatpush.msra.mxu0 %v2680
  %3163 = vmatmul.f32.gmra.mxu0 %v2920
  %v3164 = vpop.f32.mrf.mxu0
  %v3165 = vadd.f32 %v3145, %v3164
  %3166 = vdwg.mxu0
  %3167 = vmatpush.msra.mxu0 %v2291
  %3168 = vmatpush.msra.mxu0 %v2285
  %3169 = vmatpush.msra.mxu0 %v2279
  %3170 = vmatpush.msra.mxu0 %v2273
  %3171 = vmatpush.msra.mxu0 %v2267
  %3172 = vmatpush.msra.mxu0 %v2261
  %3173 = vmatpush.msra.mxu0 %v2255
  %3174 = vmatpush.msra.mxu0 %v2249
  %3175 = vmatpush.msra.mxu0 %v2243
  %3176 = vmatpush.msra.mxu0 %v2237
  %3177 = vmatpush.msra.mxu0 %v2231
  %3178 = vmatpush.msra.mxu0 %v2225
  %3179 = vmatpush.msra.mxu0 %v2219
  %3180 = vmatpush.msra.mxu0 %v2213
  %3181 = vmatpush.msra.mxu0 %v2207
  %3182 = vmatpush.msra.mxu0 %v2201
  %3183 = vmatmul.f32.gmra.mxu0 %v2850
  %v3184 = vpop.f32.mrf.mxu0
  %v3185 = vadd.f32 %v2779, %v3184
  %3186 = vdwg.mxu0
  %3187 = vmatpush.msra.mxu0 %v2387
  %3188 = vmatpush.msra.mxu0 %v2381
  %3189 = vmatpush.msra.mxu0 %v2375
  %3190 = vmatpush.msra.mxu0 %v2369
  %3191 = vmatpush.msra.mxu0 %v2363
  %3192 = vmatpush.msra.mxu0 %v2357
  %3193 = vmatpush.msra.mxu0 %v2351
  %3194 = vmatpush.msra.mxu0 %v2345
  %3195 = vmatpush.msra.mxu0 %v2339
  %3196 = vmatpush.msra.mxu0 %v2333
  %3197 = vmatpush.msra.mxu0 %v2327
  %3198 = vmatpush.msra.mxu0 %v2321
  %3199 = vmatpush.msra.mxu0 %v2315
  %3200 = vmatpush.msra.mxu0 %v2309
  %3201 = vmatpush.msra.mxu0 %v2303
  %3202 = vmatpush.msra.mxu0 %v2297
  %3203 = vmatmul.f32.gmra.mxu0 %v2864
  %v3204 = vpop.f32.mrf.mxu0
  %v3205 = vadd.f32 %v3185, %v3204
  %3206 = vdwg.mxu0
  %3207 = vmatpush.msra.mxu0 %v2483
  %3208 = vmatpush.msra.mxu0 %v2477
  %3209 = vmatpush.msra.mxu0 %v2471
  %3210 = vmatpush.msra.mxu0 %v2465
  %3211 = vmatpush.msra.mxu0 %v2459
  %3212 = vmatpush.msra.mxu0 %v2453
  %3213 = vmatpush.msra.mxu0 %v2447
  %3214 = vmatpush.msra.mxu0 %v2441
  %3215 = vmatpush.msra.mxu0 %v2435
  %3216 = vmatpush.msra.mxu0 %v2429
  %3217 = vmatpush.msra.mxu0 %v2423
  %3218 = vmatpush.msra.mxu0 %v2417
  %3219 = vmatpush.msra.mxu0 %v2411
  %3220 = vmatpush.msra.mxu0 %v2405
  %3221 = vmatpush.msra.mxu0 %v2399
  %3222 = vmatpush.msra.mxu0 %v2393
  %3223 = vmatmul.f32.gmra.mxu0 %v2878
  %v3224 = vpop.f32.mrf.mxu0
  %v3225 = vadd.f32 %v3205, %v3224
  %3226 = vdwg.mxu0
  %3227 = vmatpush.msra.mxu0 %v2579
  %3228 = vmatpush.msra.mxu0 %v2573
  %3229 = vmatpush.msra.mxu0 %v2567
  %3230 = vmatpush.msra.mxu0 %v2561
  %3231 = vmatpush.msra.mxu0 %v2555
  %3232 = vmatpush.msra.mxu0 %v2549
  %3233 = vmatpush.msra.mxu0 %v2543
  %3234 = vmatpush.msra.mxu0 %v2537
  %3235 = vmatpush.msra.mxu0 %v2531
  %3236 = vmatpush.msra.mxu0 %v2525
  %3237 = vmatpush.msra.mxu0 %v2519
  %3238 = vmatpush.msra.mxu0 %v2513
  %3239 = vmatpush.msra.mxu0 %v2507
  %3240 = vmatpush.msra.mxu0 %v2501
  %3241 = vmatpush.msra.mxu0 %v2495
  %3242 = vmatpush.msra.mxu0 %v2489
  %3243 = vmatmul.f32.gmra.mxu0 %v2892
  %v3244 = vpop.f32.mrf.mxu0
  %v3245 = vadd.f32 %v3225, %v3244
  %3246 = vdwg.mxu0
  %3247 = vmatpush.msra.mxu0 %v2675
  %3248 = vmatpush.msra.mxu0 %v2669
  %3249 = vmatpush.msra.mxu0 %v2663
  %3250 = vmatpush.msra.mxu0 %v2657
  %3251 = vmatpush.msra.mxu0 %v2651
  %3252 = vmatpush.msra.mxu0 %v2645
  %3253 = vmatpush.msra.mxu0 %v2639
  %3254 = vmatpush.msra.mxu0 %v2633
  %3255 = vmatpush.msra.mxu0 %v2627
  %3256 = vmatpush.msra.mxu0 %v2621
  %3257 = vmatpush.msra.mxu0 %v2615
  %3258 = vmatpush.msra.mxu0 %v2609
  %3259 = vmatpush.msra.mxu0 %v2603
  %3260 = vmatpush.msra.mxu0 %v2597
  %3261 = vmatpush.msra.mxu0 %v2591
  %3262 = vmatpush.msra.mxu0 %v2585
  %3263 = vmatmul.f32.gmra.mxu0 %v2906
  %v3264 = vpop.f32.mrf.mxu0
  %v3265 = vadd.f32 %v3245, %v3264
  %3266 = vdwg.mxu0
  %3267 = vmatpush.msra.mxu0 %v2771
  %3268 = vmatpush.msra.mxu0 %v2765
  %3269 = vmatpush.msra.mxu0 %v2759
  %3270 = vmatpush.msra.mxu0 %v2753
  %3271 = vmatpush.msra.mxu0 %v2747
  %3272 = vmatpush.msra.mxu0 %v2741
  %3273 = vmatpush.msra.mxu0 %v2735
  %3274 = vmatpush.msra.mxu0 %v2729
  %3275 = vmatpush.msra.mxu0 %v2723
  %3276 = vmatpush.msra.mxu0 %v2717
  %3277 = vmatpush.msra.mxu0 %v2711
  %3278 = vmatpush.msra.mxu0 %v2705
  %3279 = vmatpush.msra.mxu0 %v2699
  %3280 = vmatpush.msra.mxu0 %v2693
  %3281 = vmatpush.msra.mxu0 %v2687
  %3282 = vmatpush.msra.mxu0 %v2681
  %3283 = vmatmul.f32.gmra.mxu0 %v2920
  %v3284 = vpop.f32.mrf.mxu0
  %v3285 = vadd.f32 %v3265, %v3284
  %3286 = vdwg.mxu0
  %3287 = vmatpush.msra.mxu0 %v2292
  %3288 = vmatpush.msra.mxu0 %v2286
  %3289 = vmatpush.msra.mxu0 %v2280
  %3290 = vmatpush.msra.mxu0 %v2274
  %3291 = vmatpush.msra.mxu0 %v2268
  %3292 = vmatpush.msra.mxu0 %v2262
  %3293 = vmatpush.msra.mxu0 %v2256
  %3294 = vmatpush.msra.mxu0 %v2250
  %3295 = vmatpush.msra.mxu0 %v2244
  %3296 = vmatpush.msra.mxu0 %v2238
  %3297 = vmatpush.msra.mxu0 %v2232
  %3298 = vmatpush.msra.mxu0 %v2226
  %3299 = vmatpush.msra.mxu0 %v2220
  %3300 = vmatpush.msra.mxu0 %v2214
  %3301 = vmatpush.msra.mxu0 %v2208
  %3302 = vmatpush.msra.mxu0 %v2202
  %3303 = vmatmul.f32.gmra.mxu0 %v2850
  %v3304 = vpop.f32.mrf.mxu0
  %v3305 = vadd.f32 %v2780, %v3304
  %3306 = vdwg.mxu0
  %3307 = vmatpush.msra.mxu0 %v2388
  %3308 = vmatpush.msra.mxu0 %v2382
  %3309 = vmatpush.msra.mxu0 %v2376
  %3310 = vmatpush.msra.mxu0 %v2370
  %3311 = vmatpush.msra.mxu0 %v2364
  %3312 = vmatpush.msra.mxu0 %v2358
  %3313 = vmatpush.msra.mxu0 %v2352
  %3314 = vmatpush.msra.mxu0 %v2346
  %3315 = vmatpush.msra.mxu0 %v2340
  %3316 = vmatpush.msra.mxu0 %v2334
  %3317 = vmatpush.msra.mxu0 %v2328
  %3318 = vmatpush.msra.mxu0 %v2322
  %3319 = vmatpush.msra.mxu0 %v2316
  %3320 = vmatpush.msra.mxu0 %v2310
  %3321 = vmatpush.msra.mxu0 %v2304
  %3322 = vmatpush.msra.mxu0 %v2298
  %3323 = vmatmul.f32.gmra.mxu0 %v2864
  %v3324 = vpop.f32.mrf.mxu0
  %v3325 = vadd.f32 %v3305, %v3324
  %3326 = vdwg.mxu0
  %3327 = vmatpush.msra.mxu0 %v2484
  %3328 = vmatpush.msra.mxu0 %v2478
  %3329 = vmatpush.msra.mxu0 %v2472
  %3330 = vmatpush.msra.mxu0 %v2466
  %3331 = vmatpush.msra.mxu0 %v2460
  %3332 = vmatpush.msra.mxu0 %v2454
  %3333 = vmatpush.msra.mxu0 %v2448
  %3334 = vmatpush.msra.mxu0 %v2442
  %3335 = vmatpush.msra.mxu0 %v2436
  %3336 = vmatpush.msra.mxu0 %v2430
  %3337 = vmatpush.msra.mxu0 %v2424
  %3338 = vmatpush.msra.mxu0 %v2418
  %3339 = vmatpush.msra.mxu0 %v2412
  %3340 = vmatpush.msra.mxu0 %v2406
  %3341 = vmatpush.msra.mxu0 %v2400
  %3342 = vmatpush.msra.mxu0 %v2394
  %3343 = vmatmul.f32.gmra.mxu0 %v2878
  %v3344 = vpop.f32.mrf.mxu0
  %v3345 = vadd.f32 %v3325, %v3344
  %3346 = vdwg.mxu0
  %3347 = vmatpush.msra.mxu0 %v2580
  %3348 = vmatpush.msra.mxu0 %v2574
  %3349 = vmatpush.msra.mxu0 %v2568
  %3350 = vmatpush.msra.mxu0 %v2562
  %3351 = vmatpush.msra.mxu0 %v2556
  %3352 = vmatpush.msra.mxu0 %v2550
  %3353 = vmatpush.msra.mxu0 %v2544
  %3354 = vmatpush.msra.mxu0 %v2538
  %3355 = vmatpush.msra.mxu0 %v2532
  %3356 = vmatpush.msra.mxu0 %v2526
  %3357 = vmatpush.msra.mxu0 %v2520
  %3358 = vmatpush.msra.mxu0 %v2514
  %3359 = vmatpush.msra.mxu0 %v2508
  %3360 = vmatpush.msra.mxu0 %v2502
  %3361 = vmatpush.msra.mxu0 %v2496
  %3362 = vmatpush.msra.mxu0 %v2490
  %3363 = vmatmul.f32.gmra.mxu0 %v2892
  %v3364 = vpop.f32.mrf.mxu0
  %v3365 = vadd.f32 %v3345, %v3364
  %3366 = vdwg.mxu0
  %3367 = vmatpush.msra.mxu0 %v2676
  %3368 = vmatpush.msra.mxu0 %v2670
  %3369 = vmatpush.msra.mxu0 %v2664
  %3370 = vmatpush.msra.mxu0 %v2658
  %3371 = vmatpush.msra.mxu0 %v2652
  %3372 = vmatpush.msra.mxu0 %v2646
  %3373 = vmatpush.msra.mxu0 %v2640
  %3374 = vmatpush.msra.mxu0 %v2634
  %3375 = vmatpush.msra.mxu0 %v2628
  %3376 = vmatpush.msra.mxu0 %v2622
  %3377 = vmatpush.msra.mxu0 %v2616
  %3378 = vmatpush.msra.mxu0 %v2610
  %3379 = vmatpush.msra.mxu0 %v2604
  %3380 = vmatpush.msra.mxu0 %v2598
  %3381 = vmatpush.msra.mxu0 %v2592
  %3382 = vmatpush.msra.mxu0 %v2586
  %3383 = vmatmul.f32.gmra.mxu0 %v2906
  %v3384 = vpop.f32.mrf.mxu0
  %v3385 = vadd.f32 %v3365, %v3384
  %3386 = vdwg.mxu0
  %3387 = vmatpush.msra.mxu0 %v2772
  %3388 = vmatpush.msra.mxu0 %v2766
  %3389 = vmatpush.msra.mxu0 %v2760
  %3390 = vmatpush.msra.mxu0 %v2754
  %3391 = vmatpush.msra.mxu0 %v2748
  %3392 = vmatpush.msra.mxu0 %v2742
  %3393 = vmatpush.msra.mxu0 %v2736
  %3394 = vmatpush.msra.mxu0 %v2730
  %3395 = vmatpush.msra.mxu0 %v2724
  %3396 = vmatpush.msra.mxu0 %v2718
  %3397 = vmatpush.msra.mxu0 %v2712
  %3398 = vmatpush.msra.mxu0 %v2706
  %3399 = vmatpush.msra.mxu0 %v2700
  %3400 = vmatpush.msra.mxu0 %v2694
  %3401 = vmatpush.msra.mxu0 %v2688
  %3402 = vmatpush.msra.mxu0 %v2682
  %3403 = vmatmul.f32.gmra.mxu0 %v2920
  %v3404 = vpop.f32.mrf.mxu0
  %v3405 = vadd.f32 %v3385, %v3404
  %3406 = vdwg.mxu0
  %3407 = vmatpush.msra.mxu0 %v2293
  %3408 = vmatpush.msra.mxu0 %v2287
  %3409 = vmatpush.msra.mxu0 %v2281
  %3410 = vmatpush.msra.mxu0 %v2275
  %3411 = vmatpush.msra.mxu0 %v2269
  %3412 = vmatpush.msra.mxu0 %v2263
  %3413 = vmatpush.msra.mxu0 %v2257
  %3414 = vmatpush.msra.mxu0 %v2251
  %3415 = vmatpush.msra.mxu0 %v2245
  %3416 = vmatpush.msra.mxu0 %v2239
  %3417 = vmatpush.msra.mxu0 %v2233
  %3418 = vmatpush.msra.mxu0 %v2227
  %3419 = vmatpush.msra.mxu0 %v2221
  %3420 = vmatpush.msra.mxu0 %v2215
  %3421 = vmatpush.msra.mxu0 %v2209
  %3422 = vmatpush.msra.mxu0 %v2203
  %3423 = vmatmul.f32.gmra.mxu0 %v2850
  %v3424 = vpop.f32.mrf.mxu0
  %v3425 = vadd.f32 %v2781, %v3424
  %3426 = vdwg.mxu0
  %3427 = vmatpush.msra.mxu0 %v2389
  %3428 = vmatpush.msra.mxu0 %v2383
  %3429 = vmatpush.msra.mxu0 %v2377
  %3430 = vmatpush.msra.mxu0 %v2371
  %3431 = vmatpush.msra.mxu0 %v2365
  %3432 = vmatpush.msra.mxu0 %v2359
  %3433 = vmatpush.msra.mxu0 %v2353
  %3434 = vmatpush.msra.mxu0 %v2347
  %3435 = vmatpush.msra.mxu0 %v2341
  %3436 = vmatpush.msra.mxu0 %v2335
  %3437 = vmatpush.msra.mxu0 %v2329
  %3438 = vmatpush.msra.mxu0 %v2323
  %3439 = vmatpush.msra.mxu0 %v2317
  %3440 = vmatpush.msra.mxu0 %v2311
  %3441 = vmatpush.msra.mxu0 %v2305
  %3442 = vmatpush.msra.mxu0 %v2299
  %3443 = vmatmul.f32.gmra.mxu0 %v2864
  %v3444 = vpop.f32.mrf.mxu0
  %v3445 = vadd.f32 %v3425, %v3444
  %3446 = vdwg.mxu0
  %3447 = vmatpush.msra.mxu0 %v2485
  %3448 = vmatpush.msra.mxu0 %v2479
  %3449 = vmatpush.msra.mxu0 %v2473
  %3450 = vmatpush.msra.mxu0 %v2467
  %3451 = vmatpush.msra.mxu0 %v2461
  %3452 = vmatpush.msra.mxu0 %v2455
  %3453 = vmatpush.msra.mxu0 %v2449
  %3454 = vmatpush.msra.mxu0 %v2443
  %3455 = vmatpush.msra.mxu0 %v2437
  %3456 = vmatpush.msra.mxu0 %v2431
  %3457 = vmatpush.msra.mxu0 %v2425
  %3458 = vmatpush.msra.mxu0 %v2419
  %3459 = vmatpush.msra.mxu0 %v2413
  %3460 = vmatpush.msra.mxu0 %v2407
  %3461 = vmatpush.msra.mxu0 %v2401
  %3462 = vmatpush.msra.mxu0 %v2395
  %3463 = vmatmul.f32.gmra.mxu0 %v2878
  %v3464 = vpop.f32.mrf.mxu0
  %v3465 = vadd.f32 %v3445, %v3464
  %3466 = vdwg.mxu0
  %3467 = vmatpush.msra.mxu0 %v2581
  %3468 = vmatpush.msra.mxu0 %v2575
  %3469 = vmatpush.msra.mxu0 %v2569
  %3470 = vmatpush.msra.mxu0 %v2563
  %3471 = vmatpush.msra.mxu0 %v2557
  %3472 = vmatpush.msra.mxu0 %v2551
  %3473 = vmatpush.msra.mxu0 %v2545
  %3474 = vmatpush.msra.mxu0 %v2539
  %3475 = vmatpush.msra.mxu0 %v2533
  %3476 = vmatpush.msra.mxu0 %v2527
  %3477 = vmatpush.msra.mxu0 %v2521
  %3478 = vmatpush.msra.mxu0 %v2515
  %3479 = vmatpush.msra.mxu0 %v2509
  %3480 = vmatpush.msra.mxu0 %v2503
  %3481 = vmatpush.msra.mxu0 %v2497
  %3482 = vmatpush.msra.mxu0 %v2491
  %3483 = vmatmul.f32.gmra.mxu0 %v2892
  %v3484 = vpop.f32.mrf.mxu0
  %v3485 = vadd.f32 %v3465, %v3484
  %3486 = vdwg.mxu0
  %3487 = vmatpush.msra.mxu0 %v2677
  %3488 = vmatpush.msra.mxu0 %v2671
  %3489 = vmatpush.msra.mxu0 %v2665
  %3490 = vmatpush.msra.mxu0 %v2659
  %3491 = vmatpush.msra.mxu0 %v2653
  %3492 = vmatpush.msra.mxu0 %v2647
  %3493 = vmatpush.msra.mxu0 %v2641
  %3494 = vmatpush.msra.mxu0 %v2635
  %3495 = vmatpush.msra.mxu0 %v2629
  %3496 = vmatpush.msra.mxu0 %v2623
  %3497 = vmatpush.msra.mxu0 %v2617
  %3498 = vmatpush.msra.mxu0 %v2611
  %3499 = vmatpush.msra.mxu0 %v2605
  %3500 = vmatpush.msra.mxu0 %v2599
  %3501 = vmatpush.msra.mxu0 %v2593
  %3502 = vmatpush.msra.mxu0 %v2587
  %3503 = vmatmul.f32.gmra.mxu0 %v2906
  %v3504 = vpop.f32.mrf.mxu0
  %v3505 = vadd.f32 %v3485, %v3504
  %3506 = vdwg.mxu0
  %3507 = vmatpush.msra.mxu0 %v2773
  %3508 = vmatpush.msra.mxu0 %v2767
  %3509 = vmatpush.msra.mxu0 %v2761
  %3510 = vmatpush.msra.mxu0 %v2755
  %3511 = vmatpush.msra.mxu0 %v2749
  %3512 = vmatpush.msra.mxu0 %v2743
  %3513 = vmatpush.msra.mxu0 %v2737
  %3514 = vmatpush.msra.mxu0 %v2731
  %3515 = vmatpush.msra.mxu0 %v2725
  %3516 = vmatpush.msra.mxu0 %v2719
  %3517 = vmatpush.msra.mxu0 %v2713
  %3518 = vmatpush.msra.mxu0 %v2707
  %3519 = vmatpush.msra.mxu0 %v2701
  %3520 = vmatpush.msra.mxu0 %v2695
  %3521 = vmatpush.msra.mxu0 %v2689
  %3522 = vmatpush.msra.mxu0 %v2683
  %3523 = vmatmul.f32.gmra.mxu0 %v2920
  %v3524 = vpop.f32.mrf.mxu0
  %v3525 = vadd.f32 %v3505, %v3524
  %3526 = vdwg.mxu0
  %3527 = vmatpush.msra.mxu0 %v2294
  %3528 = vmatpush.msra.mxu0 %v2288
  %3529 = vmatpush.msra.mxu0 %v2282
  %3530 = vmatpush.msra.mxu0 %v2276
  %3531 = vmatpush.msra.mxu0 %v2270
  %3532 = vmatpush.msra.mxu0 %v2264
  %3533 = vmatpush.msra.mxu0 %v2258
  %3534 = vmatpush.msra.mxu0 %v2252
  %3535 = vmatpush.msra.mxu0 %v2246
  %3536 = vmatpush.msra.mxu0 %v2240
  %3537 = vmatpush.msra.mxu0 %v2234
  %3538 = vmatpush.msra.mxu0 %v2228
  %3539 = vmatpush.msra.mxu0 %v2222
  %3540 = vmatpush.msra.mxu0 %v2216
  %3541 = vmatpush.msra.mxu0 %v2210
  %3542 = vmatpush.msra.mxu0 %v2204
  %3543 = vmatmul.f32.gmra.mxu0 %v2850
  %v3544 = vpop.f32.mrf.mxu0
  %v3545 = vadd.f32 %v2782, %v3544
  %3546 = vdwg.mxu0
  %3547 = vmatpush.msra.mxu0 %v2390
  %3548 = vmatpush.msra.mxu0 %v2384
  %3549 = vmatpush.msra.mxu0 %v2378
  %3550 = vmatpush.msra.mxu0 %v2372
  %3551 = vmatpush.msra.mxu0 %v2366
  %3552 = vmatpush.msra.mxu0 %v2360
  %3553 = vmatpush.msra.mxu0 %v2354
  %3554 = vmatpush.msra.mxu0 %v2348
  %3555 = vmatpush.msra.mxu0 %v2342
  %3556 = vmatpush.msra.mxu0 %v2336
  %3557 = vmatpush.msra.mxu0 %v2330
  %3558 = vmatpush.msra.mxu0 %v2324
  %3559 = vmatpush.msra.mxu0 %v2318
  %3560 = vmatpush.msra.mxu0 %v2312
  %3561 = vmatpush.msra.mxu0 %v2306
  %3562 = vmatpush.msra.mxu0 %v2300
  %3563 = vmatmul.f32.gmra.mxu0 %v2864
  %v3564 = vpop.f32.mrf.mxu0
  %v3565 = vadd.f32 %v3545, %v3564
  %3566 = vdwg.mxu0
  %3567 = vmatpush.msra.mxu0 %v2486
  %3568 = vmatpush.msra.mxu0 %v2480
  %3569 = vmatpush.msra.mxu0 %v2474
  %3570 = vmatpush.msra.mxu0 %v2468
  %3571 = vmatpush.msra.mxu0 %v2462
  %3572 = vmatpush.msra.mxu0 %v2456
  %3573 = vmatpush.msra.mxu0 %v2450
  %3574 = vmatpush.msra.mxu0 %v2444
  %3575 = vmatpush.msra.mxu0 %v2438
  %3576 = vmatpush.msra.mxu0 %v2432
  %3577 = vmatpush.msra.mxu0 %v2426
  %3578 = vmatpush.msra.mxu0 %v2420
  %3579 = vmatpush.msra.mxu0 %v2414
  %3580 = vmatpush.msra.mxu0 %v2408
  %3581 = vmatpush.msra.mxu0 %v2402
  %3582 = vmatpush.msra.mxu0 %v2396
  %3583 = vmatmul.f32.gmra.mxu0 %v2878
  %v3584 = vpop.f32.mrf.mxu0
  %v3585 = vadd.f32 %v3565, %v3584
  %3586 = vdwg.mxu0
  %3587 = vmatpush.msra.mxu0 %v2582
  %3588 = vmatpush.msra.mxu0 %v2576
  %3589 = vmatpush.msra.mxu0 %v2570
  %3590 = vmatpush.msra.mxu0 %v2564
  %3591 = vmatpush.msra.mxu0 %v2558
  %3592 = vmatpush.msra.mxu0 %v2552
  %3593 = vmatpush.msra.mxu0 %v2546
  %3594 = vmatpush.msra.mxu0 %v2540
  %3595 = vmatpush.msra.mxu0 %v2534
  %3596 = vmatpush.msra.mxu0 %v2528
  %3597 = vmatpush.msra.mxu0 %v2522
  %3598 = vmatpush.msra.mxu0 %v2516
  %3599 = vmatpush.msra.mxu0 %v2510
  %3600 = vmatpush.msra.mxu0 %v2504
  %3601 = vmatpush.msra.mxu0 %v2498
  %3602 = vmatpush.msra.mxu0 %v2492
  %3603 = vmatmul.f32.gmra.mxu0 %v2892
  %v3604 = vpop.f32.mrf.mxu0
  %v3605 = vadd.f32 %v3585, %v3604
  %3606 = vdwg.mxu0
  %3607 = vmatpush.msra.mxu0 %v2678
  %3608 = vmatpush.msra.mxu0 %v2672
  %3609 = vmatpush.msra.mxu0 %v2666
  %3610 = vmatpush.msra.mxu0 %v2660
  %3611 = vmatpush.msra.mxu0 %v2654
  %3612 = vmatpush.msra.mxu0 %v2648
  %3613 = vmatpush.msra.mxu0 %v2642
  %3614 = vmatpush.msra.mxu0 %v2636
  %3615 = vmatpush.msra.mxu0 %v2630
  %3616 = vmatpush.msra.mxu0 %v2624
  %3617 = vmatpush.msra.mxu0 %v2618
  %3618 = vmatpush.msra.mxu0 %v2612
  %3619 = vmatpush.msra.mxu0 %v2606
  %3620 = vmatpush.msra.mxu0 %v2600
  %3621 = vmatpush.msra.mxu0 %v2594
  %3622 = vmatpush.msra.mxu0 %v2588
  %3623 = vmatmul.f32.gmra.mxu0 %v2906
  %v3624 = vpop.f32.mrf.mxu0
  %v3625 = vadd.f32 %v3605, %v3624
  %3626 = vdwg.mxu0
  %3627 = vmatpush.msra.mxu0 %v2774
  %3628 = vmatpush.msra.mxu0 %v2768
  %3629 = vmatpush.msra.mxu0 %v2762
  %3630 = vmatpush.msra.mxu0 %v2756
  %3631 = vmatpush.msra.mxu0 %v2750
  %3632 = vmatpush.msra.mxu0 %v2744
  %3633 = vmatpush.msra.mxu0 %v2738
  %3634 = vmatpush.msra.mxu0 %v2732
  %3635 = vmatpush.msra.mxu0 %v2726
  %3636 = vmatpush.msra.mxu0 %v2720
  %3637 = vmatpush.msra.mxu0 %v2714
  %3638 = vmatpush.msra.mxu0 %v2708
  %3639 = vmatpush.msra.mxu0 %v2702
  %3640 = vmatpush.msra.mxu0 %v2696
  %3641 = vmatpush.msra.mxu0 %v2690
  %3642 = vmatpush.msra.mxu0 %v2684
  %3643 = vmatmul.f32.gmra.mxu0 %v2920
  %v3644 = vpop.f32.mrf.mxu0
  %v3645 = vadd.f32 %v3625, %v3644
  %3646 = vdwg.mxu0
  %v3647 = vmax.f32 %v3045, 0.0
  %v3648 = vmax.f32 %v3165, 0.0
  %v3649 = vmax.f32 %v3285, 0.0
  %v3650 = vmax.f32 %v3405, 0.0
  %v3651 = vmax.f32 %v3525, 0.0
  %v3652 = vmax.f32 %v3645, 0.0
  %v3653 = vld [vmem:[%s9] sm:$0xf]
  %v3654 = vld [vmem:[%s9 + $0x4] sm:$0xf]
  %v3655 = vld [vmem:[%s9 + $0x8] sm:$0xf]
  %v3656 = vld [vmem:[%s9 + $0xc] sm:$0xf]
  %v3657 = vld [vmem:[%s9 + $0x10] sm:$0xf]
  %v3658 = vld [vmem:[%s9 + $0x14] sm:$0xf]
  %v3659 = vld [vmem:[%s9 + $0x18] sm:$0xf]
  %v3660 = vld [vmem:[%s9 + $0x1c] sm:$0xf]
  %v3661 = vld [vmem:[%s9 + $0x20] sm:$0xf]
  %v3662 = vld [vmem:[%s9 + $0x24] sm:$0xf]
  %v3663 = vld [vmem:[%s9 + $0x28] sm:$0xf]
  %v3664 = vld [vmem:[%s9 + $0x2c] sm:$0xf]
  %v3665 = vld [vmem:[%s9 + $0x30] sm:$0xf]
  %v3666 = vld [vmem:[%s9 + $0x34] sm:$0xf]
  %v3667 = vld [vmem:[%s9 + $0x38] sm:$0xf]
  %v3668 = vld [vmem:[%s9 + $0x3c] sm:$0xf]
  %v3669 = vld [vmem:[%s9 + $0x40] sm:$0xf]
  %v3670 = vld [vmem:[%s9 + $0x44] sm:$0xf]
  %v3671 = vld [vmem:[%s9 + $0x48] sm:$0xf]
  %v3672 = vld [vmem:[%s9 + $0x4c] sm:$0xf]
  %v3673 = vld [vmem:[%s9 + $0x50] sm:$0xf]
  %v3674 = vld [vmem:[%s9 + $0x54] sm:$0xf]
  %v3675 = vld [vmem:[%s9 + $0x58] sm:$0xf]
  %v3676 = vld [vmem:[%s9 + $0x5c] sm:$0xf]
  %v3677 = vld [vmem:[%s9 + $0x60] sm:$0xf]
  %v3678 = vld [vmem:[%s9 + $0x64] sm:$0xf]
  %v3679 = vld [vmem:[%s9 + $0x68] sm:$0xf]
  %v3680 = vld [vmem:[%s9 + $0x6c] sm:$0xf]
  %v3681 = vld [vmem:[%s9 + $0x70] sm:$0xf]
  %v3682 = vld [vmem:[%s9 + $0x74] sm:$0xf]
  %v3683 = vld [vmem:[%s9 + $0x78] sm:$0xf]
  %v3684 = vld [vmem:[%s9 + $0x7c] sm:$0xf]
  %v3685 = vld [vmem:[%s9 + $0x80] sm:$0xf]
  %v3686 = vld [vmem:[%s9 + $0x84] sm:$0xf]
  %v3687 = vld [vmem:[%s9 + $0x88] sm:$0xf]
  %v3688 = vld [vmem:[%s9 + $0x8c] sm:$0xf]
  %v3689 = vld [vmem:[%s9 + $0x90] sm:$0xf]
  %v3690 = vld [vmem:[%s9 + $0x94] sm:$0xf]
  %v3691 = vld [vmem:[%s9 + $0x98] sm:$0xf]
  %v3692 = vld [vmem:[%s9 + $0x9c] sm:$0xf]
  %v3693 = vld [vmem:[%s9 + $0xa0] sm:$0xf]
  %v3694 = vld [vmem:[%s9 + $0xa4] sm:$0xf]
  %v3695 = vld [vmem:[%s9 + $0xa8] sm:$0xf]
  %v3696 = vld [vmem:[%s9 + $0xac] sm:$0xf]
  %v3697 = vld [vmem:[%s9 + $0xb0] sm:$0xf]
  %v3698 = vld [vmem:[%s9 + $0xb4] sm:$0xf]
  %v3699 = vld [vmem:[%s9 + $0xb8] sm:$0xf]
  %v3700 = vld [vmem:[%s9 + $0xbc] sm:$0xf]
  %v3701 = vld [vmem:[%s9 + $0xc0] sm:$0xf]
  %v3702 = vld [vmem:[%s9 + $0xc4] sm:$0xf]
  %v3703 = vld [vmem:[%s9 + $0xc8] sm:$0xf]
  %v3704 = vld [vmem:[%s9 + $0xcc] sm:$0xf]
  %v3705 = vld [vmem:[%s9 + $0xd0] sm:$0xf]
  %v3706 = vld [vmem:[%s9 + $0xd4] sm:$0xf]
  %v3707 = vld [vmem:[%s9 + $0xd8] sm:$0xf]
  %v3708 = vld [vmem:[%s9 + $0xdc] sm:$0xf]
  %v3709 = vld [vmem:[%s9 + $0xe0] sm:$0xf]
  %v3710 = vld [vmem:[%s9 + $0xe4] sm:$0xf]
  %v3711 = vld [vmem:[%s9 + $0xe8] sm:$0xf]
  %v3712 = vld [vmem:[%s9 + $0xec] sm:$0xf]
  %v3713 = vld [vmem:[%s9 + $0xf0] sm:$0xf]
  %v3714 = vld [vmem:[%s9 + $0xf4] sm:$0xf]
  %v3715 = vld [vmem:[%s9 + $0xf8] sm:$0xf]
  %v3716 = vld [vmem:[%s9 + $0xfc] sm:$0xf]
  %v3717 = vld [vmem:[%s9 + $0x100] sm:$0xf]
  %v3718 = vld [vmem:[%s9 + $0x104] sm:$0xf]
  %v3719 = vld [vmem:[%s9 + $0x108] sm:$0xf]
  %v3720 = vld [vmem:[%s9 + $0x10c] sm:$0xf]
  %v3721 = vld [vmem:[%s9 + $0x110] sm:$0xf]
  %v3722 = vld [vmem:[%s9 + $0x114] sm:$0xf]
  %v3723 = vld [vmem:[%s9 + $0x118] sm:$0xf]
  %v3724 = vld [vmem:[%s9 + $0x11c] sm:$0xf]
  %v3725 = vld [vmem:[%s9 + $0x120] sm:$0xf]
  %v3726 = vld [vmem:[%s9 + $0x124] sm:$0xf]
  %v3727 = vld [vmem:[%s9 + $0x128] sm:$0xf]
  %v3728 = vld [vmem:[%s9 + $0x12c] sm:$0xf]
  %v3729 = vld [vmem:[%s9 + $0x130] sm:$0xf]
  %v3730 = vld [vmem:[%s9 + $0x134] sm:$0xf]
  %v3731 = vld [vmem:[%s9 + $0x138] sm:$0xf]
  %v3732 = vld [vmem:[%s9 + $0x13c] sm:$0xf]
  %v3733 = vld [vmem:[%s9 + $0x140] sm:$0xf]
  %v3734 = vld [vmem:[%s9 + $0x144] sm:$0xf]
  %v3735 = vld [vmem:[%s9 + $0x148] sm:$0xf]
  %v3736 = vld [vmem:[%s9 + $0x14c] sm:$0xf]
  %v3737 = vld [vmem:[%s9 + $0x150] sm:$0xf]
  %v3738 = vld [vmem:[%s9 + $0x154] sm:$0xf]
  %v3739 = vld [vmem:[%s9 + $0x158] sm:$0xf]
  %v3740 = vld [vmem:[%s9 + $0x15c] sm:$0xf]
  %v3741 = vld [vmem:[%s9 + $0x160] sm:$0xf]
  %v3742 = vld [vmem:[%s9 + $0x164] sm:$0xf]
  %v3743 = vld [vmem:[%s9 + $0x168] sm:$0xf]
  %v3744 = vld [vmem:[%s9 + $0x16c] sm:$0xf]
  %v3745 = vld [vmem:[%s9 + $0x170] sm:$0xf]
  %v3746 = vld [vmem:[%s9 + $0x174] sm:$0xf]
  %v3747 = vld [vmem:[%s9 + $0x178] sm:$0xf]
  %v3748 = vld [vmem:[%s9 + $0x17c] sm:$0xf]
  %v3749 = vunpack.c.l.bf16 %v3653
  %v3750 = vunpack.c.l.bf16 %v3654
  %v3751 = vunpack.c.l.bf16 %v3655
  %v3752 = vunpack.c.l.bf16 %v3656
  %v3753 = vunpack.c.l.bf16 %v3657
  %v3754 = vunpack.c.l.bf16 %v3658
  %v3755 = vunpack.c.l.bf16 %v3659
  %v3756 = vunpack.c.l.bf16 %v3660
  %v3757 = vunpack.c.l.bf16 %v3661
  %v3758 = vunpack.c.l.bf16 %v3662
  %v3759 = vunpack.c.l.bf16 %v3663
  %v3760 = vunpack.c.l.bf16 %v3664
  %v3761 = vunpack.c.l.bf16 %v3665
  %v3762 = vunpack.c.l.bf16 %v3666
  %v3763 = vunpack.c.l.bf16 %v3667
  %v3764 = vunpack.c.l.bf16 %v3668
  %v3765 = vunpack.c.l.bf16 %v3669
  %v3766 = vunpack.c.l.bf16 %v3670
  %v3767 = vunpack.c.l.bf16 %v3671
  %v3768 = vunpack.c.l.bf16 %v3672
  %v3769 = vunpack.c.l.bf16 %v3673
  %v3770 = vunpack.c.l.bf16 %v3674
  %v3771 = vunpack.c.l.bf16 %v3675
  %v3772 = vunpack.c.l.bf16 %v3676
  %v3773 = vunpack.c.l.bf16 %v3677
  %v3774 = vunpack.c.l.bf16 %v3678
  %v3775 = vunpack.c.l.bf16 %v3679
  %v3776 = vunpack.c.l.bf16 %v3680
  %v3777 = vunpack.c.l.bf16 %v3681
  %v3778 = vunpack.c.l.bf16 %v3682
  %v3779 = vunpack.c.l.bf16 %v3683
  %v3780 = vunpack.c.l.bf16 %v3684
  %v3781 = vunpack.c.l.bf16 %v3685
  %v3782 = vunpack.c.l.bf16 %v3686
  %v3783 = vunpack.c.l.bf16 %v3687
  %v3784 = vunpack.c.l.bf16 %v3688
  %v3785 = vunpack.c.l.bf16 %v3689
  %v3786 = vunpack.c.l.bf16 %v3690
  %v3787 = vunpack.c.l.bf16 %v3691
  %v3788 = vunpack.c.l.bf16 %v3692
  %v3789 = vunpack.c.l.bf16 %v3693
  %v3790 = vunpack.c.l.bf16 %v3694
  %v3791 = vunpack.c.l.bf16 %v3695
  %v3792 = vunpack.c.l.bf16 %v3696
  %v3793 = vunpack.c.l.bf16 %v3697
  %v3794 = vunpack.c.l.bf16 %v3698
  %v3795 = vunpack.c.l.bf16 %v3699
  %v3796 = vunpack.c.l.bf16 %v3700
  %v3797 = vunpack.c.l.bf16 %v3701
  %v3798 = vunpack.c.l.bf16 %v3702
  %v3799 = vunpack.c.l.bf16 %v3703
  %v3800 = vunpack.c.l.bf16 %v3704
  %v3801 = vunpack.c.l.bf16 %v3705
  %v3802 = vunpack.c.l.bf16 %v3706
  %v3803 = vunpack.c.l.bf16 %v3707
  %v3804 = vunpack.c.l.bf16 %v3708
  %v3805 = vunpack.c.l.bf16 %v3709
  %v3806 = vunpack.c.l.bf16 %v3710
  %v3807 = vunpack.c.l.bf16 %v3711
  %v3808 = vunpack.c.l.bf16 %v3712
  %v3809 = vunpack.c.l.bf16 %v3713
  %v3810 = vunpack.c.l.bf16 %v3714
  %v3811 = vunpack.c.l.bf16 %v3715
  %v3812 = vunpack.c.l.bf16 %v3716
  %v3813 = vunpack.c.l.bf16 %v3717
  %v3814 = vunpack.c.l.bf16 %v3718
  %v3815 = vunpack.c.l.bf16 %v3719
  %v3816 = vunpack.c.l.bf16 %v3720
  %v3817 = vunpack.c.l.bf16 %v3721
  %v3818 = vunpack.c.l.bf16 %v3722
  %v3819 = vunpack.c.l.bf16 %v3723
  %v3820 = vunpack.c.l.bf16 %v3724
  %v3821 = vunpack.c.l.bf16 %v3725
  %v3822 = vunpack.c.l.bf16 %v3726
  %v3823 = vunpack.c.l.bf16 %v3727
  %v3824 = vunpack.c.l.bf16 %v3728
  %v3825 = vunpack.c.l.bf16 %v3729
  %v3826 = vunpack.c.l.bf16 %v3730
  %v3827 = vunpack.c.l.bf16 %v3731
  %v3828 = vunpack.c.l.bf16 %v3732
  %v3829 = vunpack.c.l.bf16 %v3733
  %v3830 = vunpack.c.l.bf16 %v3734
  %v3831 = vunpack.c.l.bf16 %v3735
  %v3832 = vunpack.c.l.bf16 %v3736
  %v3833 = vunpack.c.l.bf16 %v3737
  %v3834 = vunpack.c.l.bf16 %v3738
  %v3835 = vunpack.c.l.bf16 %v3739
  %v3836 = vunpack.c.l.bf16 %v3740
  %v3837 = vunpack.c.l.bf16 %v3741
  %v3838 = vunpack.c.l.bf16 %v3742
  %v3839 = vunpack.c.l.bf16 %v3743
  %v3840 = vunpack.c.l.bf16 %v3744
  %v3841 = vunpack.c.l.bf16 %v3745
  %v3842 = vunpack.c.l.bf16 %v3746
  %v3843 = vunpack.c.l.bf16 %v3747
  %v3844 = vunpack.c.l.bf16 %v3748
  %v3845 = vld [vmem:[%s10] sm:$0x1]
  %v3847 = vperm.slane %v3845, 0
  %3849 = vmatpush.msra.mxu0 %v3764
  %3850 = vmatpush.msra.mxu0 %v3763
  %3851 = vmatpush.msra.mxu0 %v3762
  %3852 = vmatpush.msra.mxu0 %v3761
  %3853 = vmatpush.msra.mxu0 %v3760
  %3854 = vmatpush.msra.mxu0 %v3759
  %3855 = vmatpush.msra.mxu0 %v3758
  %3856 = vmatpush.msra.mxu0 %v3757
  %3857 = vmatpush.msra.mxu0 %v3756
  %3858 = vmatpush.msra.mxu0 %v3755
  %3859 = vmatpush.msra.mxu0 %v3754
  %3860 = vmatpush.msra.mxu0 %v3753
  %3861 = vmatpush.msra.mxu0 %v3752
  %3862 = vmatpush.msra.mxu0 %v3751
  %3863 = vmatpush.msra.mxu0 %v3750
  %3864 = vmatpush.msra.mxu0 %v3749
  %3865 = vmatmul.f32.gmra.mxu0 %v3647
  %v3866 = vpop.f32.mrf.mxu0
  %v3867 = vadd.f32 %v3847, %v3866
  %3868 = vdwg.mxu0
  %3869 = vmatpush.msra.mxu0 %v3780
  %3870 = vmatpush.msra.mxu0 %v3779
  %3871 = vmatpush.msra.mxu0 %v3778
  %3872 = vmatpush.msra.mxu0 %v3777
  %3873 = vmatpush.msra.mxu0 %v3776
  %3874 = vmatpush.msra.mxu0 %v3775
  %3875 = vmatpush.msra.mxu0 %v3774
  %3876 = vmatpush.msra.mxu0 %v3773
  %3877 = vmatpush.msra.mxu0 %v3772
  %3878 = vmatpush.msra.mxu0 %v3771
  %3879 = vmatpush.msra.mxu0 %v3770
  %3880 = vmatpush.msra.mxu0 %v3769
  %3881 = vmatpush.msra.mxu0 %v3768
  %3882 = vmatpush.msra.mxu0 %v3767
  %3883 = vmatpush.msra.mxu0 %v3766
  %3884 = vmatpush.msra.mxu0 %v3765
  %3885 = vmatmul.f32.gmra.mxu0 %v3648
  %v3886 = vpop.f32.mrf.mxu0
  %v3887 = vadd.f32 %v3867, %v3886
  %3888 = vdwg.mxu0
  %3889 = vmatpush.msra.mxu0 %v3796
  %3890 = vmatpush.msra.mxu0 %v3795
  %3891 = vmatpush.msra.mxu0 %v3794
  %3892 = vmatpush.msra.mxu0 %v3793
  %3893 = vmatpush.msra.mxu0 %v3792
  %3894 = vmatpush.msra.mxu0 %v3791
  %3895 = vmatpush.msra.mxu0 %v3790
  %3896 = vmatpush.msra.mxu0 %v3789
  %3897 = vmatpush.msra.mxu0 %v3788
  %3898 = vmatpush.msra.mxu0 %v3787
  %3899 = vmatpush.msra.mxu0 %v3786
  %3900 = vmatpush.msra.mxu0 %v3785
  %3901 = vmatpush.msra.mxu0 %v3784
  %3902 = vmatpush.msra.mxu0 %v3783
  %3903 = vmatpush.msra.mxu0 %v3782
  %3904 = vmatpush.msra.mxu0 %v3781
  %3905 = vmatmul.f32.gmra.mxu0 %v3649
  %v3906 = vpop.f32.mrf.mxu0
  %v3907 = vadd.f32 %v3887, %v3906
  %3908 = vdwg.mxu0
  %3909 = vmatpush.msra.mxu0 %v3812
  %3910 = vmatpush.msra.mxu0 %v3811
  %3911 = vmatpush.msra.mxu0 %v3810
  %3912 = vmatpush.msra.mxu0 %v3809
  %3913 = vmatpush.msra.mxu0 %v3808
  %3914 = vmatpush.msra.mxu0 %v3807
  %3915 = vmatpush.msra.mxu0 %v3806
  %3916 = vmatpush.msra.mxu0 %v3805
  %3917 = vmatpush.msra.mxu0 %v3804
  %3918 = vmatpush.msra.mxu0 %v3803
  %3919 = vmatpush.msra.mxu0 %v3802
  %3920 = vmatpush.msra.mxu0 %v3801
  %3921 = vmatpush.msra.mxu0 %v3800
  %3922 = vmatpush.msra.mxu0 %v3799
  %3923 = vmatpush.msra.mxu0 %v3798
  %3924 = vmatpush.msra.mxu0 %v3797
  %3925 = vmatmul.f32.gmra.mxu0 %v3650
  %v3926 = vpop.f32.mrf.mxu0
  %v3927 = vadd.f32 %v3907, %v3926
  %3928 = vdwg.mxu0
  %3929 = vmatpush.msra.mxu0 %v3828
  %3930 = vmatpush.msra.mxu0 %v3827
  %3931 = vmatpush.msra.mxu0 %v3826
  %3932 = vmatpush.msra.mxu0 %v3825
  %3933 = vmatpush.msra.mxu0 %v3824
  %3934 = vmatpush.msra.mxu0 %v3823
  %3935 = vmatpush.msra.mxu0 %v3822
  %3936 = vmatpush.msra.mxu0 %v3821
  %3937 = vmatpush.msra.mxu0 %v3820
  %3938 = vmatpush.msra.mxu0 %v3819
  %3939 = vmatpush.msra.mxu0 %v3818
  %3940 = vmatpush.msra.mxu0 %v3817
  %3941 = vmatpush.msra.mxu0 %v3816
  %3942 = vmatpush.msra.mxu0 %v3815
  %3943 = vmatpush.msra.mxu0 %v3814
  %3944 = vmatpush.msra.mxu0 %v3813
  %3945 = vmatmul.f32.gmra.mxu0 %v3651
  %v3946 = vpop.f32.mrf.mxu0
  %v3947 = vadd.f32 %v3927, %v3946
  %3948 = vdwg.mxu0
  %3949 = vmatpush.msra.mxu0 %v3844
  %3950 = vmatpush.msra.mxu0 %v3843
  %3951 = vmatpush.msra.mxu0 %v3842
  %3952 = vmatpush.msra.mxu0 %v3841
  %3953 = vmatpush.msra.mxu0 %v3840
  %3954 = vmatpush.msra.mxu0 %v3839
  %3955 = vmatpush.msra.mxu0 %v3838
  %3956 = vmatpush.msra.mxu0 %v3837
  %3957 = vmatpush.msra.mxu0 %v3836
  %3958 = vmatpush.msra.mxu0 %v3835
  %3959 = vmatpush.msra.mxu0 %v3834
  %3960 = vmatpush.msra.mxu0 %v3833
  %3961 = vmatpush.msra.mxu0 %v3832
  %3962 = vmatpush.msra.mxu0 %v3831
  %3963 = vmatpush.msra.mxu0 %v3830
  %3964 = vmatpush.msra.mxu0 %v3829
  %3965 = vmatmul.f32.gmra.mxu0 %v3652
  %v3966 = vpop.f32.mrf.mxu0
  %v3967 = vadd.f32 %v3947, %v3966
  %3968 = vdwg.mxu0
  %3969 = vst [vmem:[%s12] sm:$0xff] %v3967
  // Predicated region
  $region46: #{model_clr_forward.1} parent=0 // pred_check
    _
  $region47: #{model_clr_forward.1} parent=0 // pred_check_branch
    %3971 = sbr.rel (0) target = $region49
  $region48: #{model_clr_forward.1} parent=0 // pred_region
    _
  $region49: #{model_clr_forward.1} parent=0 // pred_fallthru
    _
  // Predicated region
  $region50: #{model_clr_forward.1} parent=0 // pred_check
    _
  $region51: #{model_clr_forward.1} parent=0 // pred_check_branch
    %3973 = sbr.rel (0) target = $region53
  $region52: #{model_clr_forward.1} parent=0 // pred_region
    _
  $region53: #{model_clr_forward.1} parent=0 // pred_fallthru
    _
  // Predicated region
  $region54: #{model_clr_forward.1} parent=0 // pred_check
    _
  $region55: #{model_clr_forward.1} parent=0 // pred_check_branch
    %3975 = sbr.rel (0) target = $region57
  $region56: #{model_clr_forward.1} parent=0 // pred_region
    _
  $region57: #{model_clr_forward.1} parent=0 // pred_fallthru
    _
  // Predicated region
  $region58: #{model_clr_forward.1} parent=0 // pred_check
    _
  $region59: #{model_clr_forward.1} parent=0 // pred_check_branch
    %3977 = sbr.rel (0) target = $region61
  $region60: #{model_clr_forward.1} parent=0 // pred_region
    _
  $region61: #{model_clr_forward.1} parent=0 // pred_fallthru
    _

</llo_original>
